<compile_context>
chip_gen: v7x
topology: tpu7x:2x2x1
jax: 0.10.0
libtpu: 0.0.40
codegen_flags: <defaults>
</compile_context>

<pallas_src>
import math

import jax
import jax.numpy as jnp
from jax.experimental import pallas as pl
from jax.experimental.pallas import tpu as pltpu


# ----------------------------- in-kernel helpers -----------------------------

_SQRT_2_OVER_PI = 0.7978845608028654


def _gelu_tanh(x):
    # tanh-approximate GELU (tanh runs on the EUP slot). PyTorch nn.GELU() default is
    # the exact erf form; the difference (<~3e-4 abs) is below the bf16 matmul noise.
    return 0.5 * x * (1.0 + jnp.tanh(_SQRT_2_OVER_PI * (x + 0.044715 * x * x * x)))


def _layernorm(x, g, b, eps=1e-5):
    mu = jnp.mean(x, axis=-1, keepdims=True)
    var = jnp.mean((x - mu) ** 2, axis=-1, keepdims=True)
    return (x - mu) * jax.lax.rsqrt(var + eps) * g + b


def _mha(q16, k16, v16, wo, bo, mask_add, H, hd):
    """Batched-head multi-head attention for one batch element.

    q16: (Lq, D) bf16 (1/sqrt(hd) already folded into Wq), k16/v16: (Lk, D) bf16,
    wo: (D, D) bf16 full output projection, bo: (1, D) f32,
    mask_add: optional (1, 1, Lk) f32 additive key-padding mask.  Returns (Lq, D) f32.
    """
    f32, bf16 = jnp.float32, jnp.bfloat16
    Lq, D = q16.shape
    Lk = k16.shape[0]
    # One up-front reshape + transpose to head-major layout (hoists all layout work).
    qh = jnp.transpose(q16.reshape(Lq, H, hd), (1, 0, 2))   # (H, Lq, hd)
    kh = jnp.transpose(k16.reshape(Lk, H, hd), (1, 0, 2))   # (H, Lk, hd)
    vh = jnp.transpose(v16.reshape(Lk, H, hd), (1, 0, 2))   # (H, Lk, hd)

    logits = jnp.einsum('hqd,hkd->hqk', qh, kh,
                        preferred_element_type=f32)          # (H, Lq, Lk)
    if mask_add is not None:
        logits = logits + mask_add                            # broadcast (1,1,Lk)

    m = jnp.max(logits, axis=-1, keepdims=True)
    p = jnp.exp(logits - m)
    p = p * pl.reciprocal(jnp.sum(p, axis=-1, keepdims=True), approx=True)

    pv = jnp.einsum('hqk,hkd->hqd', p.astype(bf16), vh,
                    preferred_element_type=f32)               # (H, Lq, hd)
    o = jnp.transpose(pv, (1, 0, 2)).reshape(Lq, D)           # (Lq, D) lane-dense
    # Single full-D output projection (K = D) instead of H small K=hd GEMMs.
    return jnp.dot(o.astype(bf16), wo, preferred_element_type=f32) + bo


# --------------------------------- kernel ------------------------------------

def _make_kernel(Lq, Ls, D, num_heads, has_mask):
    hd = D // num_heads
    H = num_heads

    def kernel(*refs):
        q_ref, src_ref = refs[0], refs[1]
        if has_mask:
            mask_ref = refs[2]
            w = refs[3:-1]
        else:
            mask_ref = None
            w = refs[2:-1]
        (sa_wqkv, sa_bqkv, sa_wo, sa_bo, n1_g, n1_b,
         ca_wq, ca_bq, ca_wkv, ca_bkv, ca_wo, ca_bo, n2_g, n2_b,
         ff_w1, ff_b1, ff_w2, ff_b2, n3_g, n3_b) = w
        out_ref = refs[-1]

        f32, bf16 = jnp.float32, jnp.bfloat16

        x = q_ref[...].reshape(Lq, D).astype(f32)             # decoder stream (Lq, D)
        s16 = src_ref[...].reshape(Ls, D).astype(bf16)        # encoder memory (Ls, D)

        # ------------- self-attention + add & norm1 (dropout1 = identity) --------
        qkv = jnp.dot(x.astype(bf16), sa_wqkv[...],
                      preferred_element_type=f32) + sa_bqkv[...]      # (Lq, 3D) f32
        qkv16 = qkv.astype(bf16)                                       # cast slab once
        sa = _mha(qkv16[:, :D], qkv16[:, D:2 * D], qkv16[:, 2 * D:],
                  sa_wo[...], sa_bo[...], None, H, hd)
        x = _layernorm(x + sa, n1_g[...], n1_b[...])

        # ------------- cross-attention + add & norm2 (dropout2 = identity) -------
        qx = jnp.dot(x.astype(bf16), ca_wq[...],
                     preferred_element_type=f32) + ca_bq[...]          # (Lq, D) f32
        kv = jnp.dot(s16, ca_wkv[...],
                     preferred_element_type=f32) + ca_bkv[...]         # (Ls, 2D) f32
        kv16 = kv.astype(bf16)                                         # cast slab once
        if mask_ref is not None:
            # key_padding_mask semantics: nonzero -> ignore that key; finite -1e9
            # avoids the -inf -> NaN hazard for fully-masked rows.
            mask_add = jnp.where(mask_ref[...] != 0, -1e9, 0.0).astype(f32)  # (1,1,Ls)
        else:
            mask_add = None
        ca = _mha(qx.astype(bf16), kv16[:, :D], kv16[:, D:],
                  ca_wo[...], ca_bo[...], mask_add, H, hd)
        x = _layernorm(x + ca, n2_g[...], n2_b[...])

        # ------------- FFN + add & norm3 (dropout3/4 = identity) -----------------
        h = jnp.dot(x.astype(bf16), ff_w1[...],
                    preferred_element_type=f32) + ff_b1[...]
        h = _gelu_tanh(h)
        ff = jnp.dot(h.astype(bf16), ff_w2[...],
                     preferred_element_type=f32) + ff_b2[...]
        x = _layernorm(x + ff, n3_g[...], n3_b[...])

        out_ref[...] = x.reshape(1, Lq, D).astype(out_ref.dtype)

    return kernel


# --------------------------------- wrapper -----------------------------------

_PACKED_ORDER = [
    "sa_wqkv", "sa_bqkv", "sa_wo", "sa_bo", "n1_g", "n1_b",
    "ca_wq", "ca_bq", "ca_wkv", "ca_bkv", "ca_wo", "ca_bo", "n2_g", "n2_b",
    "ff_w1", "ff_b1", "ff_w2", "ff_b2", "n3_g", "n3_b",
]


def _vmem_limit_bytes():
    """Generation-dependent VMEM budget: ~75% of physical, capped at 96 MiB.

    v5e/v6e (128 MiB) -> 96 MiB; v7x (64 MiB/TC) -> 48 MiB."""
    cap = 128 * 1024 * 1024
    try:
        info = pltpu.get_tpu_info()
        cap = int(getattr(info, "vmem_capacity_bytes", cap))
    except Exception:
        pass
    return int(min(cap * 3 // 4, 96 * 1024 * 1024))


def _nbytes(a):
    return int(a.size) * a.dtype.itemsize


def transformer_decoder_layer(query, src, packed_params, *, num_heads,
                              reference_points=None, spatial_shapes=None,
                              level_start_index=None, padding_mask=None):
    # reference_points / spatial_shapes / level_start_index are unused by the forward.
    B, Lq, D = query.shape
    _, Ls, _ = src.shape
    assert D % num_heads == 0
    has_mask = padding_mask is not None
    ffn_dim = packed_params["ff_w1"].shape[1]

    inputs = [query, src]
    in_specs = [
        pl.BlockSpec((1, Lq, D), lambda b: (b, 0, 0)),
        pl.BlockSpec((1, Ls, D), lambda b: (b, 0, 0)),
    ]
    if has_mask:
        # int32 0/1 per key; additive mask is built in-kernel (no f32 mask DMA).
        inputs.append(jnp.asarray(padding_mask, jnp.int32).reshape(B, 1, Ls))
        in_specs.append(pl.BlockSpec((1, 1, Ls), lambda b: (b, 0, 0)))

    weights = [packed_params[k] for k in _PACKED_ORDER]
    inputs += weights
    # Weights: full-extent blocks with a constant index_map -> DMA'd once, stay
    # resident across the batch grid.
    in_specs += [pl.BlockSpec(w.shape, lambda b, _nd=w.ndim: (0,) * _nd)
                 for w in weights]

    kernel = _make_kernel(Lq, Ls, D, num_heads, has_mask)

    # Advisory cost estimate so XLA can schedule the custom call vs. neighbors.
    flops_per_batch = (
        6 * Lq * D * D            # self QKV projection
        + 4 * Lq * Lq * D         # self logits + PV
        + 2 * Lq * D * D          # self output projection
        + 2 * Lq * D * D          # cross Q projection
        + 4 * Ls * D * D          # cross K/V projection
        + 4 * Lq * Ls * D         # cross logits + PV
        + 2 * Lq * D * D          # cross output projection
        + 4 * Lq * D * ffn_dim    # FFN
    )
    transcendentals = B * (num_heads * Lq * (Lq + Ls) + Lq * ffn_dim)
    bytes_accessed = sum(_nbytes(a) for a in inputs) + B * Lq * D * 4

    return pl.pallas_call(
        kernel,
        out_shape=jax.ShapeDtypeStruct((B, Lq, D), query.dtype),
        grid=(B,),
        in_specs=in_specs,
        out_specs=pl.BlockSpec((1, Lq, D), lambda b: (b, 0, 0)),
        compiler_params=pltpu.CompilerParams(
            dimension_semantics=("parallel",),        # shards over 2 TCs on v7x
            vmem_limit_bytes=_vmem_limit_bytes()),
        cost_estimate=pl.CostEstimate(flops=int(B * flops_per_batch),
                                      transcendentals=int(transcendentals),
                                      bytes_accessed=int(bytes_accessed)),
    )(*inputs)


# ----------------------------- parameter packing ------------------------------

def pack_params(p, dim, num_heads):
    """Fuse / fold the per-module weights into the kernel's packed bf16 layout."""
    hd = dim // num_heads
    scale = 1.0 / math.sqrt(hd)
    bf16, f32 = jnp.bfloat16, jnp.float32

    def row(x):
        return jnp.asarray(x, f32).reshape(1, -1)

    out = {}
    # self-attention: fused [D, 3D] QKV weight; 1/sqrt(hd) folded into the Q part.
    out["sa_wqkv"] = jnp.concatenate(
        [p["sa_wq"] * scale, p["sa_wk"], p["sa_wv"]], axis=1).astype(bf16)
    out["sa_bqkv"] = jnp.concatenate(
        [row(p["sa_bq"]) * scale, row(p["sa_bk"]), row(p["sa_bv"])], axis=1)
    out["sa_wo"] = p["sa_wo"].astype(bf16)                     # full (D, D)
    out["sa_bo"] = row(p["sa_bo"])
    out["n1_g"], out["n1_b"] = row(p["n1_g"]), row(p["n1_b"])
    # cross-attention: Q separate (decoder stream), fused [D, 2D] K/V (encoder memory).
    out["ca_wq"] = (p["ca_wq"] * scale).astype(bf16)
    out["ca_bq"] = row(p["ca_bq"]) * scale
    out["ca_wkv"] = jnp.concatenate([p["ca_wk"], p["ca_wv"]], axis=1).astype(bf16)
    out["ca_bkv"] = jnp.concatenate([row(p["ca_bk"]), row(p["ca_bv"])], axis=1)
    out["ca_wo"] = p["ca_wo"].astype(bf16)                     # full (D, D)
    out["ca_bo"] = row(p["ca_bo"])
    out["n2_g"], out["n2_b"] = row(p["n2_g"]), row(p["n2_b"])
    # FFN
    out["ff_w1"], out["ff_b1"] = p["ff_w1"].astype(bf16), row(p["ff_b1"])
    out["ff_w2"], out["ff_b2"] = p["ff_w2"].astype(bf16), row(p["ff_b2"])
    out["n3_g"], out["n3_b"] = row(p["n3_g"]), row(p["n3_b"])
    return out


def init_params(key, dim, ffn_dim):
    """Unpacked params (projection weights stored [in, out], i.e. pre-transposed)."""
    keys = jax.random.split(key, 12)
    s = 0.02

    def w(k, shape):
        return (s * jax.random.normal(k, shape)).astype(jnp.float32)

    def row(val, n):
        return jnp.full((1, n), val, jnp.float32)

    p = {}
    p["sa_wq"], p["sa_wk"], p["sa_wv"] = (w(keys[0], (dim, dim)), w(keys[1], (dim, dim)),
                                          w(keys[2], (dim, dim)))
    p["sa_bq"] = p["sa_bk"] = p["sa_bv"] = row(0.0, dim)
    p["sa_wo"], p["sa_bo"] = w(keys[3], (dim, dim)), row(0.0, dim)
    p["n1_g"], p["n1_b"] = row(1.0, dim), row(0.0, dim)
    p["ca_wq"], p["ca_wk"], p["ca_wv"] = (w(keys[4], (dim, dim)), w(keys[5], (dim, dim)),
                                          w(keys[6], (dim, dim)))
    p["ca_bq"] = p["ca_bk"] = p["ca_bv"] = row(0.0, dim)
    p["ca_wo"], p["ca_bo"] = w(keys[7], (dim, dim)), row(0.0, dim)
    p["n2_g"], p["n2_b"] = row(1.0, dim), row(0.0, dim)
    p["ff_w1"], p["ff_b1"] = w(keys[8], (dim, ffn_dim)), row(0.0, ffn_dim)
    p["ff_w2"], p["ff_b2"] = w(keys[9], (ffn_dim, dim)), row(0.0, dim)
    p["n3_g"], p["n3_b"] = row(1.0, dim), row(0.0, dim)
    return p


# ------------------------------------ main ------------------------------------

if __name__ == "__main__":
    B, Lq, Ls = 2, 8, 16
    DIM, HEADS, FFN = 128, 8, 256

    key = jax.random.PRNGKey(0)
    k_q, k_s, k_p = jax.random.split(key, 3)
    query = jax.random.normal(k_q, (B, Lq, DIM), jnp.float32)
    src = jax.random.normal(k_s, (B, Ls, DIM), jnp.float32)
    packed = pack_params(init_params(k_p, DIM, FFN), DIM, HEADS)

    # No padding mask.
    out = transformer_decoder_layer(query, src, packed, num_heads=HEADS,
                                    padding_mask=None)
    out = jax.block_until_ready(out)
    assert out.shape == (B, Lq, DIM) and bool(jnp.all(jnp.isfinite(out)))

    # With a key-padding mask on the second batch element (True = ignore key).
    mask = jnp.zeros((B, Ls), jnp.bool_).at[1, Ls // 2:].set(True)
    out_m = transformer_decoder_layer(query, src, packed, num_heads=HEADS,
                                      padding_mask=mask)
    out_m = jax.block_until_ready(out_m)
    assert out_m.shape == (B, Lq, DIM) and bool(jnp.all(jnp.isfinite(out_m)))

    print("KERNEL_OK")
</pallas_src>

<mosaic_0001>
module attributes {stable_mosaic.version = 11 : i64} {
  func.func @kernel(%arg0: i32, %arg1: memref<1x8x128xf32, #tpu.memory_space<vmem>>, %arg2: memref<1x16x128xf32, #tpu.memory_space<vmem>>, %arg3: memref<128x384xbf16, #tpu.memory_space<vmem>>, %arg4: memref<1x384xf32, #tpu.memory_space<vmem>>, %arg5: memref<128x128xbf16, #tpu.memory_space<vmem>>, %arg6: memref<1x128xf32, #tpu.memory_space<vmem>>, %arg7: memref<1x128xf32, #tpu.memory_space<vmem>>, %arg8: memref<1x128xf32, #tpu.memory_space<vmem>>, %arg9: memref<128x128xbf16, #tpu.memory_space<vmem>>, %arg10: memref<1x128xf32, #tpu.memory_space<vmem>>, %arg11: memref<128x256xbf16, #tpu.memory_space<vmem>>, %arg12: memref<1x256xf32, #tpu.memory_space<vmem>>, %arg13: memref<128x128xbf16, #tpu.memory_space<vmem>>, %arg14: memref<1x128xf32, #tpu.memory_space<vmem>>, %arg15: memref<1x128xf32, #tpu.memory_space<vmem>>, %arg16: memref<1x128xf32, #tpu.memory_space<vmem>>, %arg17: memref<128x256xbf16, #tpu.memory_space<vmem>>, %arg18: memref<1x256xf32, #tpu.memory_space<vmem>>, %arg19: memref<256x128xbf16, #tpu.memory_space<vmem>>, %arg20: memref<1x128xf32, #tpu.memory_space<vmem>>, %arg21: memref<1x128xf32, #tpu.memory_space<vmem>>, %arg22: memref<1x128xf32, #tpu.memory_space<vmem>>, %arg23: memref<1x8x128xf32, #tpu.memory_space<vmem>>) attributes {dimension_semantics = [#tpu.dimension_semantics<parallel>], iteration_bounds = array<i64: 2>, scalar_prefetch = 0 : i64, scratch_operands = 0 : i64, tpu.core_type = #tpu.core_type<tc>, window_params = [{transform_indices = @transform_0, window_bounds = array<i64: 1, 8, 128>}, {transform_indices = @transform_1, window_bounds = array<i64: 1, 16, 128>}, {pipeline_mode = #tpu.pipeline_mode<synchronous>, transform_indices = @transform_2, window_bounds = array<i64: 128, 384>}, {pipeline_mode = #tpu.pipeline_mode<synchronous>, transform_indices = @transform_3, window_bounds = array<i64: 1, 384>}, {pipeline_mode = #tpu.pipeline_mode<synchronous>, transform_indices = @transform_4, window_bounds = array<i64: 128, 128>}, {pipeline_mode = #tpu.pipeline_mode<synchronous>, transform_indices = @transform_5, window_bounds = array<i64: 1, 128>}, {pipeline_mode = #tpu.pipeline_mode<synchronous>, transform_indices = @transform_6, window_bounds = array<i64: 1, 128>}, {pipeline_mode = #tpu.pipeline_mode<synchronous>, transform_indices = @transform_7, window_bounds = array<i64: 1, 128>}, {pipeline_mode = #tpu.pipeline_mode<synchronous>, transform_indices = @transform_8, window_bounds = array<i64: 128, 128>}, {pipeline_mode = #tpu.pipeline_mode<synchronous>, transform_indices = @transform_9, window_bounds = array<i64: 1, 128>}, {pipeline_mode = #tpu.pipeline_mode<synchronous>, transform_indices = @transform_10, window_bounds = array<i64: 128, 256>}, {pipeline_mode = #tpu.pipeline_mode<synchronous>, transform_indices = @transform_11, window_bounds = array<i64: 1, 256>}, {pipeline_mode = #tpu.pipeline_mode<synchronous>, transform_indices = @transform_12, window_bounds = array<i64: 128, 128>}, {pipeline_mode = #tpu.pipeline_mode<synchronous>, transform_indices = @transform_13, window_bounds = array<i64: 1, 128>}, {pipeline_mode = #tpu.pipeline_mode<synchronous>, transform_indices = @transform_14, window_bounds = array<i64: 1, 128>}, {pipeline_mode = #tpu.pipeline_mode<synchronous>, transform_indices = @transform_15, window_bounds = array<i64: 1, 128>}, {pipeline_mode = #tpu.pipeline_mode<synchronous>, transform_indices = @transform_16, window_bounds = array<i64: 128, 256>}, {pipeline_mode = #tpu.pipeline_mode<synchronous>, transform_indices = @transform_17, window_bounds = array<i64: 1, 256>}, {pipeline_mode = #tpu.pipeline_mode<synchronous>, transform_indices = @transform_18, window_bounds = array<i64: 256, 128>}, {pipeline_mode = #tpu.pipeline_mode<synchronous>, transform_indices = @transform_19, window_bounds = array<i64: 1, 128>}, {pipeline_mode = #tpu.pipeline_mode<synchronous>, transform_indices = @transform_20, window_bounds = array<i64: 1, 128>}, {pipeline_mode = #tpu.pipeline_mode<synchronous>, transform_indices = @transform_21, window_bounds = array<i64: 1, 128>}, {transform_indices = @transform_22, window_bounds = array<i64: 1, 8, 128>}]} {
    %c0 = arith.constant 0 : index
    %c0_0 = arith.constant 0 : index
    %c0_1 = arith.constant 0 : index
    %0 = vector.load %arg1[%c0, %c0_0, %c0_1] : memref<1x8x128xf32, #tpu.memory_space<vmem>>, vector<1x8x128xf32>
    %1 = vector.shape_cast %0 : vector<1x8x128xf32> to vector<8x128xf32>
    %c0_2 = arith.constant 0 : index
    %c0_3 = arith.constant 0 : index
    %c0_4 = arith.constant 0 : index
    %2 = vector.load %arg2[%c0_2, %c0_3, %c0_4] : memref<1x16x128xf32, #tpu.memory_space<vmem>>, vector<1x16x128xf32>
    %3 = vector.shape_cast %2 : vector<1x16x128xf32> to vector<16x128xf32>
    %4 = arith.truncf %3 : vector<16x128xf32> to vector<16x128xbf16>
    %5 = arith.truncf %1 : vector<8x128xf32> to vector<8x128xbf16>
    %c0_5 = arith.constant 0 : index
    %c0_6 = arith.constant 0 : index
    %6 = vector.load %arg3[%c0_5, %c0_6] : memref<128x384xbf16, #tpu.memory_space<vmem>>, vector<128x384xbf16>
    %cst = arith.constant dense<0.000000e+00> : vector<8x384xf32>
    %7 = tpu.matmul %5, %6, %cst {dimension_numbers = #tpu.dot_dimension_numbers<[1], [0], [0], [1], [0, 0, 1, 1], [], []>} : vector<8x128xbf16>, vector<128x384xbf16>, vector<8x384xf32> -> vector<8x384xf32>
    %c0_7 = arith.constant 0 : index
    %c0_8 = arith.constant 0 : index
    %8 = vector.load %arg4[%c0_7, %c0_8] : memref<1x384xf32, #tpu.memory_space<vmem>>, vector<1x384xf32>
    %9 = vector.broadcast %8 : vector<1x384xf32> to vector<8x384xf32>
    %10 = arith.addf %7, %9 : vector<8x384xf32>
    %11 = arith.truncf %10 : vector<8x384xf32> to vector<8x384xbf16>
    %12 = vector.extract_strided_slice %11 {offsets = [0, 0], sizes = [8, 128], strides = [1, 1]} : vector<8x384xbf16> to vector<8x128xbf16>
    %13 = vector.extract_strided_slice %11 {offsets = [0, 128], sizes = [8, 128], strides = [1, 1]} : vector<8x384xbf16> to vector<8x128xbf16>
    %14 = vector.extract_strided_slice %11 {offsets = [0, 256], sizes = [8, 128], strides = [1, 1]} : vector<8x384xbf16> to vector<8x128xbf16>
    %c0_9 = arith.constant 0 : index
    %c0_10 = arith.constant 0 : index
    %15 = vector.load %arg5[%c0_9, %c0_10] : memref<128x128xbf16, #tpu.memory_space<vmem>>, vector<128x128xbf16>
    %c0_11 = arith.constant 0 : index
    %c0_12 = arith.constant 0 : index
    %16 = vector.load %arg6[%c0_11, %c0_12] : memref<1x128xf32, #tpu.memory_space<vmem>>, vector<1x128xf32>
    %17 = vector.shape_cast %12 : vector<8x128xbf16> to vector<8x8x16xbf16>
    %18 = tpu.transpose %17, [1, 0, 2] : vector<8x8x16xbf16> -> vector<8x8x16xbf16>
    %19 = vector.shape_cast %13 : vector<8x128xbf16> to vector<8x8x16xbf16>
    %20 = tpu.transpose %19, [1, 0, 2] : vector<8x8x16xbf16> -> vector<8x8x16xbf16>
    %21 = vector.shape_cast %14 : vector<8x128xbf16> to vector<8x8x16xbf16>
    %22 = tpu.transpose %21, [1, 0, 2] : vector<8x8x16xbf16> -> vector<8x8x16xbf16>
    "tpu.trace_start"() <{level = 10 : i32, message = "hqd,hkd->hqk"}> : () -> ()
    %cst_13 = arith.constant dense<0.000000e+00> : vector<8x8x8xf32>
    %23 = tpu.matmul %18, %20, %cst_13 {dimension_numbers = #tpu.dot_dimension_numbers<[2], [2], [1], [1], [0, 0, 0, 1, 1, 1], [0], [0]>} : vector<8x8x16xbf16>, vector<8x8x16xbf16>, vector<8x8x8xf32> -> vector<8x8x8xf32>
    "tpu.trace_stop"() : () -> ()
    %cst_14 = arith.constant dense<0xFF800000> : vector<8x8xf32>
    %24 = vector.multi_reduction <maximumf>, %23, %cst_14 [2] : vector<8x8x8xf32> to vector<8x8xf32>
    %25 = vector.shape_cast %24 : vector<8x8xf32> to vector<8x8x1xf32>
    %26 = vector.broadcast %25 : vector<8x8x1xf32> to vector<8x8x8xf32>
    %27 = arith.subf %23, %26 : vector<8x8x8xf32>
    %28 = math.exp %27 : vector<8x8x8xf32>
    %cst_15 = arith.constant dense<0.000000e+00> : vector<8x8xf32>
    %29 = vector.multi_reduction <add>, %28, %cst_15 [2] : vector<8x8x8xf32> to vector<8x8xf32>
    %30 = vector.shape_cast %29 : vector<8x8xf32> to vector<8x8x1xf32>
    %31 = tpu.reciprocal %30 {approx = true} : vector<8x8x1xf32> -> vector<8x8x1xf32>
    %32 = vector.broadcast %31 : vector<8x8x1xf32> to vector<8x8x8xf32>
    %33 = arith.mulf %28, %32 : vector<8x8x8xf32>
    %34 = arith.truncf %33 : vector<8x8x8xf32> to vector<8x8x8xbf16>
    "tpu.trace_start"() <{level = 10 : i32, message = "hqk,hkd->hqd"}> : () -> ()
    %cst_16 = arith.constant dense<0.000000e+00> : vector<8x8x16xf32>
    %35 = tpu.matmul %34, %22, %cst_16 {dimension_numbers = #tpu.dot_dimension_numbers<[2], [1], [1], [2], [0, 0, 0, 1, 1, 2], [0], [0]>} : vector<8x8x8xbf16>, vector<8x8x16xbf16>, vector<8x8x16xf32> -> vector<8x8x16xf32>
    "tpu.trace_stop"() : () -> ()
    %36 = tpu.transpose %35, [1, 0, 2] : vector<8x8x16xf32> -> vector<8x8x16xf32>
    %37 = vector.shape_cast %36 : vector<8x8x16xf32> to vector<8x128xf32>
    %38 = arith.truncf %37 : vector<8x128xf32> to vector<8x128xbf16>
    %cst_17 = arith.constant dense<0.000000e+00> : vector<8x128xf32>
    %39 = tpu.matmul %38, %15, %cst_17 {dimension_numbers = #tpu.dot_dimension_numbers<[1], [0], [0], [1], [0, 0, 1, 1], [], []>} : vector<8x128xbf16>, vector<128x128xbf16>, vector<8x128xf32> -> vector<8x128xf32>
    %40 = vector.broadcast %16 : vector<1x128xf32> to vector<8x128xf32>
    %41 = arith.addf %39, %40 : vector<8x128xf32>
    %42 = arith.addf %1, %41 : vector<8x128xf32>
    %c0_18 = arith.constant 0 : index
    %c0_19 = arith.constant 0 : index
    %43 = vector.load %arg7[%c0_18, %c0_19] : memref<1x128xf32, #tpu.memory_space<vmem>>, vector<1x128xf32>
    %c0_20 = arith.constant 0 : index
    %c0_21 = arith.constant 0 : index
    %44 = vector.load %arg8[%c0_20, %c0_21] : memref<1x128xf32, #tpu.memory_space<vmem>>, vector<1x128xf32>
    %cst_22 = arith.constant dense<0.000000e+00> : vector<8xf32>
    %45 = vector.multi_reduction <add>, %42, %cst_22 [1] : vector<8x128xf32> to vector<8xf32>
    %46 = vector.shape_cast %45 : vector<8xf32> to vector<8x1xf32>
    %cst_23 = arith.constant 1.280000e+02 : f32
    %47 = vector.broadcast %cst_23 : f32 to vector<8x1xf32>
    %48 = arith.divf %46, %47 : vector<8x1xf32>
    %49 = vector.broadcast %48 : vector<8x1xf32> to vector<8x128xf32>
    %50 = arith.subf %42, %49 : vector<8x128xf32>
    %51 = arith.mulf %50, %50 : vector<8x128xf32>
    %cst_24 = arith.constant dense<0.000000e+00> : vector<8xf32>
    %52 = vector.multi_reduction <add>, %51, %cst_24 [1] : vector<8x128xf32> to vector<8xf32>
    %53 = vector.shape_cast %52 : vector<8xf32> to vector<8x1xf32>
    %cst_25 = arith.constant 1.280000e+02 : f32
    %54 = vector.broadcast %cst_25 : f32 to vector<8x1xf32>
    %55 = arith.divf %53, %54 : vector<8x1xf32>
    %56 = vector.broadcast %48 : vector<8x1xf32> to vector<8x128xf32>
    %57 = arith.subf %42, %56 : vector<8x128xf32>
    %cst_26 = arith.constant 9.99999974E-6 : f32
    %58 = vector.broadcast %cst_26 : f32 to vector<8x1xf32>
    %59 = arith.addf %55, %58 : vector<8x1xf32>
    %60 = math.rsqrt %59 : vector<8x1xf32>
    %61 = vector.broadcast %60 : vector<8x1xf32> to vector<8x128xf32>
    %62 = arith.mulf %57, %61 : vector<8x128xf32>
    %63 = vector.broadcast %43 : vector<1x128xf32> to vector<8x128xf32>
    %64 = arith.mulf %62, %63 : vector<8x128xf32>
    %65 = vector.broadcast %44 : vector<1x128xf32> to vector<8x128xf32>
    %66 = arith.addf %64, %65 : vector<8x128xf32>
    %67 = arith.truncf %66 : vector<8x128xf32> to vector<8x128xbf16>
    %c0_27 = arith.constant 0 : index
    %c0_28 = arith.constant 0 : index
    %68 = vector.load %arg9[%c0_27, %c0_28] : memref<128x128xbf16, #tpu.memory_space<vmem>>, vector<128x128xbf16>
    %cst_29 = arith.constant dense<0.000000e+00> : vector<8x128xf32>
    %69 = tpu.matmul %67, %68, %cst_29 {dimension_numbers = #tpu.dot_dimension_numbers<[1], [0], [0], [1], [0, 0, 1, 1], [], []>} : vector<8x128xbf16>, vector<128x128xbf16>, vector<8x128xf32> -> vector<8x128xf32>
    %c0_30 = arith.constant 0 : index
    %c0_31 = arith.constant 0 : index
    %70 = vector.load %arg10[%c0_30, %c0_31] : memref<1x128xf32, #tpu.memory_space<vmem>>, vector<1x128xf32>
    %71 = vector.broadcast %70 : vector<1x128xf32> to vector<8x128xf32>
    %72 = arith.addf %69, %71 : vector<8x128xf32>
    %c0_32 = arith.constant 0 : index
    %c0_33 = arith.constant 0 : index
    %73 = vector.load %arg11[%c0_32, %c0_33] : memref<128x256xbf16, #tpu.memory_space<vmem>>, vector<128x256xbf16>
    %cst_34 = arith.constant dense<0.000000e+00> : vector<16x256xf32>
    %74 = tpu.matmul %4, %73, %cst_34 {dimension_numbers = #tpu.dot_dimension_numbers<[1], [0], [0], [1], [0, 0, 1, 1], [], []>} : vector<16x128xbf16>, vector<128x256xbf16>, vector<16x256xf32> -> vector<16x256xf32>
    %c0_35 = arith.constant 0 : index
    %c0_36 = arith.constant 0 : index
    %75 = vector.load %arg12[%c0_35, %c0_36] : memref<1x256xf32, #tpu.memory_space<vmem>>, vector<1x256xf32>
    %76 = vector.broadcast %75 : vector<1x256xf32> to vector<16x256xf32>
    %77 = arith.addf %74, %76 : vector<16x256xf32>
    %78 = arith.truncf %77 : vector<16x256xf32> to vector<16x256xbf16>
    %79 = arith.truncf %72 : vector<8x128xf32> to vector<8x128xbf16>
    %80 = vector.extract_strided_slice %78 {offsets = [0, 0], sizes = [16, 128], strides = [1, 1]} : vector<16x256xbf16> to vector<16x128xbf16>
    %81 = vector.extract_strided_slice %78 {offsets = [0, 128], sizes = [16, 128], strides = [1, 1]} : vector<16x256xbf16> to vector<16x128xbf16>
    %c0_37 = arith.constant 0 : index
    %c0_38 = arith.constant 0 : index
    %82 = vector.load %arg13[%c0_37, %c0_38] : memref<128x128xbf16, #tpu.memory_space<vmem>>, vector<128x128xbf16>
    %c0_39 = arith.constant 0 : index
    %c0_40 = arith.constant 0 : index
    %83 = vector.load %arg14[%c0_39, %c0_40] : memref<1x128xf32, #tpu.memory_space<vmem>>, vector<1x128xf32>
    %84 = vector.shape_cast %79 : vector<8x128xbf16> to vector<8x8x16xbf16>
    %85 = tpu.transpose %84, [1, 0, 2] : vector<8x8x16xbf16> -> vector<8x8x16xbf16>
    %86 = vector.shape_cast %80 : vector<16x128xbf16> to vector<16x8x16xbf16>
    %87 = tpu.transpose %86, [1, 0, 2] : vector<16x8x16xbf16> -> vector<8x16x16xbf16>
    %88 = vector.shape_cast %81 : vector<16x128xbf16> to vector<16x8x16xbf16>
    %89 = tpu.transpose %88, [1, 0, 2] : vector<16x8x16xbf16> -> vector<8x16x16xbf16>
    "tpu.trace_start"() <{level = 10 : i32, message = "hqd,hkd->hqk"}> : () -> ()
    %cst_41 = arith.constant dense<0.000000e+00> : vector<8x8x16xf32>
    %90 = tpu.matmul %85, %87, %cst_41 {dimension_numbers = #tpu.dot_dimension_numbers<[2], [2], [1], [1], [0, 0, 0, 1, 1, 1], [0], [0]>} : vector<8x8x16xbf16>, vector<8x16x16xbf16>, vector<8x8x16xf32> -> vector<8x8x16xf32>
    "tpu.trace_stop"() : () -> ()
    %cst_42 = arith.constant dense<0xFF800000> : vector<8x8xf32>
    %91 = vector.multi_reduction <maximumf>, %90, %cst_42 [2] : vector<8x8x16xf32> to vector<8x8xf32>
    %92 = vector.shape_cast %91 : vector<8x8xf32> to vector<8x8x1xf32>
    %93 = vector.broadcast %92 : vector<8x8x1xf32> to vector<8x8x16xf32>
    %94 = arith.subf %90, %93 : vector<8x8x16xf32>
    %95 = math.exp %94 : vector<8x8x16xf32>
    %cst_43 = arith.constant dense<0.000000e+00> : vector<8x8xf32>
    %96 = vector.multi_reduction <add>, %95, %cst_43 [2] : vector<8x8x16xf32> to vector<8x8xf32>
    %97 = vector.shape_cast %96 : vector<8x8xf32> to vector<8x8x1xf32>
    %98 = tpu.reciprocal %97 {approx = true} : vector<8x8x1xf32> -> vector<8x8x1xf32>
    %99 = vector.broadcast %98 : vector<8x8x1xf32> to vector<8x8x16xf32>
    %100 = arith.mulf %95, %99 : vector<8x8x16xf32>
    %101 = arith.truncf %100 : vector<8x8x16xf32> to vector<8x8x16xbf16>
    "tpu.trace_start"() <{level = 10 : i32, message = "hqk,hkd->hqd"}> : () -> ()
    %cst_44 = arith.constant dense<0.000000e+00> : vector<8x8x16xf32>
    %102 = tpu.matmul %101, %89, %cst_44 {dimension_numbers = #tpu.dot_dimension_numbers<[2], [1], [1], [2], [0, 0, 0, 1, 1, 2], [0], [0]>} : vector<8x8x16xbf16>, vector<8x16x16xbf16>, vector<8x8x16xf32> -> vector<8x8x16xf32>
    "tpu.trace_stop"() : () -> ()
    %103 = tpu.transpose %102, [1, 0, 2] : vector<8x8x16xf32> -> vector<8x8x16xf32>
    %104 = vector.shape_cast %103 : vector<8x8x16xf32> to vector<8x128xf32>
    %105 = arith.truncf %104 : vector<8x128xf32> to vector<8x128xbf16>
    %cst_45 = arith.constant dense<0.000000e+00> : vector<8x128xf32>
    %106 = tpu.matmul %105, %82, %cst_45 {dimension_numbers = #tpu.dot_dimension_numbers<[1], [0], [0], [1], [0, 0, 1, 1], [], []>} : vector<8x128xbf16>, vector<128x128xbf16>, vector<8x128xf32> -> vector<8x128xf32>
    %107 = vector.broadcast %83 : vector<1x128xf32> to vector<8x128xf32>
    %108 = arith.addf %106, %107 : vector<8x128xf32>
    %109 = arith.addf %66, %108 : vector<8x128xf32>
    %c0_46 = arith.constant 0 : index
    %c0_47 = arith.constant 0 : index
    %110 = vector.load %arg15[%c0_46, %c0_47] : memref<1x128xf32, #tpu.memory_space<vmem>>, vector<1x128xf32>
    %c0_48 = arith.constant 0 : index
    %c0_49 = arith.constant 0 : index
    %111 = vector.load %arg16[%c0_48, %c0_49] : memref<1x128xf32, #tpu.memory_space<vmem>>, vector<1x128xf32>
    %cst_50 = arith.constant dense<0.000000e+00> : vector<8xf32>
    %112 = vector.multi_reduction <add>, %109, %cst_50 [1] : vector<8x128xf32> to vector<8xf32>
    %113 = vector.shape_cast %112 : vector<8xf32> to vector<8x1xf32>
    %cst_51 = arith.constant 1.280000e+02 : f32
    %114 = vector.broadcast %cst_51 : f32 to vector<8x1xf32>
    %115 = arith.divf %113, %114 : vector<8x1xf32>
    %116 = vector.broadcast %115 : vector<8x1xf32> to vector<8x128xf32>
    %117 = arith.subf %109, %116 : vector<8x128xf32>
    %118 = arith.mulf %117, %117 : vector<8x128xf32>
    %cst_52 = arith.constant dense<0.000000e+00> : vector<8xf32>
    %119 = vector.multi_reduction <add>, %118, %cst_52 [1] : vector<8x128xf32> to vector<8xf32>
    %120 = vector.shape_cast %119 : vector<8xf32> to vector<8x1xf32>
    %cst_53 = arith.constant 1.280000e+02 : f32
    %121 = vector.broadcast %cst_53 : f32 to vector<8x1xf32>
    %122 = arith.divf %120, %121 : vector<8x1xf32>
    %123 = vector.broadcast %115 : vector<8x1xf32> to vector<8x128xf32>
    %124 = arith.subf %109, %123 : vector<8x128xf32>
    %cst_54 = arith.constant 9.99999974E-6 : f32
    %125 = vector.broadcast %cst_54 : f32 to vector<8x1xf32>
    %126 = arith.addf %122, %125 : vector<8x1xf32>
    %127 = math.rsqrt %126 : vector<8x1xf32>
    %128 = vector.broadcast %127 : vector<8x1xf32> to vector<8x128xf32>
    %129 = arith.mulf %124, %128 : vector<8x128xf32>
    %130 = vector.broadcast %110 : vector<1x128xf32> to vector<8x128xf32>
    %131 = arith.mulf %129, %130 : vector<8x128xf32>
    %132 = vector.broadcast %111 : vector<1x128xf32> to vector<8x128xf32>
    %133 = arith.addf %131, %132 : vector<8x128xf32>
    %134 = arith.truncf %133 : vector<8x128xf32> to vector<8x128xbf16>
    %c0_55 = arith.constant 0 : index
    %c0_56 = arith.constant 0 : index
    %135 = vector.load %arg17[%c0_55, %c0_56] : memref<128x256xbf16, #tpu.memory_space<vmem>>, vector<128x256xbf16>
    %cst_57 = arith.constant dense<0.000000e+00> : vector<8x256xf32>
    %136 = tpu.matmul %134, %135, %cst_57 {dimension_numbers = #tpu.dot_dimension_numbers<[1], [0], [0], [1], [0, 0, 1, 1], [], []>} : vector<8x128xbf16>, vector<128x256xbf16>, vector<8x256xf32> -> vector<8x256xf32>
    %c0_58 = arith.constant 0 : index
    %c0_59 = arith.constant 0 : index
    %137 = vector.load %arg18[%c0_58, %c0_59] : memref<1x256xf32, #tpu.memory_space<vmem>>, vector<1x256xf32>
    %138 = vector.broadcast %137 : vector<1x256xf32> to vector<8x256xf32>
    %139 = arith.addf %136, %138 : vector<8x256xf32>
    %cst_60 = arith.constant 5.000000e-01 : f32
    %140 = vector.broadcast %cst_60 : f32 to vector<8x256xf32>
    %141 = arith.mulf %140, %139 : vector<8x256xf32>
    %cst_61 = arith.constant 4.471500e-02 : f32
    %142 = vector.broadcast %cst_61 : f32 to vector<8x256xf32>
    %143 = arith.mulf %142, %139 : vector<8x256xf32>
    %144 = arith.mulf %143, %139 : vector<8x256xf32>
    %145 = arith.mulf %144, %139 : vector<8x256xf32>
    %146 = arith.addf %139, %145 : vector<8x256xf32>
    %cst_62 = arith.constant 0.797884583 : f32
    %147 = vector.broadcast %cst_62 : f32 to vector<8x256xf32>
    %148 = arith.mulf %147, %146 : vector<8x256xf32>
    %149 = math.tanh %148 : vector<8x256xf32>
    %cst_63 = arith.constant 1.000000e+00 : f32
    %150 = vector.broadcast %cst_63 : f32 to vector<8x256xf32>
    %151 = arith.addf %150, %149 : vector<8x256xf32>
    %152 = arith.mulf %141, %151 : vector<8x256xf32>
    %153 = arith.truncf %152 : vector<8x256xf32> to vector<8x256xbf16>
    %c0_64 = arith.constant 0 : index
    %c0_65 = arith.constant 0 : index
    %154 = vector.load %arg19[%c0_64, %c0_65] : memref<256x128xbf16, #tpu.memory_space<vmem>>, vector<256x128xbf16>
    %cst_66 = arith.constant dense<0.000000e+00> : vector<8x128xf32>
    %155 = tpu.matmul %153, %154, %cst_66 {dimension_numbers = #tpu.dot_dimension_numbers<[1], [0], [0], [1], [0, 0, 1, 1], [], []>} : vector<8x256xbf16>, vector<256x128xbf16>, vector<8x128xf32> -> vector<8x128xf32>
    %c0_67 = arith.constant 0 : index
    %c0_68 = arith.constant 0 : index
    %156 = vector.load %arg20[%c0_67, %c0_68] : memref<1x128xf32, #tpu.memory_space<vmem>>, vector<1x128xf32>
    %157 = vector.broadcast %156 : vector<1x128xf32> to vector<8x128xf32>
    %158 = arith.addf %155, %157 : vector<8x128xf32>
    %159 = arith.addf %133, %158 : vector<8x128xf32>
    %c0_69 = arith.constant 0 : index
    %c0_70 = arith.constant 0 : index
    %160 = vector.load %arg21[%c0_69, %c0_70] : memref<1x128xf32, #tpu.memory_space<vmem>>, vector<1x128xf32>
    %c0_71 = arith.constant 0 : index
    %c0_72 = arith.constant 0 : index
    %161 = vector.load %arg22[%c0_71, %c0_72] : memref<1x128xf32, #tpu.memory_space<vmem>>, vector<1x128xf32>
    %cst_73 = arith.constant dense<0.000000e+00> : vector<8xf32>
    %162 = vector.multi_reduction <add>, %159, %cst_73 [1] : vector<8x128xf32> to vector<8xf32>
    %163 = vector.shape_cast %162 : vector<8xf32> to vector<8x1xf32>
    %cst_74 = arith.constant 1.280000e+02 : f32
    %164 = vector.broadcast %cst_74 : f32 to vector<8x1xf32>
    %165 = arith.divf %163, %164 : vector<8x1xf32>
    %166 = vector.broadcast %165 : vector<8x1xf32> to vector<8x128xf32>
    %167 = arith.subf %159, %166 : vector<8x128xf32>
    %168 = arith.mulf %167, %167 : vector<8x128xf32>
    %cst_75 = arith.constant dense<0.000000e+00> : vector<8xf32>
    %169 = vector.multi_reduction <add>, %168, %cst_75 [1] : vector<8x128xf32> to vector<8xf32>
    %170 = vector.shape_cast %169 : vector<8xf32> to vector<8x1xf32>
    %cst_76 = arith.constant 1.280000e+02 : f32
    %171 = vector.broadcast %cst_76 : f32 to vector<8x1xf32>
    %172 = arith.divf %170, %171 : vector<8x1xf32>
    %173 = vector.broadcast %165 : vector<8x1xf32> to vector<8x128xf32>
    %174 = arith.subf %159, %173 : vector<8x128xf32>
    %cst_77 = arith.constant 9.99999974E-6 : f32
    %175 = vector.broadcast %cst_77 : f32 to vector<8x1xf32>
    %176 = arith.addf %172, %175 : vector<8x1xf32>
    %177 = math.rsqrt %176 : vector<8x1xf32>
    %178 = vector.broadcast %177 : vector<8x1xf32> to vector<8x128xf32>
    %179 = arith.mulf %174, %178 : vector<8x128xf32>
    %180 = vector.broadcast %160 : vector<1x128xf32> to vector<8x128xf32>
    %181 = arith.mulf %179, %180 : vector<8x128xf32>
    %182 = vector.broadcast %161 : vector<1x128xf32> to vector<8x128xf32>
    %183 = arith.addf %181, %182 : vector<8x128xf32>
    %184 = vector.shape_cast %183 : vector<8x128xf32> to vector<1x8x128xf32>
    %c0_78 = arith.constant 0 : index
    %c0_79 = arith.constant 0 : index
    %c0_80 = arith.constant 0 : index
    %185 = vector.load %arg23[%c0_78, %c0_79, %c0_80] : memref<1x8x128xf32, #tpu.memory_space<vmem>>, vector<1x8x128xf32>
    tpu.vector_store %arg23[%c0_78, %c0_79, %c0_80], %184 {strides = array<i32>} : memref<1x8x128xf32, #tpu.memory_space<vmem>>, vector<1x8x128xf32>,
    return
  }
  func.func @transform_0(%arg0: i32) -> (i32, i32, i32) {
    %c0_i32 = arith.constant 0 : i32
    %c0_i32_0 = arith.constant 0 : i32
    %c0_i32_1 = arith.constant 0 : i32
    return %arg0, %c0_i32, %c0_i32_0 : i32, i32, i32
  }
  func.func @transform_1(%arg0: i32) -> (i32, i32, i32) {
    %c0_i32 = arith.constant 0 : i32
    %c0_i32_0 = arith.constant 0 : i32
    %c0_i32_1 = arith.constant 0 : i32
    return %arg0, %c0_i32, %c0_i32_0 : i32, i32, i32
  }
  func.func @transform_2(%arg0: i32) -> (i32, i32) {
    %c0_i32 = arith.constant 0 : i32
    %c0_i32_0 = arith.constant 0 : i32
    %c0_i32_1 = arith.constant 0 : i32
    return %c0_i32, %c0_i32_0 : i32, i32
  }
  func.func @transform_3(%arg0: i32) -> (i32, i32) {
    %c0_i32 = arith.constant 0 : i32
    %c0_i32_0 = arith.constant 0 : i32
    %c0_i32_1 = arith.constant 0 : i32
    return %c0_i32, %c0_i32_0 : i32, i32
  }
  func.func @transform_4(%arg0: i32) -> (i32, i32) {
    %c0_i32 = arith.constant 0 : i32
    %c0_i32_0 = arith.constant 0 : i32
    %c0_i32_1 = arith.constant 0 : i32
    return %c0_i32, %c0_i32_0 : i32, i32
  }
  func.func @transform_5(%arg0: i32) -> (i32, i32) {
    %c0_i32 = arith.constant 0 : i32
    %c0_i32_0 = arith.constant 0 : i32
    %c0_i32_1 = arith.constant 0 : i32
    return %c0_i32, %c0_i32_0 : i32, i32
  }
  func.func @transform_6(%arg0: i32) -> (i32, i32) {
    %c0_i32 = arith.constant 0 : i32
    %c0_i32_0 = arith.constant 0 : i32
    %c0_i32_1 = arith.constant 0 : i32
    return %c0_i32, %c0_i32_0 : i32, i32
  }
  func.func @transform_7(%arg0: i32) -> (i32, i32) {
    %c0_i32 = arith.constant 0 : i32
    %c0_i32_0 = arith.constant 0 : i32
    %c0_i32_1 = arith.constant 0 : i32
    return %c0_i32, %c0_i32_0 : i32, i32
  }
  func.func @transform_8(%arg0: i32) -> (i32, i32) {
    %c0_i32 = arith.constant 0 : i32
    %c0_i32_0 = arith.constant 0 : i32
    %c0_i32_1 = arith.constant 0 : i32
    return %c0_i32, %c0_i32_0 : i32, i32
  }
  func.func @transform_9(%arg0: i32) -> (i32, i32) {
    %c0_i32 = arith.constant 0 : i32
    %c0_i32_0 = arith.constant 0 : i32
    %c0_i32_1 = arith.constant 0 : i32
    return %c0_i32, %c0_i32_0 : i32, i32
  }
  func.func @transform_10(%arg0: i32) -> (i32, i32) {
    %c0_i32 = arith.constant 0 : i32
    %c0_i32_0 = arith.constant 0 : i32
    %c0_i32_1 = arith.constant 0 : i32
    return %c0_i32, %c0_i32_0 : i32, i32
  }
  func.func @transform_11(%arg0: i32) -> (i32, i32) {
    %c0_i32 = arith.constant 0 : i32
    %c0_i32_0 = arith.constant 0 : i32
    %c0_i32_1 = arith.constant 0 : i32
    return %c0_i32, %c0_i32_0 : i32, i32
  }
  func.func @transform_12(%arg0: i32) -> (i32, i32) {
    %c0_i32 = arith.constant 0 : i32
    %c0_i32_0 = arith.constant 0 : i32
    %c0_i32_1 = arith.constant 0 : i32
    return %c0_i32, %c0_i32_0 : i32, i32
  }
  func.func @transform_13(%arg0: i32) -> (i32, i32) {
    %c0_i32 = arith.constant 0 : i32
    %c0_i32_0 = arith.constant 0 : i32
    %c0_i32_1 = arith.constant 0 : i32
    return %c0_i32, %c0_i32_0 : i32, i32
  }
  func.func @transform_14(%arg0: i32) -> (i32, i32) {
    %c0_i32 = arith.constant 0 : i32
    %c0_i32_0 = arith.constant 0 : i32
    %c0_i32_1 = arith.constant 0 : i32
    return %c0_i32, %c0_i32_0 : i32, i32
  }
  func.func @transform_15(%arg0: i32) -> (i32, i32) {
    %c0_i32 = arith.constant 0 : i32
    %c0_i32_0 = arith.constant 0 : i32
    %c0_i32_1 = arith.constant 0 : i32
    return %c0_i32, %c0_i32_0 : i32, i32
  }
  func.func @transform_16(%arg0: i32) -> (i32, i32) {
    %c0_i32 = arith.constant 0 : i32
    %c0_i32_0 = arith.constant 0 : i32
    %c0_i32_1 = arith.constant 0 : i32
    return %c0_i32, %c0_i32_0 : i32, i32
  }
  func.func @transform_17(%arg0: i32) -> (i32, i32) {
    %c0_i32 = arith.constant 0 : i32
    %c0_i32_0 = arith.constant 0 : i32
    %c0_i32_1 = arith.constant 0 : i32
    return %c0_i32, %c0_i32_0 : i32, i32
  }
  func.func @transform_18(%arg0: i32) -> (i32, i32) {
    %c0_i32 = arith.constant 0 : i32
    %c0_i32_0 = arith.constant 0 : i32
    %c0_i32_1 = arith.constant 0 : i32
    return %c0_i32, %c0_i32_0 : i32, i32
  }
  func.func @transform_19(%arg0: i32) -> (i32, i32) {
    %c0_i32 = arith.constant 0 : i32
    %c0_i32_0 = arith.constant 0 : i32
    %c0_i32_1 = arith.constant 0 : i32
    return %c0_i32, %c0_i32_0 : i32, i32
  }
  func.func @transform_20(%arg0: i32) -> (i32, i32) {
    %c0_i32 = arith.constant 0 : i32
    %c0_i32_0 = arith.constant 0 : i32
    %c0_i32_1 = arith.constant 0 : i32
    return %c0_i32, %c0_i32_0 : i32, i32
  }
  func.func @transform_21(%arg0: i32) -> (i32, i32) {
    %c0_i32 = arith.constant 0 : i32
    %c0_i32_0 = arith.constant 0 : i32
    %c0_i32_1 = arith.constant 0 : i32
    return %c0_i32, %c0_i32_0 : i32, i32
  }
  func.func @transform_22(%arg0: i32) -> (i32, i32, i32) {
    %c0_i32 = arith.constant 0 : i32
    %c0_i32_0 = arith.constant 0 : i32
    %c0_i32_1 = arith.constant 0 : i32
    return %arg0, %c0_i32, %c0_i32_0 : i32, i32, i32
  }
}

</mosaic_0001>

<llo_original>
// kernel: tpu_custom_call.1
$region0: #{tpu_custom_call.1}
  #allocation0 [shape = 'u32[]', space=smem, size = 0x4, offset = 0x4, fixed_abs, tag = 'smem constant byte address 0x4 - core index']
  #allocation1 [shape = 'u32[144,128]{1,0:T(1,128)}', space=vmem, size = 0x12000, scoped, tag = 'internal scratch']
  %s0 = inlined_call_operand.hbm [shape: f32[2,8,128], index: 0, kind: input, shape index: {}]
  %s1 = inlined_call_operand.hbm [shape: f32[2,16,128], index: 1, kind: input, shape index: {}]
  %s2 = inlined_call_operand.hbm [shape: bf16[128,384], index: 2, kind: input, shape index: {}]
  %s3 = inlined_call_operand.hbm [shape: f32[1,384], index: 3, kind: input, shape index: {}]
  %s4 = inlined_call_operand.hbm [shape: bf16[128,128], index: 4, kind: input, shape index: {}]
  %s5 = inlined_call_operand.hbm [shape: f32[1,128], index: 5, kind: input, shape index: {}]
  %s6 = inlined_call_operand.hbm [shape: f32[1,128], index: 6, kind: input, shape index: {}]
  %s7 = inlined_call_operand.hbm [shape: f32[1,128], index: 7, kind: input, shape index: {}]
  %s8 = inlined_call_operand.hbm [shape: bf16[128,128], index: 8, kind: input, shape index: {}]
  %s9 = inlined_call_operand.hbm [shape: f32[1,128], index: 9, kind: input, shape index: {}]
  %s10 = inlined_call_operand.hbm [shape: bf16[128,256], index: 10, kind: input, shape index: {}]
  %s11 = inlined_call_operand.hbm [shape: f32[1,256], index: 11, kind: input, shape index: {}]
  %s12 = inlined_call_operand.hbm [shape: bf16[128,128], index: 12, kind: input, shape index: {}]
  %s13 = inlined_call_operand.hbm [shape: f32[1,128], index: 13, kind: input, shape index: {}]
  %s14 = inlined_call_operand.hbm [shape: f32[1,128], index: 14, kind: input, shape index: {}]
  %s15 = inlined_call_operand.hbm [shape: f32[1,128], index: 15, kind: input, shape index: {}]
  %s16 = inlined_call_operand.hbm [shape: bf16[128,256], index: 16, kind: input, shape index: {}]
  %s17 = inlined_call_operand.hbm [shape: f32[1,256], index: 17, kind: input, shape index: {}]
  %s18 = inlined_call_operand.hbm [shape: bf16[256,128], index: 18, kind: input, shape index: {}]
  %s19 = inlined_call_operand.hbm [shape: f32[1,128], index: 19, kind: input, shape index: {}]
  %s20 = inlined_call_operand.hbm [shape: f32[1,128], index: 20, kind: input, shape index: {}]
  %s21 = inlined_call_operand.hbm [shape: f32[1,128], index: 21, kind: input, shape index: {}]
  %s22 = inlined_call_operand.hbm [shape: f32[2,8,128], index: 22, kind: output, shape index: {}]
  %s23 = sld [smem:[#allocation0]]
  $region209: #{tpu_custom_call.1} parent=0
    _
  %s25 = ssub.s32 1, %s23
  %s26 = scalar_select 0, %s25, %s23
  $region1: #{tpu_custom_call.1} parent=0
    #allocation2 [shape = 'u8[8192]{0}', space=vmem, size = 0x2000, scoped, tag = 'input window, operand 0']
    #allocation3 [shape = 's32[2]{0}', space=sflag, size = 0x8, scoped, tag = 'scoped memory for tpu_custom_call.1']
    #allocation4 [shape = 's32[2]{0}', space=sflag, size = 0x8, scoped, tag = 'scoped memory for tpu_custom_call.1']
    #allocation5 [shape = 'u8[16384]{0}', space=vmem, size = 0x4000, scoped, tag = 'input window, operand 1']
    #allocation6 [shape = 's32[2]{0}', space=sflag, size = 0x8, scoped, tag = 'scoped memory for tpu_custom_call.1']
    #allocation7 [shape = 'u8[98304]{0}', space=vmem, size = 0x18000, scoped, tag = 'input window, operand 2, single buffered']
    #allocation8 [shape = 'u8[1536]{0}', space=vmem, size = 0x800, scoped, tag = 'input window, operand 3, single buffered']
    #allocation9 [shape = 's32[1]{0}', space=sflag, size = 0x4, scoped, tag = 'scoped memory for tpu_custom_call.1']
    #allocation10 [shape = 'u8[32768]{0}', space=vmem, size = 0x8000, scoped, tag = 'input window, operand 4, single buffered']
    #allocation11 [shape = 'u8[512]{0}', space=vmem, size = 0x400, scoped, tag = 'input window, operand 5, single buffered']
    #allocation12 [shape = 's32[1]{0}', space=sflag, size = 0x4, scoped, tag = 'scoped memory for tpu_custom_call.1']
    #allocation13 [shape = 'u8[512]{0}', space=vmem, size = 0x400, scoped, tag = 'input window, operand 6, single buffered']
    #allocation14 [shape = 'u8[512]{0}', space=vmem, size = 0x400, scoped, tag = 'input window, operand 7, single buffered']
    #allocation15 [shape = 's32[1]{0}', space=sflag, size = 0x4, scoped, tag = 'scoped memory for tpu_custom_call.1']
    #allocation16 [shape = 'u8[32768]{0}', space=vmem, size = 0x8000, scoped, tag = 'input window, operand 8, single buffered']
    #allocation17 [shape = 'u8[512]{0}', space=vmem, size = 0x400, scoped, tag = 'input window, operand 9, single buffered']
    #allocation18 [shape = 's32[1]{0}', space=sflag, size = 0x4, scoped, tag = 'scoped memory for tpu_custom_call.1']
    #allocation19 [shape = 'u8[65536]{0}', space=vmem, size = 0x10000, scoped, tag = 'input window, operand 10, single buffered']
    #allocation20 [shape = 'u8[1024]{0}', space=vmem, size = 0x400, scoped, tag = 'input window, operand 11, single buffered']
    #allocation21 [shape = 's32[1]{0}', space=sflag, size = 0x4, scoped, tag = 'scoped memory for tpu_custom_call.1']
    #allocation22 [shape = 'u8[32768]{0}', space=vmem, size = 0x8000, scoped, tag = 'input window, operand 12, single buffered']
    #allocation23 [shape = 'u8[512]{0}', space=vmem, size = 0x400, scoped, tag = 'input window, operand 13, single buffered']
    #allocation24 [shape = 's32[1]{0}', space=sflag, size = 0x4, scoped, tag = 'scoped memory for tpu_custom_call.1']
    #allocation25 [shape = 'u8[512]{0}', space=vmem, size = 0x400, scoped, tag = 'input window, operand 14, single buffered']
    #allocation26 [shape = 'u8[512]{0}', space=vmem, size = 0x400, scoped, tag = 'input window, operand 15, single buffered']
    #allocation27 [shape = 's32[1]{0}', space=sflag, size = 0x4, scoped, tag = 'scoped memory for tpu_custom_call.1']
    #allocation28 [shape = 'u8[65536]{0}', space=vmem, size = 0x10000, scoped, tag = 'input window, operand 16, single buffered']
    #allocation29 [shape = 'u8[1024]{0}', space=vmem, size = 0x400, scoped, tag = 'input window, operand 17, single buffered']
    #allocation30 [shape = 's32[1]{0}', space=sflag, size = 0x4, scoped, tag = 'scoped memory for tpu_custom_call.1']
    #allocation31 [shape = 'u8[65536]{0}', space=vmem, size = 0x10000, scoped, tag = 'input window, operand 18, single buffered']
    #allocation32 [shape = 'u8[512]{0}', space=vmem, size = 0x400, scoped, tag = 'input window, operand 19, single buffered']
    #allocation33 [shape = 's32[1]{0}', space=sflag, size = 0x4, scoped, tag = 'scoped memory for tpu_custom_call.1']
    #allocation34 [shape = 'u8[512]{0}', space=vmem, size = 0x400, scoped, tag = 'input window, operand 20, single buffered']
    #allocation35 [shape = 'u8[512]{0}', space=vmem, size = 0x400, scoped, tag = 'input window, operand 21, single buffered']
    #allocation36 [shape = 's32[1]{0}', space=sflag, size = 0x4, scoped, tag = 'scoped memory for tpu_custom_call.1']
    #allocation37 [shape = 'u8[8192]{0}', space=vmem, size = 0x2000, scoped, tag = 'output window, operand 0']
    %27 = vsyncpa [#allocation3], 0
    %s28 = scalar_lea.sflag [#allocation3], 1
    %29 = vsyncpa %s28, 0
    %30 = vsyncpa [#allocation6], 0
    %s31 = scalar_lea.sflag [#allocation6], 1
    %32 = vsyncpa %s31, 0
    %33 = vsyncpa [#allocation9], 0
    %34 = vsyncpa [#allocation12], 0
    %35 = vsyncpa [#allocation15], 0
    %36 = vsyncpa [#allocation18], 0
    %37 = vsyncpa [#allocation21], 0
    %38 = vsyncpa [#allocation24], 0
    %39 = vsyncpa [#allocation27], 0
    %40 = vsyncpa [#allocation30], 0
    %41 = vsyncpa [#allocation33], 0
    %42 = vsyncpa [#allocation36], 0
    %43 = vsyncpa [#allocation4], 0
    %s44 = scalar_lea.sflag [#allocation4], 1
    %45 = vsyncpa %s44, 0
    loop: start=0, step=1, limit=4
    $region2: #{tpu_custom_call.1} parent=1 // loop_pre_header
      _
    $region3: #{tpu_custom_call.1} parent=1 // loop_header
      %s47 = sphi 0, %s51
      %p48 = scmp.ge.s32.totalorder %s47, 4
      %s57 = sphi 0, %s59
      %s60 = sphi 0, %s57
      %s61 = sphi 0, %s60
      %s77 = sphi 0, %s61
      %s83 = sphi 0, %s85
      %s86 = sphi 0, %s83
      %s87 = sphi 0, %s86
      %s103 = sphi 0, %s87
      %s107 = sphi 0, %s107
      %s109 = sphi 0, %s107
      %s110 = sphi 0, %s109
      %s124 = sphi 0, %s110
      %s128 = sphi 0, %s128
      %s130 = sphi 0, %s128
      %s131 = sphi 0, %s130
      %s145 = sphi 0, %s131
      %s149 = sphi 0, %s149
      %s151 = sphi 0, %s149
      %s152 = sphi 0, %s151
      %s166 = sphi 0, %s152
      %s170 = sphi 0, %s170
      %s172 = sphi 0, %s170
      %s173 = sphi 0, %s172
      %s187 = sphi 0, %s173
      %s191 = sphi 0, %s191
      %s193 = sphi 0, %s191
      %s194 = sphi 0, %s193
      %s208 = sphi 0, %s194
      %s212 = sphi 0, %s212
      %s214 = sphi 0, %s212
      %s215 = sphi 0, %s214
      %s229 = sphi 0, %s215
      %s233 = sphi 0, %s233
      %s235 = sphi 0, %s233
      %s236 = sphi 0, %s235
      %s250 = sphi 0, %s236
      %s254 = sphi 0, %s254
      %s256 = sphi 0, %s254
      %s257 = sphi 0, %s256
      %s271 = sphi 0, %s257
      %s275 = sphi 0, %s275
      %s277 = sphi 0, %s275
      %s278 = sphi 0, %s277
      %s292 = sphi 0, %s278
      %s296 = sphi 0, %s296
      %s298 = sphi 0, %s296
      %s299 = sphi 0, %s298
      %s313 = sphi 0, %s299
      %s317 = sphi 0, %s317
      %s319 = sphi 0, %s317
      %s320 = sphi 0, %s319
      %s334 = sphi 0, %s320
      %s338 = sphi 0, %s338
      %s340 = sphi 0, %s338
      %s341 = sphi 0, %s340
      %s355 = sphi 0, %s341
      %s359 = sphi 0, %s359
      %s361 = sphi 0, %s359
      %s362 = sphi 0, %s361
      %s376 = sphi 0, %s362
      %s380 = sphi 0, %s380
      %s382 = sphi 0, %s380
      %s383 = sphi 0, %s382
      %s397 = sphi 0, %s383
      %s401 = sphi 0, %s401
      %s403 = sphi 0, %s401
      %s404 = sphi 0, %s403
      %s418 = sphi 0, %s404
      %s422 = sphi 0, %s422
      %s424 = sphi 0, %s422
      %s425 = sphi 0, %s424
      %s439 = sphi 0, %s425
      %s443 = sphi 0, %s443
      %s445 = sphi 0, %s443
      %s446 = sphi 0, %s445
      %s460 = sphi 0, %s446
      %s464 = sphi 0, %s464
      %s466 = sphi 0, %s464
      %s467 = sphi 0, %s466
      %s481 = sphi 0, %s467
      %s485 = sphi 0, %s485
      %s487 = sphi 0, %s485
      %s488 = sphi 0, %s487
      %s502 = sphi 0, %s488
      %s506 = sphi 0, %s506
      %s508 = sphi 0, %s506
      %s509 = sphi 0, %s508
      %s523 = sphi 0, %s509
      %s529 = sphi 0, %s531
      %s532 = sphi 0, %s529
      %s533 = sphi 0, %s532
      %s549 = sphi 0, %s533
    $region4: #{tpu_custom_call.1} parent=1 // loop_header_branch
      %50 = sbr.rel (%p48) target = $region8
    $region5: #{tpu_custom_call.1} parent=1 // loop_body
      %s52 = ssub.s32 %s47, 1
      %s53 = ssub.s32 %s47, 2
      %s54 = sadd.s32 %s47, 1
      %s55 = ssub.s32 %s47, %s54
      %p56 = scmp.eq.s32.totalorder %s55, 0
      %s58 = sadd.s32 %s57, 1
      %s59 = scalar_select %p56, %s57, %s58
      %p62 = pneg %p56
      %p63 = scmp.eq.s32.totalorder %s47, 1
      %p64 = por %p62, %p63
      %p65 = scmp.ne.s32.totalorder %s57, %s60
      %p66 = scmp.eq.s32.totalorder %s47, 0
      %p67 = por %p65, %p66
      %p68 = scmp.ne.s32.totalorder %s57, %s60
      %p69 = scmp.eq.s32.totalorder %s52, 1
      %p70 = por %p68, %p69
      %p71 = scmp.ne.s32.totalorder %s60, %s61
      %p72 = scmp.eq.s32.totalorder %s52, 0
      %p73 = por %p71, %p72
      %p74 = scmp.ne.s32.totalorder %s60, %s61
      %p75 = scmp.eq.s32.totalorder %s53, 1
      %p76 = por %p74, %p75
      %p78 = scmp.ne.s32.totalorder %s61, %s77
      %p79 = scmp.eq.s32.totalorder %s53, 0
      %p80 = por %p78, %p79
      %s81 = ssub.s32 %s47, %s54
      %p82 = scmp.eq.s32.totalorder %s81, 0
      %s84 = sadd.s32 %s83, 1
      %s85 = scalar_select %p82, %s83, %s84
      %p88 = pneg %p82
      %p89 = scmp.eq.s32.totalorder %s47, 1
      %p90 = por %p88, %p89
      %p91 = scmp.ne.s32.totalorder %s83, %s86
      %p92 = scmp.eq.s32.totalorder %s47, 0
      %p93 = por %p91, %p92
      %p94 = scmp.ne.s32.totalorder %s83, %s86
      %p95 = scmp.eq.s32.totalorder %s52, 1
      %p96 = por %p94, %p95
      %p97 = scmp.ne.s32.totalorder %s86, %s87
      %p98 = scmp.eq.s32.totalorder %s52, 0
      %p99 = por %p97, %p98
      %p100 = scmp.ne.s32.totalorder %s86, %s87
      %p101 = scmp.eq.s32.totalorder %s53, 1
      %p102 = por %p100, %p101
      %p104 = scmp.ne.s32.totalorder %s87, %s103
      %p105 = scmp.eq.s32.totalorder %s53, 0
      %p106 = por %p104, %p105
      %s108 = sadd.s32 %s107, 1
      %p111 = scmp.eq.s32.totalorder %s47, 1
      %p112 = scmp.ne.s32.totalorder %s107, %s109
      %p113 = scmp.eq.s32.totalorder %s47, 0
      %p114 = por %p112, %p113
      %p115 = scmp.ne.s32.totalorder %s107, %s109
      %p116 = scmp.eq.s32.totalorder %s52, 1
      %p117 = por %p115, %p116
      %p118 = scmp.ne.s32.totalorder %s109, %s110
      %p119 = scmp.eq.s32.totalorder %s52, 0
      %p120 = por %p118, %p119
      %p121 = scmp.ne.s32.totalorder %s109, %s110
      %p122 = scmp.eq.s32.totalorder %s53, 1
      %p123 = por %p121, %p122
      %p125 = scmp.ne.s32.totalorder %s110, %s124
      %p126 = scmp.eq.s32.totalorder %s53, 0
      %p127 = por %p125, %p126
      %s129 = sadd.s32 %s128, 1
      %p132 = scmp.eq.s32.totalorder %s47, 1
      %p133 = scmp.ne.s32.totalorder %s128, %s130
      %p134 = scmp.eq.s32.totalorder %s47, 0
      %p135 = por %p133, %p134
      %p136 = scmp.ne.s32.totalorder %s128, %s130
      %p137 = scmp.eq.s32.totalorder %s52, 1
      %p138 = por %p136, %p137
      %p139 = scmp.ne.s32.totalorder %s130, %s131
      %p140 = scmp.eq.s32.totalorder %s52, 0
      %p141 = por %p139, %p140
      %p142 = scmp.ne.s32.totalorder %s130, %s131
      %p143 = scmp.eq.s32.totalorder %s53, 1
      %p144 = por %p142, %p143
      %p146 = scmp.ne.s32.totalorder %s131, %s145
      %p147 = scmp.eq.s32.totalorder %s53, 0
      %p148 = por %p146, %p147
      %s150 = sadd.s32 %s149, 1
      %p153 = scmp.eq.s32.totalorder %s47, 1
      %p154 = scmp.ne.s32.totalorder %s149, %s151
      %p155 = scmp.eq.s32.totalorder %s47, 0
      %p156 = por %p154, %p155
      %p157 = scmp.ne.s32.totalorder %s149, %s151
      %p158 = scmp.eq.s32.totalorder %s52, 1
      %p159 = por %p157, %p158
      %p160 = scmp.ne.s32.totalorder %s151, %s152
      %p161 = scmp.eq.s32.totalorder %s52, 0
      %p162 = por %p160, %p161
      %p163 = scmp.ne.s32.totalorder %s151, %s152
      %p164 = scmp.eq.s32.totalorder %s53, 1
      %p165 = por %p163, %p164
      %p167 = scmp.ne.s32.totalorder %s152, %s166
      %p168 = scmp.eq.s32.totalorder %s53, 0
      %p169 = por %p167, %p168
      %s171 = sadd.s32 %s170, 1
      %p174 = scmp.eq.s32.totalorder %s47, 1
      %p175 = scmp.ne.s32.totalorder %s170, %s172
      %p176 = scmp.eq.s32.totalorder %s47, 0
      %p177 = por %p175, %p176
      %p178 = scmp.ne.s32.totalorder %s170, %s172
      %p179 = scmp.eq.s32.totalorder %s52, 1
      %p180 = por %p178, %p179
      %p181 = scmp.ne.s32.totalorder %s172, %s173
      %p182 = scmp.eq.s32.totalorder %s52, 0
      %p183 = por %p181, %p182
      %p184 = scmp.ne.s32.totalorder %s172, %s173
      %p185 = scmp.eq.s32.totalorder %s53, 1
      %p186 = por %p184, %p185
      %p188 = scmp.ne.s32.totalorder %s173, %s187
      %p189 = scmp.eq.s32.totalorder %s53, 0
      %p190 = por %p188, %p189
      %s192 = sadd.s32 %s191, 1
      %p195 = scmp.eq.s32.totalorder %s47, 1
      %p196 = scmp.ne.s32.totalorder %s191, %s193
      %p197 = scmp.eq.s32.totalorder %s47, 0
      %p198 = por %p196, %p197
      %p199 = scmp.ne.s32.totalorder %s191, %s193
      %p200 = scmp.eq.s32.totalorder %s52, 1
      %p201 = por %p199, %p200
      %p202 = scmp.ne.s32.totalorder %s193, %s194
      %p203 = scmp.eq.s32.totalorder %s52, 0
      %p204 = por %p202, %p203
      %p205 = scmp.ne.s32.totalorder %s193, %s194
      %p206 = scmp.eq.s32.totalorder %s53, 1
      %p207 = por %p205, %p206
      %p209 = scmp.ne.s32.totalorder %s194, %s208
      %p210 = scmp.eq.s32.totalorder %s53, 0
      %p211 = por %p209, %p210
      %s213 = sadd.s32 %s212, 1
      %p216 = scmp.eq.s32.totalorder %s47, 1
      %p217 = scmp.ne.s32.totalorder %s212, %s214
      %p218 = scmp.eq.s32.totalorder %s47, 0
      %p219 = por %p217, %p218
      %p220 = scmp.ne.s32.totalorder %s212, %s214
      %p221 = scmp.eq.s32.totalorder %s52, 1
      %p222 = por %p220, %p221
      %p223 = scmp.ne.s32.totalorder %s214, %s215
      %p224 = scmp.eq.s32.totalorder %s52, 0
      %p225 = por %p223, %p224
      %p226 = scmp.ne.s32.totalorder %s214, %s215
      %p227 = scmp.eq.s32.totalorder %s53, 1
      %p228 = por %p226, %p227
      %p230 = scmp.ne.s32.totalorder %s215, %s229
      %p231 = scmp.eq.s32.totalorder %s53, 0
      %p232 = por %p230, %p231
      %s234 = sadd.s32 %s233, 1
      %p237 = scmp.eq.s32.totalorder %s47, 1
      %p238 = scmp.ne.s32.totalorder %s233, %s235
      %p239 = scmp.eq.s32.totalorder %s47, 0
      %p240 = por %p238, %p239
      %p241 = scmp.ne.s32.totalorder %s233, %s235
      %p242 = scmp.eq.s32.totalorder %s52, 1
      %p243 = por %p241, %p242
      %p244 = scmp.ne.s32.totalorder %s235, %s236
      %p245 = scmp.eq.s32.totalorder %s52, 0
      %p246 = por %p244, %p245
      %p247 = scmp.ne.s32.totalorder %s235, %s236
      %p248 = scmp.eq.s32.totalorder %s53, 1
      %p249 = por %p247, %p248
      %p251 = scmp.ne.s32.totalorder %s236, %s250
      %p252 = scmp.eq.s32.totalorder %s53, 0
      %p253 = por %p251, %p252
      %s255 = sadd.s32 %s254, 1
      %p258 = scmp.eq.s32.totalorder %s47, 1
      %p259 = scmp.ne.s32.totalorder %s254, %s256
      %p260 = scmp.eq.s32.totalorder %s47, 0
      %p261 = por %p259, %p260
      %p262 = scmp.ne.s32.totalorder %s254, %s256
      %p263 = scmp.eq.s32.totalorder %s52, 1
      %p264 = por %p262, %p263
      %p265 = scmp.ne.s32.totalorder %s256, %s257
      %p266 = scmp.eq.s32.totalorder %s52, 0
      %p267 = por %p265, %p266
      %p268 = scmp.ne.s32.totalorder %s256, %s257
      %p269 = scmp.eq.s32.totalorder %s53, 1
      %p270 = por %p268, %p269
      %p272 = scmp.ne.s32.totalorder %s257, %s271
      %p273 = scmp.eq.s32.totalorder %s53, 0
      %p274 = por %p272, %p273
      %s276 = sadd.s32 %s275, 1
      %p279 = scmp.eq.s32.totalorder %s47, 1
      %p280 = scmp.ne.s32.totalorder %s275, %s277
      %p281 = scmp.eq.s32.totalorder %s47, 0
      %p282 = por %p280, %p281
      %p283 = scmp.ne.s32.totalorder %s275, %s277
      %p284 = scmp.eq.s32.totalorder %s52, 1
      %p285 = por %p283, %p284
      %p286 = scmp.ne.s32.totalorder %s277, %s278
      %p287 = scmp.eq.s32.totalorder %s52, 0
      %p288 = por %p286, %p287
      %p289 = scmp.ne.s32.totalorder %s277, %s278
      %p290 = scmp.eq.s32.totalorder %s53, 1
      %p291 = por %p289, %p290
      %p293 = scmp.ne.s32.totalorder %s278, %s292
      %p294 = scmp.eq.s32.totalorder %s53, 0
      %p295 = por %p293, %p294
      %s297 = sadd.s32 %s296, 1
      %p300 = scmp.eq.s32.totalorder %s47, 1
      %p301 = scmp.ne.s32.totalorder %s296, %s298
      %p302 = scmp.eq.s32.totalorder %s47, 0
      %p303 = por %p301, %p302
      %p304 = scmp.ne.s32.totalorder %s296, %s298
      %p305 = scmp.eq.s32.totalorder %s52, 1
      %p306 = por %p304, %p305
      %p307 = scmp.ne.s32.totalorder %s298, %s299
      %p308 = scmp.eq.s32.totalorder %s52, 0
      %p309 = por %p307, %p308
      %p310 = scmp.ne.s32.totalorder %s298, %s299
      %p311 = scmp.eq.s32.totalorder %s53, 1
      %p312 = por %p310, %p311
      %p314 = scmp.ne.s32.totalorder %s299, %s313
      %p315 = scmp.eq.s32.totalorder %s53, 0
      %p316 = por %p314, %p315
      %s318 = sadd.s32 %s317, 1
      %p321 = scmp.eq.s32.totalorder %s47, 1
      %p322 = scmp.ne.s32.totalorder %s317, %s319
      %p323 = scmp.eq.s32.totalorder %s47, 0
      %p324 = por %p322, %p323
      %p325 = scmp.ne.s32.totalorder %s317, %s319
      %p326 = scmp.eq.s32.totalorder %s52, 1
      %p327 = por %p325, %p326
      %p328 = scmp.ne.s32.totalorder %s319, %s320
      %p329 = scmp.eq.s32.totalorder %s52, 0
      %p330 = por %p328, %p329
      %p331 = scmp.ne.s32.totalorder %s319, %s320
      %p332 = scmp.eq.s32.totalorder %s53, 1
      %p333 = por %p331, %p332
      %p335 = scmp.ne.s32.totalorder %s320, %s334
      %p336 = scmp.eq.s32.totalorder %s53, 0
      %p337 = por %p335, %p336
      %s339 = sadd.s32 %s338, 1
      %p342 = scmp.eq.s32.totalorder %s47, 1
      %p343 = scmp.ne.s32.totalorder %s338, %s340
      %p344 = scmp.eq.s32.totalorder %s47, 0
      %p345 = por %p343, %p344
      %p346 = scmp.ne.s32.totalorder %s338, %s340
      %p347 = scmp.eq.s32.totalorder %s52, 1
      %p348 = por %p346, %p347
      %p349 = scmp.ne.s32.totalorder %s340, %s341
      %p350 = scmp.eq.s32.totalorder %s52, 0
      %p351 = por %p349, %p350
      %p352 = scmp.ne.s32.totalorder %s340, %s341
      %p353 = scmp.eq.s32.totalorder %s53, 1
      %p354 = por %p352, %p353
      %p356 = scmp.ne.s32.totalorder %s341, %s355
      %p357 = scmp.eq.s32.totalorder %s53, 0
      %p358 = por %p356, %p357
      %s360 = sadd.s32 %s359, 1
      %p363 = scmp.eq.s32.totalorder %s47, 1
      %p364 = scmp.ne.s32.totalorder %s359, %s361
      %p365 = scmp.eq.s32.totalorder %s47, 0
      %p366 = por %p364, %p365
      %p367 = scmp.ne.s32.totalorder %s359, %s361
      %p368 = scmp.eq.s32.totalorder %s52, 1
      %p369 = por %p367, %p368
      %p370 = scmp.ne.s32.totalorder %s361, %s362
      %p371 = scmp.eq.s32.totalorder %s52, 0
      %p372 = por %p370, %p371
      %p373 = scmp.ne.s32.totalorder %s361, %s362
      %p374 = scmp.eq.s32.totalorder %s53, 1
      %p375 = por %p373, %p374
      %p377 = scmp.ne.s32.totalorder %s362, %s376
      %p378 = scmp.eq.s32.totalorder %s53, 0
      %p379 = por %p377, %p378
      %s381 = sadd.s32 %s380, 1
      %p384 = scmp.eq.s32.totalorder %s47, 1
      %p385 = scmp.ne.s32.totalorder %s380, %s382
      %p386 = scmp.eq.s32.totalorder %s47, 0
      %p387 = por %p385, %p386
      %p388 = scmp.ne.s32.totalorder %s380, %s382
      %p389 = scmp.eq.s32.totalorder %s52, 1
      %p390 = por %p388, %p389
      %p391 = scmp.ne.s32.totalorder %s382, %s383
      %p392 = scmp.eq.s32.totalorder %s52, 0
      %p393 = por %p391, %p392
      %p394 = scmp.ne.s32.totalorder %s382, %s383
      %p395 = scmp.eq.s32.totalorder %s53, 1
      %p396 = por %p394, %p395
      %p398 = scmp.ne.s32.totalorder %s383, %s397
      %p399 = scmp.eq.s32.totalorder %s53, 0
      %p400 = por %p398, %p399
      %s402 = sadd.s32 %s401, 1
      %p405 = scmp.eq.s32.totalorder %s47, 1
      %p406 = scmp.ne.s32.totalorder %s401, %s403
      %p407 = scmp.eq.s32.totalorder %s47, 0
      %p408 = por %p406, %p407
      %p409 = scmp.ne.s32.totalorder %s401, %s403
      %p410 = scmp.eq.s32.totalorder %s52, 1
      %p411 = por %p409, %p410
      %p412 = scmp.ne.s32.totalorder %s403, %s404
      %p413 = scmp.eq.s32.totalorder %s52, 0
      %p414 = por %p412, %p413
      %p415 = scmp.ne.s32.totalorder %s403, %s404
      %p416 = scmp.eq.s32.totalorder %s53, 1
      %p417 = por %p415, %p416
      %p419 = scmp.ne.s32.totalorder %s404, %s418
      %p420 = scmp.eq.s32.totalorder %s53, 0
      %p421 = por %p419, %p420
      %s423 = sadd.s32 %s422, 1
      %p426 = scmp.eq.s32.totalorder %s47, 1
      %p427 = scmp.ne.s32.totalorder %s422, %s424
      %p428 = scmp.eq.s32.totalorder %s47, 0
      %p429 = por %p427, %p428
      %p430 = scmp.ne.s32.totalorder %s422, %s424
      %p431 = scmp.eq.s32.totalorder %s52, 1
      %p432 = por %p430, %p431
      %p433 = scmp.ne.s32.totalorder %s424, %s425
      %p434 = scmp.eq.s32.totalorder %s52, 0
      %p435 = por %p433, %p434
      %p436 = scmp.ne.s32.totalorder %s424, %s425
      %p437 = scmp.eq.s32.totalorder %s53, 1
      %p438 = por %p436, %p437
      %p440 = scmp.ne.s32.totalorder %s425, %s439
      %p441 = scmp.eq.s32.totalorder %s53, 0
      %p442 = por %p440, %p441
      %s444 = sadd.s32 %s443, 1
      %p447 = scmp.eq.s32.totalorder %s47, 1
      %p448 = scmp.ne.s32.totalorder %s443, %s445
      %p449 = scmp.eq.s32.totalorder %s47, 0
      %p450 = por %p448, %p449
      %p451 = scmp.ne.s32.totalorder %s443, %s445
      %p452 = scmp.eq.s32.totalorder %s52, 1
      %p453 = por %p451, %p452
      %p454 = scmp.ne.s32.totalorder %s445, %s446
      %p455 = scmp.eq.s32.totalorder %s52, 0
      %p456 = por %p454, %p455
      %p457 = scmp.ne.s32.totalorder %s445, %s446
      %p458 = scmp.eq.s32.totalorder %s53, 1
      %p459 = por %p457, %p458
      %p461 = scmp.ne.s32.totalorder %s446, %s460
      %p462 = scmp.eq.s32.totalorder %s53, 0
      %p463 = por %p461, %p462
      %s465 = sadd.s32 %s464, 1
      %p468 = scmp.eq.s32.totalorder %s47, 1
      %p469 = scmp.ne.s32.totalorder %s464, %s466
      %p470 = scmp.eq.s32.totalorder %s47, 0
      %p471 = por %p469, %p470
      %p472 = scmp.ne.s32.totalorder %s464, %s466
      %p473 = scmp.eq.s32.totalorder %s52, 1
      %p474 = por %p472, %p473
      %p475 = scmp.ne.s32.totalorder %s466, %s467
      %p476 = scmp.eq.s32.totalorder %s52, 0
      %p477 = por %p475, %p476
      %p478 = scmp.ne.s32.totalorder %s466, %s467
      %p479 = scmp.eq.s32.totalorder %s53, 1
      %p480 = por %p478, %p479
      %p482 = scmp.ne.s32.totalorder %s467, %s481
      %p483 = scmp.eq.s32.totalorder %s53, 0
      %p484 = por %p482, %p483
      %s486 = sadd.s32 %s485, 1
      %p489 = scmp.eq.s32.totalorder %s47, 1
      %p490 = scmp.ne.s32.totalorder %s485, %s487
      %p491 = scmp.eq.s32.totalorder %s47, 0
      %p492 = por %p490, %p491
      %p493 = scmp.ne.s32.totalorder %s485, %s487
      %p494 = scmp.eq.s32.totalorder %s52, 1
      %p495 = por %p493, %p494
      %p496 = scmp.ne.s32.totalorder %s487, %s488
      %p497 = scmp.eq.s32.totalorder %s52, 0
      %p498 = por %p496, %p497
      %p499 = scmp.ne.s32.totalorder %s487, %s488
      %p500 = scmp.eq.s32.totalorder %s53, 1
      %p501 = por %p499, %p500
      %p503 = scmp.ne.s32.totalorder %s488, %s502
      %p504 = scmp.eq.s32.totalorder %s53, 0
      %p505 = por %p503, %p504
      %s507 = sadd.s32 %s506, 1
      %p510 = scmp.eq.s32.totalorder %s47, 1
      %p511 = scmp.ne.s32.totalorder %s506, %s508
      %p512 = scmp.eq.s32.totalorder %s47, 0
      %p513 = por %p511, %p512
      %p514 = scmp.ne.s32.totalorder %s506, %s508
      %p515 = scmp.eq.s32.totalorder %s52, 1
      %p516 = por %p514, %p515
      %p517 = scmp.ne.s32.totalorder %s508, %s509
      %p518 = scmp.eq.s32.totalorder %s52, 0
      %p519 = por %p517, %p518
      %p520 = scmp.ne.s32.totalorder %s508, %s509
      %p521 = scmp.eq.s32.totalorder %s53, 1
      %p522 = por %p520, %p521
      %p524 = scmp.ne.s32.totalorder %s509, %s523
      %p525 = scmp.eq.s32.totalorder %s53, 0
      %p526 = por %p524, %p525
      %s527 = ssub.s32 %s47, %s54
      %p528 = scmp.eq.s32.totalorder %s527, 0
      %s530 = sadd.s32 %s529, 1
      %s531 = scalar_select %p528, %s529, %s530
      %p534 = pneg %p528
      %p535 = scmp.eq.s32.totalorder %s47, 1
      %p536 = por %p534, %p535
      %p537 = scmp.ne.s32.totalorder %s529, %s532
      %p538 = scmp.eq.s32.totalorder %s47, 0
      %p539 = por %p537, %p538
      %p540 = scmp.ne.s32.totalorder %s529, %s532
      %p541 = scmp.eq.s32.totalorder %s52, 1
      %p542 = por %p540, %p541
      %p543 = scmp.ne.s32.totalorder %s532, %s533
      %p544 = scmp.eq.s32.totalorder %s52, 0
      %p545 = por %p543, %p544
      %p546 = scmp.ne.s32.totalorder %s532, %s533
      %p547 = scmp.eq.s32.totalorder %s53, 1
      %p548 = por %p546, %p547
      %p550 = scmp.ne.s32.totalorder %s533, %s549
      %p551 = scmp.eq.s32.totalorder %s53, 0
      %p552 = por %p550, %p551
      %p553 = scmp.le.s32.totalorder 1, %s47
      %p554 = scmp.lt.s32.totalorder %s47, 3
      %p555 = pnand %p553, %p554
      %p556 = pneg %p555
      // Predicated region
      $region9: #{tpu_custom_call.1} parent=5 // pred_check
        _
      $region10: #{tpu_custom_call.1} parent=5 // pred_check_branch
        %558 = sbr.rel (%p555) target = $region12
      $region11: #{tpu_custom_call.1} parent=5 // pred_region
        %s559 = ssub.s32 %s47, 1
        // Predicated region
        $region13: #{tpu_custom_call.1} parent=11 // pred_check
          %p560 = pneg %p120
        $region14: #{tpu_custom_call.1} parent=11 // pred_check_branch
          %562 = sbr.rel (%p560) target = $region16
        $region15: #{tpu_custom_call.1} parent=11 // pred_region
          %s564 = ssub.s32 3072, 3072
          %565 = vsyncadd [#allocation6], %s564
          %s566 = sshll.u32 [#allocation7], 4
          %s567 = int_to_ptr.vmem [resolvable:$true] %s566
          %572 = dma.hbm_to_vmem [thread:$0]  %s2, 3072, %s567, [#allocation6], 192, 192, 12
        $region16: #{tpu_custom_call.1} parent=11 // pred_fallthru
          _
        // Predicated region
        $region17: #{tpu_custom_call.1} parent=11 // pred_check
          %p573 = pneg %p141
        $region18: #{tpu_custom_call.1} parent=11 // pred_check_branch
          %575 = sbr.rel (%p573) target = $region20
        $region19: #{tpu_custom_call.1} parent=11 // pred_region
          %s577 = ssub.s32 48, 48
          %578 = vsyncadd [#allocation9], %s577
          %s580 = sshll.u32 [#allocation8], 4
          %s581 = int_to_ptr.vmem [resolvable:$true] %s580
          %583 = dma.hbm_to_vmem [thread:$0]  %s3, 48, %s581, [#allocation9]
        $region20: #{tpu_custom_call.1} parent=11 // pred_fallthru
          _
        // Predicated region
        $region21: #{tpu_custom_call.1} parent=11 // pred_check
          %p584 = pneg %p162
        $region22: #{tpu_custom_call.1} parent=11 // pred_check_branch
          %586 = sbr.rel (%p584) target = $region24
        $region23: #{tpu_custom_call.1} parent=11 // pred_region
          %s588 = ssub.s32 1024, 1024
          %589 = vsyncadd [#allocation9], %s588
          %s590 = sshll.u32 [#allocation10], 4
          %s591 = int_to_ptr.vmem [resolvable:$true] %s590
          %596 = dma.hbm_to_vmem [thread:$0]  %s4, 1024, %s591, [#allocation9], 64, 64, 4
        $region24: #{tpu_custom_call.1} parent=11 // pred_fallthru
          _
        // Predicated region
        $region25: #{tpu_custom_call.1} parent=11 // pred_check
          %p597 = pneg %p183
        $region26: #{tpu_custom_call.1} parent=11 // pred_check_branch
          %599 = sbr.rel (%p597) target = $region28
        $region27: #{tpu_custom_call.1} parent=11 // pred_region
          %s601 = ssub.s32 16, 16
          %602 = vsyncadd [#allocation12], %s601
          %s604 = sshll.u32 [#allocation11], 4
          %s605 = int_to_ptr.vmem [resolvable:$true] %s604
          %607 = dma.hbm_to_vmem [thread:$0]  %s5, 16, %s605, [#allocation12]
        $region28: #{tpu_custom_call.1} parent=11 // pred_fallthru
          _
        // Predicated region
        $region29: #{tpu_custom_call.1} parent=11 // pred_check
          %p608 = pneg %p204
        $region30: #{tpu_custom_call.1} parent=11 // pred_check_branch
          %610 = sbr.rel (%p608) target = $region32
        $region31: #{tpu_custom_call.1} parent=11 // pred_region
          %s612 = ssub.s32 16, 16
          %613 = vsyncadd [#allocation12], %s612
          %s615 = sshll.u32 [#allocation13], 4
          %s616 = int_to_ptr.vmem [resolvable:$true] %s615
          %618 = dma.hbm_to_vmem [thread:$0]  %s6, 16, %s616, [#allocation12]
        $region32: #{tpu_custom_call.1} parent=11 // pred_fallthru
          _
        // Predicated region
        $region33: #{tpu_custom_call.1} parent=11 // pred_check
          %p619 = pneg %p225
        $region34: #{tpu_custom_call.1} parent=11 // pred_check_branch
          %621 = sbr.rel (%p619) target = $region36
        $region35: #{tpu_custom_call.1} parent=11 // pred_region
          %s623 = ssub.s32 16, 16
          %624 = vsyncadd [#allocation15], %s623
          %s626 = sshll.u32 [#allocation14], 4
          %s627 = int_to_ptr.vmem [resolvable:$true] %s626
          %629 = dma.hbm_to_vmem [thread:$0]  %s7, 16, %s627, [#allocation15]
        $region36: #{tpu_custom_call.1} parent=11 // pred_fallthru
          _
        // Predicated region
        $region37: #{tpu_custom_call.1} parent=11 // pred_check
          %p630 = pneg %p246
        $region38: #{tpu_custom_call.1} parent=11 // pred_check_branch
          %632 = sbr.rel (%p630) target = $region40
        $region39: #{tpu_custom_call.1} parent=11 // pred_region
          %s634 = ssub.s32 1024, 1024
          %635 = vsyncadd [#allocation15], %s634
          %s636 = sshll.u32 [#allocation16], 4
          %s637 = int_to_ptr.vmem [resolvable:$true] %s636
          %642 = dma.hbm_to_vmem [thread:$0]  %s8, 1024, %s637, [#allocation15], 64, 64, 4
        $region40: #{tpu_custom_call.1} parent=11 // pred_fallthru
          _
        // Predicated region
        $region41: #{tpu_custom_call.1} parent=11 // pred_check
          %p643 = pneg %p267
        $region42: #{tpu_custom_call.1} parent=11 // pred_check_branch
          %645 = sbr.rel (%p643) target = $region44
        $region43: #{tpu_custom_call.1} parent=11 // pred_region
          %s647 = ssub.s32 16, 16
          %648 = vsyncadd [#allocation18], %s647
          %s650 = sshll.u32 [#allocation17], 4
          %s651 = int_to_ptr.vmem [resolvable:$true] %s650
          %653 = dma.hbm_to_vmem [thread:$0]  %s9, 16, %s651, [#allocation18]
        $region44: #{tpu_custom_call.1} parent=11 // pred_fallthru
          _
        // Predicated region
        $region45: #{tpu_custom_call.1} parent=11 // pred_check
          %p654 = pneg %p288
        $region46: #{tpu_custom_call.1} parent=11 // pred_check_branch
          %656 = sbr.rel (%p654) target = $region48
        $region47: #{tpu_custom_call.1} parent=11 // pred_region
          %s658 = ssub.s32 2048, 2048
          %659 = vsyncadd [#allocation18], %s658
          %s660 = sshll.u32 [#allocation19], 4
          %s661 = int_to_ptr.vmem [resolvable:$true] %s660
          %666 = dma.hbm_to_vmem [thread:$0]  %s10, 2048, %s661, [#allocation18], 128, 128, 8
        $region48: #{tpu_custom_call.1} parent=11 // pred_fallthru
          _
        // Predicated region
        $region49: #{tpu_custom_call.1} parent=11 // pred_check
          %p667 = pneg %p309
        $region50: #{tpu_custom_call.1} parent=11 // pred_check_branch
          %669 = sbr.rel (%p667) target = $region52
        $region51: #{tpu_custom_call.1} parent=11 // pred_region
          %s671 = ssub.s32 32, 32
          %672 = vsyncadd [#allocation21], %s671
          %s674 = sshll.u32 [#allocation20], 4
          %s675 = int_to_ptr.vmem [resolvable:$true] %s674
          %677 = dma.hbm_to_vmem [thread:$0]  %s11, 32, %s675, [#allocation21]
        $region52: #{tpu_custom_call.1} parent=11 // pred_fallthru
          _
        // Predicated region
        $region53: #{tpu_custom_call.1} parent=11 // pred_check
          %p678 = pneg %p330
        $region54: #{tpu_custom_call.1} parent=11 // pred_check_branch
          %680 = sbr.rel (%p678) target = $region56
        $region55: #{tpu_custom_call.1} parent=11 // pred_region
          %s682 = ssub.s32 1024, 1024
          %683 = vsyncadd [#allocation21], %s682
          %s684 = sshll.u32 [#allocation22], 4
          %s685 = int_to_ptr.vmem [resolvable:$true] %s684
          %690 = dma.hbm_to_vmem [thread:$0]  %s12, 1024, %s685, [#allocation21], 64, 64, 4
        $region56: #{tpu_custom_call.1} parent=11 // pred_fallthru
          _
        // Predicated region
        $region57: #{tpu_custom_call.1} parent=11 // pred_check
          %p691 = pneg %p351
        $region58: #{tpu_custom_call.1} parent=11 // pred_check_branch
          %693 = sbr.rel (%p691) target = $region60
        $region59: #{tpu_custom_call.1} parent=11 // pred_region
          %s695 = ssub.s32 16, 16
          %696 = vsyncadd [#allocation24], %s695
          %s698 = sshll.u32 [#allocation23], 4
          %s699 = int_to_ptr.vmem [resolvable:$true] %s698
          %701 = dma.hbm_to_vmem [thread:$0]  %s13, 16, %s699, [#allocation24]
        $region60: #{tpu_custom_call.1} parent=11 // pred_fallthru
          _
        // Predicated region
        $region61: #{tpu_custom_call.1} parent=11 // pred_check
          %p702 = pneg %p372
        $region62: #{tpu_custom_call.1} parent=11 // pred_check_branch
          %704 = sbr.rel (%p702) target = $region64
        $region63: #{tpu_custom_call.1} parent=11 // pred_region
          %s706 = ssub.s32 16, 16
          %707 = vsyncadd [#allocation24], %s706
          %s709 = sshll.u32 [#allocation25], 4
          %s710 = int_to_ptr.vmem [resolvable:$true] %s709
          %712 = dma.hbm_to_vmem [thread:$0]  %s14, 16, %s710, [#allocation24]
        $region64: #{tpu_custom_call.1} parent=11 // pred_fallthru
          _
        // Predicated region
        $region65: #{tpu_custom_call.1} parent=11 // pred_check
          %p713 = pneg %p393
        $region66: #{tpu_custom_call.1} parent=11 // pred_check_branch
          %715 = sbr.rel (%p713) target = $region68
        $region67: #{tpu_custom_call.1} parent=11 // pred_region
          %s717 = ssub.s32 16, 16
          %718 = vsyncadd [#allocation27], %s717
          %s720 = sshll.u32 [#allocation26], 4
          %s721 = int_to_ptr.vmem [resolvable:$true] %s720
          %723 = dma.hbm_to_vmem [thread:$0]  %s15, 16, %s721, [#allocation27]
        $region68: #{tpu_custom_call.1} parent=11 // pred_fallthru
          _
        // Predicated region
        $region69: #{tpu_custom_call.1} parent=11 // pred_check
          %p724 = pneg %p414
        $region70: #{tpu_custom_call.1} parent=11 // pred_check_branch
          %726 = sbr.rel (%p724) target = $region72
        $region71: #{tpu_custom_call.1} parent=11 // pred_region
          %s728 = ssub.s32 2048, 2048
          %729 = vsyncadd [#allocation27], %s728
          %s730 = sshll.u32 [#allocation28], 4
          %s731 = int_to_ptr.vmem [resolvable:$true] %s730
          %736 = dma.hbm_to_vmem [thread:$0]  %s16, 2048, %s731, [#allocation27], 128, 128, 8
        $region72: #{tpu_custom_call.1} parent=11 // pred_fallthru
          _
        // Predicated region
        $region73: #{tpu_custom_call.1} parent=11 // pred_check
          %p737 = pneg %p435
        $region74: #{tpu_custom_call.1} parent=11 // pred_check_branch
          %739 = sbr.rel (%p737) target = $region76
        $region75: #{tpu_custom_call.1} parent=11 // pred_region
          %s741 = ssub.s32 32, 32
          %742 = vsyncadd [#allocation30], %s741
          %s744 = sshll.u32 [#allocation29], 4
          %s745 = int_to_ptr.vmem [resolvable:$true] %s744
          %747 = dma.hbm_to_vmem [thread:$0]  %s17, 32, %s745, [#allocation30]
        $region76: #{tpu_custom_call.1} parent=11 // pred_fallthru
          _
        // Predicated region
        $region77: #{tpu_custom_call.1} parent=11 // pred_check
          %p748 = pneg %p456
        $region78: #{tpu_custom_call.1} parent=11 // pred_check_branch
          %750 = sbr.rel (%p748) target = $region80
        $region79: #{tpu_custom_call.1} parent=11 // pred_region
          %s752 = ssub.s32 2048, 2048
          %753 = vsyncadd [#allocation30], %s752
          %s754 = sshll.u32 [#allocation31], 4
          %s755 = int_to_ptr.vmem [resolvable:$true] %s754
          %760 = dma.hbm_to_vmem [thread:$0]  %s18, 2048, %s755, [#allocation30], 64, 64, 4
        $region80: #{tpu_custom_call.1} parent=11 // pred_fallthru
          _
        // Predicated region
        $region81: #{tpu_custom_call.1} parent=11 // pred_check
          %p761 = pneg %p477
        $region82: #{tpu_custom_call.1} parent=11 // pred_check_branch
          %763 = sbr.rel (%p761) target = $region84
        $region83: #{tpu_custom_call.1} parent=11 // pred_region
          %s765 = ssub.s32 16, 16
          %766 = vsyncadd [#allocation33], %s765
          %s768 = sshll.u32 [#allocation32], 4
          %s769 = int_to_ptr.vmem [resolvable:$true] %s768
          %771 = dma.hbm_to_vmem [thread:$0]  %s19, 16, %s769, [#allocation33]
        $region84: #{tpu_custom_call.1} parent=11 // pred_fallthru
          _
        // Predicated region
        $region85: #{tpu_custom_call.1} parent=11 // pred_check
          %p772 = pneg %p498
        $region86: #{tpu_custom_call.1} parent=11 // pred_check_branch
          %774 = sbr.rel (%p772) target = $region88
        $region87: #{tpu_custom_call.1} parent=11 // pred_region
          %s776 = ssub.s32 16, 16
          %777 = vsyncadd [#allocation33], %s776
          %s779 = sshll.u32 [#allocation34], 4
          %s780 = int_to_ptr.vmem [resolvable:$true] %s779
          %782 = dma.hbm_to_vmem [thread:$0]  %s20, 16, %s780, [#allocation33]
        $region88: #{tpu_custom_call.1} parent=11 // pred_fallthru
          _
        // Predicated region
        $region89: #{tpu_custom_call.1} parent=11 // pred_check
          %p783 = pneg %p519
        $region90: #{tpu_custom_call.1} parent=11 // pred_check_branch
          %785 = sbr.rel (%p783) target = $region92
        $region91: #{tpu_custom_call.1} parent=11 // pred_region
          %s787 = ssub.s32 16, 16
          %788 = vsyncadd [#allocation36], %s787
          %s790 = sshll.u32 [#allocation35], 4
          %s791 = int_to_ptr.vmem [resolvable:$true] %s790
          %793 = dma.hbm_to_vmem [thread:$0]  %s21, 16, %s791, [#allocation36]
        $region92: #{tpu_custom_call.1} parent=11 // pred_fallthru
          _
      $region12: #{tpu_custom_call.1} parent=5 // pred_fallthru
        _
      %p794 = scmp.lt.s32.totalorder %s47, 2
      // Predicated region
      $region93: #{tpu_custom_call.1} parent=5 // pred_check
        %p795 = pneg %p794
      $region94: #{tpu_custom_call.1} parent=5 // pred_check_branch
        %797 = sbr.rel (%p795) target = $region96
      $region95: #{tpu_custom_call.1} parent=5 // pred_region
        // Predicated region
        $region97: #{tpu_custom_call.1} parent=95 // pred_check
          %p798 = pneg %p67
        $region98: #{tpu_custom_call.1} parent=95 // pred_check_branch
          %800 = sbr.rel (%p798) target = $region100
        $region99: #{tpu_custom_call.1} parent=95 // pred_region
          %s801 = sand.u32 %s57, 1
          %s802 = scalar_lea.sflag [#allocation3], %s801
          %s803 = sand.u32 %s57, 1
          %s804 = smul.addr %s803, 8
          %s805 = scalar_lea.vmem [#allocation2], %s804
          %s807 = ssub.s32 128, 128
          %808 = vsyncadd %s802, %s807
          %s809 = smul.addr %s47, 128
          %s810 = scalar_lea.hbm %s0, %s809
          %s812 = sshll.u32 %s805, 4
          %s813 = int_to_ptr.vmem [resolvable:$true] %s812
          %815 = dma.hbm_to_vmem [thread:$0]  %s810, 128, %s813, %s802
        $region100: #{tpu_custom_call.1} parent=95 // pred_fallthru
          _
        // Predicated region
        $region101: #{tpu_custom_call.1} parent=95 // pred_check
          %p816 = pneg %p93
        $region102: #{tpu_custom_call.1} parent=95 // pred_check_branch
          %818 = sbr.rel (%p816) target = $region104
        $region103: #{tpu_custom_call.1} parent=95 // pred_region
          %s819 = sand.u32 %s47, 1
          %s820 = scalar_lea.sflag [#allocation6], %s819
          %s821 = sand.u32 %s83, 1
          %s822 = smul.addr %s821, 16
          %s823 = scalar_lea.vmem [#allocation5], %s822
          %s825 = ssub.s32 256, 256
          %826 = vsyncadd %s820, %s825
          %s827 = smul.addr %s47, 2
          %s828 = smul.addr %s827, 128
          %s829 = scalar_lea.hbm %s1, %s828
          %s830 = sshll.u32 %s823, 4
          %s831 = int_to_ptr.vmem [resolvable:$true] %s830
          %836 = dma.hbm_to_vmem [thread:$0]  %s829, 256, %s831, %s820, 128, 128, 8
        $region104: #{tpu_custom_call.1} parent=95 // pred_fallthru
          _
      $region96: #{tpu_custom_call.1} parent=5 // pred_fallthru
        _
      %p837 = scmp.le.s32.totalorder 1, %s47
      %p838 = scmp.lt.s32.totalorder %s47, 3
      %p839 = pnand %p837, %p838
      %p840 = pneg %p839
      // Predicated region
      $region105: #{tpu_custom_call.1} parent=5 // pred_check
        _
      $region106: #{tpu_custom_call.1} parent=5 // pred_check_branch
        %842 = sbr.rel (%p839) target = $region108
      $region107: #{tpu_custom_call.1} parent=5 // pred_region
        %s843 = ssub.s32 %s47, 1
        %s844 = sand.u32 %s60, 1
        %s845 = scalar_lea.sflag [#allocation3], %s844
        %s846 = sand.u32 %s60, 1
        %s847 = smul.addr %s846, 8
        %s848 = scalar_lea.vmem [#allocation2], %s847
        // Predicated region
        $region109: #{tpu_custom_call.1} parent=107 // pred_check
          %p849 = pneg %p73
        $region110: #{tpu_custom_call.1} parent=107 // pred_check_branch
          %851 = sbr.rel (%p849) target = $region112
        $region111: #{tpu_custom_call.1} parent=107 // pred_region
          %852 = dma.done %s845, 128
        $region112: #{tpu_custom_call.1} parent=107 // pred_fallthru
          _
        %s853 = sand.u32 %s52, 1
        %s854 = scalar_lea.sflag [#allocation6], %s853
        %s855 = sand.u32 %s86, 1
        %s856 = smul.addr %s855, 16
        %s857 = scalar_lea.vmem [#allocation5], %s856
        // Predicated region
        $region113: #{tpu_custom_call.1} parent=107 // pred_check
          %p858 = pneg %p99
        $region114: #{tpu_custom_call.1} parent=107 // pred_check_branch
          %860 = sbr.rel (%p858) target = $region116
        $region115: #{tpu_custom_call.1} parent=107 // pred_region
          %861 = dma.done %s854, 256
        $region116: #{tpu_custom_call.1} parent=107 // pred_fallthru
          _
        // Predicated region
        $region117: #{tpu_custom_call.1} parent=107 // pred_check
          %p862 = pneg %p120
        $region118: #{tpu_custom_call.1} parent=107 // pred_check_branch
          %864 = sbr.rel (%p862) target = $region120
        $region119: #{tpu_custom_call.1} parent=107 // pred_region
          %865 = dma.done [#allocation6], 3072
        $region120: #{tpu_custom_call.1} parent=107 // pred_fallthru
          _
        // Predicated region
        $region121: #{tpu_custom_call.1} parent=107 // pred_check
          %p866 = pneg %p141
        $region122: #{tpu_custom_call.1} parent=107 // pred_check_branch
          %868 = sbr.rel (%p866) target = $region124
        $region123: #{tpu_custom_call.1} parent=107 // pred_region
          %869 = dma.done [#allocation9], 48
        $region124: #{tpu_custom_call.1} parent=107 // pred_fallthru
          _
        // Predicated region
        $region125: #{tpu_custom_call.1} parent=107 // pred_check
          %p870 = pneg %p162
        $region126: #{tpu_custom_call.1} parent=107 // pred_check_branch
          %872 = sbr.rel (%p870) target = $region128
        $region127: #{tpu_custom_call.1} parent=107 // pred_region
          %873 = dma.done [#allocation9], 1024
        $region128: #{tpu_custom_call.1} parent=107 // pred_fallthru
          _
        // Predicated region
        $region129: #{tpu_custom_call.1} parent=107 // pred_check
          %p874 = pneg %p183
        $region130: #{tpu_custom_call.1} parent=107 // pred_check_branch
          %876 = sbr.rel (%p874) target = $region132
        $region131: #{tpu_custom_call.1} parent=107 // pred_region
          %877 = dma.done [#allocation12], 16
        $region132: #{tpu_custom_call.1} parent=107 // pred_fallthru
          _
        // Predicated region
        $region133: #{tpu_custom_call.1} parent=107 // pred_check
          %p878 = pneg %p204
        $region134: #{tpu_custom_call.1} parent=107 // pred_check_branch
          %880 = sbr.rel (%p878) target = $region136
        $region135: #{tpu_custom_call.1} parent=107 // pred_region
          %881 = dma.done [#allocation12], 16
        $region136: #{tpu_custom_call.1} parent=107 // pred_fallthru
          _
        // Predicated region
        $region137: #{tpu_custom_call.1} parent=107 // pred_check
          %p882 = pneg %p225
        $region138: #{tpu_custom_call.1} parent=107 // pred_check_branch
          %884 = sbr.rel (%p882) target = $region140
        $region139: #{tpu_custom_call.1} parent=107 // pred_region
          %885 = dma.done [#allocation15], 16
        $region140: #{tpu_custom_call.1} parent=107 // pred_fallthru
          _
        // Predicated region
        $region141: #{tpu_custom_call.1} parent=107 // pred_check
          %p886 = pneg %p246
        $region142: #{tpu_custom_call.1} parent=107 // pred_check_branch
          %888 = sbr.rel (%p886) target = $region144
        $region143: #{tpu_custom_call.1} parent=107 // pred_region
          %889 = dma.done [#allocation15], 1024
        $region144: #{tpu_custom_call.1} parent=107 // pred_fallthru
          _
        // Predicated region
        $region145: #{tpu_custom_call.1} parent=107 // pred_check
          %p890 = pneg %p267
        $region146: #{tpu_custom_call.1} parent=107 // pred_check_branch
          %892 = sbr.rel (%p890) target = $region148
        $region147: #{tpu_custom_call.1} parent=107 // pred_region
          %893 = dma.done [#allocation18], 16
        $region148: #{tpu_custom_call.1} parent=107 // pred_fallthru
          _
        // Predicated region
        $region149: #{tpu_custom_call.1} parent=107 // pred_check
          %p894 = pneg %p288
        $region150: #{tpu_custom_call.1} parent=107 // pred_check_branch
          %896 = sbr.rel (%p894) target = $region152
        $region151: #{tpu_custom_call.1} parent=107 // pred_region
          %897 = dma.done [#allocation18], 2048
        $region152: #{tpu_custom_call.1} parent=107 // pred_fallthru
          _
        // Predicated region
        $region153: #{tpu_custom_call.1} parent=107 // pred_check
          %p898 = pneg %p309
        $region154: #{tpu_custom_call.1} parent=107 // pred_check_branch
          %900 = sbr.rel (%p898) target = $region156
        $region155: #{tpu_custom_call.1} parent=107 // pred_region
          %901 = dma.done [#allocation21], 32
        $region156: #{tpu_custom_call.1} parent=107 // pred_fallthru
          _
        // Predicated region
        $region157: #{tpu_custom_call.1} parent=107 // pred_check
          %p902 = pneg %p330
        $region158: #{tpu_custom_call.1} parent=107 // pred_check_branch
          %904 = sbr.rel (%p902) target = $region160
        $region159: #{tpu_custom_call.1} parent=107 // pred_region
          %905 = dma.done [#allocation21], 1024
        $region160: #{tpu_custom_call.1} parent=107 // pred_fallthru
          _
        // Predicated region
        $region161: #{tpu_custom_call.1} parent=107 // pred_check
          %p906 = pneg %p351
        $region162: #{tpu_custom_call.1} parent=107 // pred_check_branch
          %908 = sbr.rel (%p906) target = $region164
        $region163: #{tpu_custom_call.1} parent=107 // pred_region
          %909 = dma.done [#allocation24], 16
        $region164: #{tpu_custom_call.1} parent=107 // pred_fallthru
          _
        // Predicated region
        $region165: #{tpu_custom_call.1} parent=107 // pred_check
          %p910 = pneg %p372
        $region166: #{tpu_custom_call.1} parent=107 // pred_check_branch
          %912 = sbr.rel (%p910) target = $region168
        $region167: #{tpu_custom_call.1} parent=107 // pred_region
          %913 = dma.done [#allocation24], 16
        $region168: #{tpu_custom_call.1} parent=107 // pred_fallthru
          _
        // Predicated region
        $region169: #{tpu_custom_call.1} parent=107 // pred_check
          %p914 = pneg %p393
        $region170: #{tpu_custom_call.1} parent=107 // pred_check_branch
          %916 = sbr.rel (%p914) target = $region172
        $region171: #{tpu_custom_call.1} parent=107 // pred_region
          %917 = dma.done [#allocation27], 16
        $region172: #{tpu_custom_call.1} parent=107 // pred_fallthru
          _
        // Predicated region
        $region173: #{tpu_custom_call.1} parent=107 // pred_check
          %p918 = pneg %p414
        $region174: #{tpu_custom_call.1} parent=107 // pred_check_branch
          %920 = sbr.rel (%p918) target = $region176
        $region175: #{tpu_custom_call.1} parent=107 // pred_region
          %921 = dma.done [#allocation27], 2048
        $region176: #{tpu_custom_call.1} parent=107 // pred_fallthru
          _
        // Predicated region
        $region177: #{tpu_custom_call.1} parent=107 // pred_check
          %p922 = pneg %p435
        $region178: #{tpu_custom_call.1} parent=107 // pred_check_branch
          %924 = sbr.rel (%p922) target = $region180
        $region179: #{tpu_custom_call.1} parent=107 // pred_region
          %925 = dma.done [#allocation30], 32
        $region180: #{tpu_custom_call.1} parent=107 // pred_fallthru
          _
        // Predicated region
        $region181: #{tpu_custom_call.1} parent=107 // pred_check
          %p926 = pneg %p456
        $region182: #{tpu_custom_call.1} parent=107 // pred_check_branch
          %928 = sbr.rel (%p926) target = $region184
        $region183: #{tpu_custom_call.1} parent=107 // pred_region
          %929 = dma.done [#allocation30], 2048
        $region184: #{tpu_custom_call.1} parent=107 // pred_fallthru
          _
        // Predicated region
        $region185: #{tpu_custom_call.1} parent=107 // pred_check
          %p930 = pneg %p477
        $region186: #{tpu_custom_call.1} parent=107 // pred_check_branch
          %932 = sbr.rel (%p930) target = $region188
        $region187: #{tpu_custom_call.1} parent=107 // pred_region
          %933 = dma.done [#allocation33], 16
        $region188: #{tpu_custom_call.1} parent=107 // pred_fallthru
          _
        // Predicated region
        $region189: #{tpu_custom_call.1} parent=107 // pred_check
          %p934 = pneg %p498
        $region190: #{tpu_custom_call.1} parent=107 // pred_check_branch
          %936 = sbr.rel (%p934) target = $region192
        $region191: #{tpu_custom_call.1} parent=107 // pred_region
          %937 = dma.done [#allocation33], 16
        $region192: #{tpu_custom_call.1} parent=107 // pred_fallthru
          _
        // Predicated region
        $region193: #{tpu_custom_call.1} parent=107 // pred_check
          %p938 = pneg %p519
        $region194: #{tpu_custom_call.1} parent=107 // pred_check_branch
          %940 = sbr.rel (%p938) target = $region196
        $region195: #{tpu_custom_call.1} parent=107 // pred_region
          %941 = dma.done [#allocation36], 16
        $region196: #{tpu_custom_call.1} parent=107 // pred_fallthru
          _
        %s942 = sand.u32 %s60, 1
        %s943 = scalar_lea.sflag [#allocation3], %s942
        %s944 = sand.u32 %s60, 1
        %s945 = smul.addr %s944, 8
        %s946 = scalar_lea.vmem [#allocation2], %s945
        %p947 = pneg %p73
        %p948 = pneg %p70
        %s949 = sand.u32 %s52, 1
        %s950 = scalar_lea.sflag [#allocation6], %s949
        %s951 = sand.u32 %s86, 1
        %s952 = smul.addr %s951, 16
        %s953 = scalar_lea.vmem [#allocation5], %s952
        %p954 = pneg %p99
        %p955 = pneg %p96
        %p956 = pneg %p120
        %p957 = pneg %p117
        %p958 = pneg %p141
        %p959 = pneg %p138
        %p960 = pneg %p162
        %p961 = pneg %p159
        %p962 = pneg %p183
        %p963 = pneg %p180
        %p964 = pneg %p204
        %p965 = pneg %p201
        %p966 = pneg %p225
        %p967 = pneg %p222
        %p968 = pneg %p246
        %p969 = pneg %p243
        %p970 = pneg %p267
        %p971 = pneg %p264
        %p972 = pneg %p288
        %p973 = pneg %p285
        %p974 = pneg %p309
        %p975 = pneg %p306
        %p976 = pneg %p330
        %p977 = pneg %p327
        %p978 = pneg %p351
        %p979 = pneg %p348
        %p980 = pneg %p372
        %p981 = pneg %p369
        %p982 = pneg %p393
        %p983 = pneg %p390
        %p984 = pneg %p414
        %p985 = pneg %p411
        %p986 = pneg %p435
        %p987 = pneg %p432
        %p988 = pneg %p456
        %p989 = pneg %p453
        %p990 = pneg %p477
        %p991 = pneg %p474
        %p992 = pneg %p498
        %p993 = pneg %p495
        %p994 = pneg %p519
        %p995 = pneg %p516
        %p996 = pneg %p545
        %p997 = pneg %p542
        %s998 = sand.u32 %s532, 1
        %s999 = scalar_lea.sflag [#allocation4], %s998
        %s1000 = sand.u32 %s532, 1
        %s1001 = smul.addr %s1000, 8
        %s1002 = scalar_lea.vmem [#allocation37], %s1001
        %v1004 = vld [vmem:[%s848] sm:$0xff]
        %v1005 = vld [vmem:[%s857] sm:$0xff]
        %v1006 = vld [vmem:[%s857 + $0x8] sm:$0xff]
        %v1007 = vpack.c.bf16 %v1006, %v1005
        %v1008 = vpack.c.bf16 %v1004, %v1004
        %v1009 = vld [vmem:[#allocation7] sm:$0xff]
        %v1010 = vld [vmem:[#allocation7 + $0x8] sm:$0xf]
        %v1011 = vld [vmem:[#allocation7 + $0xc] sm:$0xff]
        %v1012 = vld [vmem:[#allocation7 + $0x14] sm:$0xf]
        %v1013 = vld [vmem:[#allocation7 + $0x18] sm:$0xff]
        %v1014 = vld [vmem:[#allocation7 + $0x20] sm:$0xf]
        %v1015 = vld [vmem:[#allocation7 + $0x24] sm:$0xff]
        %v1016 = vld [vmem:[#allocation7 + $0x2c] sm:$0xf]
        %v1017 = vld [vmem:[#allocation7 + $0x30] sm:$0xff]
        %v1018 = vld [vmem:[#allocation7 + $0x38] sm:$0xf]
        %v1019 = vld [vmem:[#allocation7 + $0x3c] sm:$0xff]
        %v1020 = vld [vmem:[#allocation7 + $0x44] sm:$0xf]
        %v1021 = vld [vmem:[#allocation7 + $0x48] sm:$0xff]
        %v1022 = vld [vmem:[#allocation7 + $0x50] sm:$0xf]
        %v1023 = vld [vmem:[#allocation7 + $0x54] sm:$0xff]
        %v1024 = vld [vmem:[#allocation7 + $0x5c] sm:$0xf]
        %v1025 = vld [vmem:[#allocation7 + $0x60] sm:$0xff]
        %v1026 = vld [vmem:[#allocation7 + $0x68] sm:$0xf]
        %v1027 = vld [vmem:[#allocation7 + $0x6c] sm:$0xff]
        %v1028 = vld [vmem:[#allocation7 + $0x74] sm:$0xf]
        %v1029 = vld [vmem:[#allocation7 + $0x78] sm:$0xff]
        %v1030 = vld [vmem:[#allocation7 + $0x80] sm:$0xf]
        %v1031 = vld [vmem:[#allocation7 + $0x84] sm:$0xff]
        %v1032 = vld [vmem:[#allocation7 + $0x8c] sm:$0xf]
        %v1033 = vld [vmem:[#allocation7 + $0x90] sm:$0xff]
        %v1034 = vld [vmem:[#allocation7 + $0x98] sm:$0xf]
        %v1035 = vld [vmem:[#allocation7 + $0x9c] sm:$0xff]
        %v1036 = vld [vmem:[#allocation7 + $0xa4] sm:$0xf]
        %v1037 = vld [vmem:[#allocation7 + $0xa8] sm:$0xff]
        %v1038 = vld [vmem:[#allocation7 + $0xb0] sm:$0xf]
        %v1039 = vld [vmem:[#allocation7 + $0xb4] sm:$0xff]
        %v1040 = vld [vmem:[#allocation7 + $0xbc] sm:$0xf]
        %v1041 = vld [vmem:[#allocation8] sm:$0x7]
        %v1043 = vlaneseq
        %v1044 = vshrl.u32 %v1043, 7
        %v1045 = vsub.s32 0, %v1044
        %v1046 = vrot.slane %v1041, %v1045
        %v1047 = vlaneseq
        %v1048 = vshrl.u32 %v1047, 7
        %v1049 = vsub.s32 1, %v1048
        %v1050 = vrot.slane %v1041, %v1049
        %v1051 = vlaneseq
        %v1052 = vshrl.u32 %v1051, 7
        %v1053 = vsub.s32 2, %v1052
        %v1054 = vrot.slane %v1041, %v1053
        %v1090 = vunpack.c.l.b16 %v1009
        %v1091 = vunpack.c.h.b16 %v1009
        %v1092 = vunpack.c.l.b16 %v1010
        %v1093 = vunpack.c.l.b16 %v1011
        %v1094 = vunpack.c.h.b16 %v1011
        %v1095 = vunpack.c.l.b16 %v1012
        %v1096 = vunpack.c.l.b16 %v1013
        %v1097 = vunpack.c.h.b16 %v1013
        %v1098 = vunpack.c.l.b16 %v1014
        %v1099 = vunpack.c.l.b16 %v1015
        %v1100 = vunpack.c.h.b16 %v1015
        %v1101 = vunpack.c.l.b16 %v1016
        %v1102 = vunpack.c.l.b16 %v1017
        %v1103 = vunpack.c.h.b16 %v1017
        %v1104 = vunpack.c.l.b16 %v1018
        %v1105 = vunpack.c.l.b16 %v1019
        %v1106 = vunpack.c.h.b16 %v1019
        %v1107 = vunpack.c.l.b16 %v1020
        %v1108 = vunpack.c.l.b16 %v1021
        %v1109 = vunpack.c.h.b16 %v1021
        %v1110 = vunpack.c.l.b16 %v1022
        %v1111 = vunpack.c.l.b16 %v1023
        %v1112 = vunpack.c.h.b16 %v1023
        %v1113 = vunpack.c.l.b16 %v1024
        %v1114 = vunpack.c.l.b16 %v1025
        %v1115 = vunpack.c.h.b16 %v1025
        %v1116 = vunpack.c.l.b16 %v1026
        %v1117 = vunpack.c.l.b16 %v1027
        %v1118 = vunpack.c.h.b16 %v1027
        %v1119 = vunpack.c.l.b16 %v1028
        %v1120 = vunpack.c.l.b16 %v1029
        %v1121 = vunpack.c.h.b16 %v1029
        %v1122 = vunpack.c.l.b16 %v1030
        %v1123 = vunpack.c.l.b16 %v1031
        %v1124 = vunpack.c.h.b16 %v1031
        %v1125 = vunpack.c.l.b16 %v1032
        %v1126 = vunpack.c.l.b16 %v1033
        %v1127 = vunpack.c.h.b16 %v1033
        %v1128 = vunpack.c.l.b16 %v1034
        %v1129 = vunpack.c.l.b16 %v1035
        %v1130 = vunpack.c.h.b16 %v1035
        %v1131 = vunpack.c.l.b16 %v1036
        %v1132 = vunpack.c.l.b16 %v1037
        %v1133 = vunpack.c.h.b16 %v1037
        %v1134 = vunpack.c.l.b16 %v1038
        %v1135 = vunpack.c.l.b16 %v1039
        %v1136 = vunpack.c.h.b16 %v1039
        %v1137 = vunpack.c.l.b16 %v1040
        %v1138 = vpack.c.b16 %v1093, %v1090
        %v1139 = vpack.c.b16 %v1094, %v1091
        %v1140 = vpack.c.b16 %v1095, %v1092
        %v1141 = vpack.c.b16 %v1099, %v1096
        %v1142 = vpack.c.b16 %v1100, %v1097
        %v1143 = vpack.c.b16 %v1101, %v1098
        %v1144 = vpack.c.b16 %v1105, %v1102
        %v1145 = vpack.c.b16 %v1106, %v1103
        %v1146 = vpack.c.b16 %v1107, %v1104
        %v1147 = vpack.c.b16 %v1111, %v1108
        %v1148 = vpack.c.b16 %v1112, %v1109
        %v1149 = vpack.c.b16 %v1113, %v1110
        %v1150 = vpack.c.b16 %v1117, %v1114
        %v1151 = vpack.c.b16 %v1118, %v1115
        %v1152 = vpack.c.b16 %v1119, %v1116
        %v1153 = vpack.c.b16 %v1123, %v1120
        %v1154 = vpack.c.b16 %v1124, %v1121
        %v1155 = vpack.c.b16 %v1125, %v1122
        %v1156 = vpack.c.b16 %v1129, %v1126
        %v1157 = vpack.c.b16 %v1130, %v1127
        %v1158 = vpack.c.b16 %v1131, %v1128
        %v1159 = vpack.c.b16 %v1135, %v1132
        %v1160 = vpack.c.b16 %v1136, %v1133
        %v1161 = vpack.c.b16 %v1137, %v1134
        %1186 = vmatprep.subr.bf16.mxu0 %v1139
        %1187 = vmatpush1.bf16.msra.mxu0 %v1138
        %1188 = vmatprep.subr.bf16.mxu0 %v1142
        %1189 = vmatpush1.bf16.msra.mxu0 %v1141
        %1190 = vmatprep.subr.bf16.mxu0 %v1145
        %1191 = vmatpush1.bf16.msra.mxu0 %v1144
        %1192 = vmatprep.subr.bf16.mxu0 %v1148
        %1193 = vmatpush1.bf16.msra.mxu0 %v1147
        %1194 = vmatprep.subr.bf16.mxu0 %v1151
        %1195 = vmatpush1.bf16.msra.mxu0 %v1150
        %1196 = vmatprep.subr.bf16.mxu0 %v1154
        %1197 = vmatpush1.bf16.msra.mxu0 %v1153
        %1198 = vmatprep.subr.bf16.mxu0 %v1157
        %1199 = vmatpush1.bf16.msra.mxu0 %v1156
        %1200 = vmatprep.subr.bf16.mxu0 %v1160
        %1201 = vmatpush1.bf16.msra.mxu0 %v1159
        %1202 = vmatprep.subr.bf16.mxu0 0
        %1203 = vmatpush1.bf16.msra.mxu0 0
        %1204 = vmatprep.subr.bf16.mxu0 0
        %1205 = vmatpush1.bf16.msra.mxu0 0
        %1206 = vmatprep.subr.bf16.mxu0 0
        %1207 = vmatpush1.bf16.msra.mxu0 0
        %1208 = vmatprep.subr.bf16.mxu0 0
        %1209 = vmatpush1.bf16.msra.mxu0 0
        %1210 = vmatprep.subr.bf16.mxu0 0
        %1211 = vmatpush1.bf16.msra.mxu0 0
        %1212 = vmatprep.subr.bf16.mxu0 0
        %1213 = vmatpush1.bf16.msra.mxu0 0
        %1214 = vmatprep.subr.bf16.mxu0 0
        %1215 = vmatpush1.bf16.msra.mxu0 0
        %1216 = vmatprep.subr.bf16.mxu0 0
        %1217 = vmatpush1.bf16.msra.mxu0 0
        %1218 = vmatprep.mubr.bf16.mxu0 0
        %1219 = vmatmul.mubr.bf16.gmra.mrb[0].mxu0 %v1008
        %v1220 = vpop.f32.mrb[0].mxu0
        %v1221 = vadd.f32 %v1046, %v1220
        %v1222 = vpop.f32.mrb[0].mxu0
        %v1223 = vadd.f32 %v1050, %v1222
        %v1224 = vpop.f32.mrb[0].mxu0
        %v1225 = vpop.f32.mrb[0].mxu0
        %1226 = vdwg.mxu0
        %1227 = vmatprep.subr.bf16.mxu0 0
        %1228 = vmatpush1.bf16.msra.mxu0 %v1140
        %1229 = vmatprep.subr.bf16.mxu0 0
        %1230 = vmatpush1.bf16.msra.mxu0 %v1143
        %1231 = vmatprep.subr.bf16.mxu0 0
        %1232 = vmatpush1.bf16.msra.mxu0 %v1146
        %1233 = vmatprep.subr.bf16.mxu0 0
        %1234 = vmatpush1.bf16.msra.mxu0 %v1149
        %1235 = vmatprep.subr.bf16.mxu0 0
        %1236 = vmatpush1.bf16.msra.mxu0 %v1152
        %1237 = vmatprep.subr.bf16.mxu0 0
        %1238 = vmatpush1.bf16.msra.mxu0 %v1155
        %1239 = vmatprep.subr.bf16.mxu0 0
        %1240 = vmatpush1.bf16.msra.mxu0 %v1158
        %1241 = vmatprep.subr.bf16.mxu0 0
        %1242 = vmatpush1.bf16.msra.mxu0 %v1161
        %1243 = vmatprep.subr.bf16.mxu0 0
        %1244 = vmatpush1.bf16.msra.mxu0 0
        %1245 = vmatprep.subr.bf16.mxu0 0
        %1246 = vmatpush1.bf16.msra.mxu0 0
        %1247 = vmatprep.subr.bf16.mxu0 0
        %1248 = vmatpush1.bf16.msra.mxu0 0
        %1249 = vmatprep.subr.bf16.mxu0 0
        %1250 = vmatpush1.bf16.msra.mxu0 0
        %1251 = vmatprep.subr.bf16.mxu0 0
        %1252 = vmatpush1.bf16.msra.mxu0 0
        %1253 = vmatprep.subr.bf16.mxu0 0
        %1254 = vmatpush1.bf16.msra.mxu0 0
        %1255 = vmatprep.subr.bf16.mxu0 0
        %1256 = vmatpush1.bf16.msra.mxu0 0
        %1257 = vmatprep.subr.bf16.mxu0 0
        %1258 = vmatpush1.bf16.msra.mxu0 0
        %1259 = vmatprep.mubr.bf16.mxu0 0
        %1260 = vmatmul.mubr.bf16.gmra.mrb[0].mxu0 %v1008
        %v1261 = vpop.f32.mrb[0].mxu0
        %v1262 = vadd.f32 %v1054, %v1261
        %v1263 = vpop.f32.mrb[0].mxu0
        %v1264 = vpop.f32.mrb[0].mxu0
        %v1265 = vpop.f32.mrb[0].mxu0
        %1266 = vdwg.mxu0
        %v1267 = vpack.c.bf16 %v1221, %v1221
        %v1268 = vpack.c.bf16 %v1223, %v1223
        %v1269 = vpack.c.bf16 %v1262, %v1262
        %v1270 = vld [vmem:[#allocation10] sm:$0xf]
        %v1271 = vld [vmem:[#allocation10 + $0x4] sm:$0xf]
        %v1272 = vld [vmem:[#allocation10 + $0x8] sm:$0xf]
        %v1273 = vld [vmem:[#allocation10 + $0xc] sm:$0xf]
        %v1274 = vld [vmem:[#allocation10 + $0x10] sm:$0xf]
        %v1275 = vld [vmem:[#allocation10 + $0x14] sm:$0xf]
        %v1276 = vld [vmem:[#allocation10 + $0x18] sm:$0xf]
        %v1277 = vld [vmem:[#allocation10 + $0x1c] sm:$0xf]
        %v1278 = vld [vmem:[#allocation10 + $0x20] sm:$0xf]
        %v1279 = vld [vmem:[#allocation10 + $0x24] sm:$0xf]
        %v1280 = vld [vmem:[#allocation10 + $0x28] sm:$0xf]
        %v1281 = vld [vmem:[#allocation10 + $0x2c] sm:$0xf]
        %v1282 = vld [vmem:[#allocation10 + $0x30] sm:$0xf]
        %v1283 = vld [vmem:[#allocation10 + $0x34] sm:$0xf]
        %v1284 = vld [vmem:[#allocation10 + $0x38] sm:$0xf]
        %v1285 = vld [vmem:[#allocation10 + $0x3c] sm:$0xf]
        %v1286 = vld [vmem:[#allocation11] sm:$0x1]
        %1288 = vrot.lane.b32.xlu0 %v1267, 112
        %v1289 = vpop.permute.xlu0 %1288
        %1291 = vrot.lane.b32.xlu0 %v1267, 96
        %v1292 = vpop.permute.xlu0 %1291
        %1294 = vrot.lane.b32.xlu0 %v1267, 80
        %v1295 = vpop.permute.xlu0 %1294
        %1297 = vrot.lane.b32.xlu0 %v1267, 64
        %v1298 = vpop.permute.xlu0 %1297
        %1300 = vrot.lane.b32.xlu0 %v1267, 48
        %v1301 = vpop.permute.xlu0 %1300
        %1303 = vrot.lane.b32.xlu0 %v1267, 32
        %v1304 = vpop.permute.xlu0 %1303
        %1306 = vrot.lane.b32.xlu0 %v1267, 16
        %v1307 = vpop.permute.xlu0 %1306
        %v1309 = vcombine.low %v1267, %v1298
        %v1311 = vunpack.c.l.s4 1983009808
        %v1312 = vunpack.c.0.s8 %v1311
        %v1313 = vlaneseq
        %v1314 = vshrl.u32 %v1313, 7
        %v1315 = vsub.s32 %v1312, %v1314
        %v1316 = vrot.slane %v1309, %v1315
        %v1317 = vcombine.low %v1292, %v1304
        %v1319 = vunpack.c.l.s4 1983009808
        %v1320 = vunpack.c.0.s8 %v1319
        %v1321 = vlaneseq
        %v1322 = vshrl.u32 %v1321, 7
        %v1323 = vsub.s32 %v1320, %v1322
        %v1324 = vrot.slane %v1317, %v1323
        %v1325 = vcombine.low %v1316, %v1324
        %v1326 = vcombine.high %v1316, %v1324
        %v1328 = vunpack.c.l.s4 1934713408
        %v1329 = vunpack.c.0.s8 %v1328
        %v1330 = vlaneseq
        %v1331 = vshrl.u32 %v1330, 7
        %v1332 = vsub.s32 %v1329, %v1331
        %v1333 = vrot.slane %v1325, %v1332
        %v1335 = vunpack.c.l.s4 1934713408
        %v1336 = vunpack.c.0.s8 %v1335
        %v1337 = vlaneseq
        %v1338 = vshrl.u32 %v1337, 7
        %v1339 = vsub.s32 %v1336, %v1338
        %v1340 = vrot.slane %v1326, %v1339
        %v1341 = vcombine.high %v1333, 0
        %v1342 = vcombine.high %v1340, 0
        %v1343 = vcombine.low %v1289, %v1301
        %v1345 = vunpack.c.l.s4 1983009808
        %v1346 = vunpack.c.0.s8 %v1345
        %v1347 = vlaneseq
        %v1348 = vshrl.u32 %v1347, 7
        %v1349 = vsub.s32 %v1346, %v1348
        %v1350 = vrot.slane %v1343, %v1349
        %v1351 = vcombine.low %v1295, %v1307
        %v1353 = vunpack.c.l.s4 1983009808
        %v1354 = vunpack.c.0.s8 %v1353
        %v1355 = vlaneseq
        %v1356 = vshrl.u32 %v1355, 7
        %v1357 = vsub.s32 %v1354, %v1356
        %v1358 = vrot.slane %v1351, %v1357
        %v1359 = vcombine.low %v1350, %v1358
        %v1360 = vcombine.high %v1350, %v1358
        %v1362 = vunpack.c.l.s4 1934713408
        %v1363 = vunpack.c.0.s8 %v1362
        %v1364 = vlaneseq
        %v1365 = vshrl.u32 %v1364, 7
        %v1366 = vsub.s32 %v1363, %v1365
        %v1367 = vrot.slane %v1359, %v1366
        %v1369 = vunpack.c.l.s4 1934713408
        %v1370 = vunpack.c.0.s8 %v1369
        %v1371 = vlaneseq
        %v1372 = vshrl.u32 %v1371, 7
        %v1373 = vsub.s32 %v1370, %v1372
        %v1374 = vrot.slane %v1360, %v1373
        %v1375 = vcombine.high %v1367, 0
        %v1376 = vcombine.high %v1374, 0
        %v1379 = vpack.i.b16 %v1367, %v1333
        %v1381 = vshrl.u32 %v1333, 16
        %v1382 = vshrl.u32 %v1367, 16
        %v1383 = vpack.i.b16 %v1382, %v1381
        %v1387 = vpack.i.b16 %v1375, %v1341
        %v1389 = vshrl.u32 %v1341, 16
        %v1390 = vshrl.u32 %v1375, 16
        %v1391 = vpack.i.b16 %v1390, %v1389
        %v1395 = vpack.i.b16 %v1374, %v1340
        %v1397 = vshrl.u32 %v1340, 16
        %v1398 = vshrl.u32 %v1374, 16
        %v1399 = vpack.i.b16 %v1398, %v1397
        %v1403 = vpack.i.b16 %v1376, %v1342
        %v1405 = vshrl.u32 %v1342, 16
        %v1406 = vshrl.u32 %v1376, 16
        %v1407 = vpack.i.b16 %v1406, %v1405
        %v1409 = vcombine.low %v1379, %v1395
        %v1411 = vunpack.c.l.s4 1983009808
        %v1412 = vunpack.c.0.s8 %v1411
        %v1413 = vlaneseq
        %v1414 = vshrl.u32 %v1413, 7
        %v1415 = vsub.s32 %v1412, %v1414
        %v1416 = vrot.slane %v1409, %v1415
        %v1417 = vcombine.low %v1387, %v1403
        %v1419 = vunpack.c.l.s4 1983009808
        %v1420 = vunpack.c.0.s8 %v1419
        %v1421 = vlaneseq
        %v1422 = vshrl.u32 %v1421, 7
        %v1423 = vsub.s32 %v1420, %v1422
        %v1424 = vrot.slane %v1417, %v1423
        %v1425 = vcombine.low %v1416, %v1424
        %v1426 = vcombine.high %v1416, %v1424
        %v1428 = vunpack.c.l.s4 1934713408
        %v1429 = vunpack.c.0.s8 %v1428
        %v1430 = vlaneseq
        %v1431 = vshrl.u32 %v1430, 7
        %v1432 = vsub.s32 %v1429, %v1431
        %v1433 = vrot.slane %v1425, %v1432
        %v1435 = vunpack.c.l.s4 1934713408
        %v1436 = vunpack.c.0.s8 %v1435
        %v1437 = vlaneseq
        %v1438 = vshrl.u32 %v1437, 7
        %v1439 = vsub.s32 %v1436, %v1438
        %v1440 = vrot.slane %v1426, %v1439
        %v1441 = vcombine.high %v1433, 0
        %v1442 = vcombine.high %v1440, 0
        %v1443 = vcombine.low %v1383, %v1399
        %v1445 = vunpack.c.l.s4 1983009808
        %v1446 = vunpack.c.0.s8 %v1445
        %v1447 = vlaneseq
        %v1448 = vshrl.u32 %v1447, 7
        %v1449 = vsub.s32 %v1446, %v1448
        %v1450 = vrot.slane %v1443, %v1449
        %v1451 = vcombine.low %v1391, %v1407
        %v1453 = vunpack.c.l.s4 1983009808
        %v1454 = vunpack.c.0.s8 %v1453
        %v1455 = vlaneseq
        %v1456 = vshrl.u32 %v1455, 7
        %v1457 = vsub.s32 %v1454, %v1456
        %v1458 = vrot.slane %v1451, %v1457
        %v1459 = vcombine.low %v1450, %v1458
        %v1460 = vcombine.high %v1450, %v1458
        %v1462 = vunpack.c.l.s4 1934713408
        %v1463 = vunpack.c.0.s8 %v1462
        %v1464 = vlaneseq
        %v1465 = vshrl.u32 %v1464, 7
        %v1466 = vsub.s32 %v1463, %v1465
        %v1467 = vrot.slane %v1459, %v1466
        %v1469 = vunpack.c.l.s4 1934713408
        %v1470 = vunpack.c.0.s8 %v1469
        %v1471 = vlaneseq
        %v1472 = vshrl.u32 %v1471, 7
        %v1473 = vsub.s32 %v1470, %v1472
        %v1474 = vrot.slane %v1460, %v1473
        %v1475 = vcombine.high %v1467, 0
        %v1476 = vcombine.high %v1474, 0
        %v1479 = vpack.i.b16 %v1467, %v1433
        %v1480 = vshrl.u32 %v1433, 16
        %v1481 = vshrl.u32 %v1467, 16
        %v1482 = vpack.i.b16 %v1481, %v1480
        %v1485 = vpack.i.b16 %v1475, %v1441
        %v1486 = vshrl.u32 %v1441, 16
        %v1487 = vshrl.u32 %v1475, 16
        %v1488 = vpack.i.b16 %v1487, %v1486
        %v1491 = vpack.i.b16 %v1474, %v1440
        %v1492 = vshrl.u32 %v1440, 16
        %v1493 = vshrl.u32 %v1474, 16
        %v1494 = vpack.i.b16 %v1493, %v1492
        %v1497 = vpack.i.b16 %v1476, %v1442
        %v1498 = vshrl.u32 %v1442, 16
        %v1499 = vshrl.u32 %v1476, 16
        %v1500 = vpack.i.b16 %v1499, %v1498
        %1502 = vrot.lane.b32.xlu0 %v1268, 112
        %v1503 = vpop.permute.xlu0 %1502
        %1505 = vrot.lane.b32.xlu0 %v1268, 96
        %v1506 = vpop.permute.xlu0 %1505
        %1508 = vrot.lane.b32.xlu0 %v1268, 80
        %v1509 = vpop.permute.xlu0 %1508
        %1511 = vrot.lane.b32.xlu0 %v1268, 64
        %v1512 = vpop.permute.xlu0 %1511
        %1514 = vrot.lane.b32.xlu0 %v1268, 48
        %v1515 = vpop.permute.xlu0 %1514
        %1517 = vrot.lane.b32.xlu0 %v1268, 32
        %v1518 = vpop.permute.xlu0 %1517
        %1520 = vrot.lane.b32.xlu0 %v1268, 16
        %v1521 = vpop.permute.xlu0 %1520
        %v1523 = vcombine.low %v1268, %v1512
        %v1525 = vunpack.c.l.s4 1983009808
        %v1526 = vunpack.c.0.s8 %v1525
        %v1527 = vlaneseq
        %v1528 = vshrl.u32 %v1527, 7
        %v1529 = vsub.s32 %v1526, %v1528
        %v1530 = vrot.slane %v1523, %v1529
        %v1531 = vcombine.low %v1506, %v1518
        %v1533 = vunpack.c.l.s4 1983009808
        %v1534 = vunpack.c.0.s8 %v1533
        %v1535 = vlaneseq
        %v1536 = vshrl.u32 %v1535, 7
        %v1537 = vsub.s32 %v1534, %v1536
        %v1538 = vrot.slane %v1531, %v1537
        %v1539 = vcombine.low %v1530, %v1538
        %v1540 = vcombine.high %v1530, %v1538
        %v1542 = vunpack.c.l.s4 1934713408
        %v1543 = vunpack.c.0.s8 %v1542
        %v1544 = vlaneseq
        %v1545 = vshrl.u32 %v1544, 7
        %v1546 = vsub.s32 %v1543, %v1545
        %v1547 = vrot.slane %v1539, %v1546
        %v1549 = vunpack.c.l.s4 1934713408
        %v1550 = vunpack.c.0.s8 %v1549
        %v1551 = vlaneseq
        %v1552 = vshrl.u32 %v1551, 7
        %v1553 = vsub.s32 %v1550, %v1552
        %v1554 = vrot.slane %v1540, %v1553
        %v1555 = vcombine.high %v1547, 0
        %v1556 = vcombine.high %v1554, 0
        %v1557 = vcombine.low %v1503, %v1515
        %v1559 = vunpack.c.l.s4 1983009808
        %v1560 = vunpack.c.0.s8 %v1559
        %v1561 = vlaneseq
        %v1562 = vshrl.u32 %v1561, 7
        %v1563 = vsub.s32 %v1560, %v1562
        %v1564 = vrot.slane %v1557, %v1563
        %v1565 = vcombine.low %v1509, %v1521
        %v1567 = vunpack.c.l.s4 1983009808
        %v1568 = vunpack.c.0.s8 %v1567
        %v1569 = vlaneseq
        %v1570 = vshrl.u32 %v1569, 7
        %v1571 = vsub.s32 %v1568, %v1570
        %v1572 = vrot.slane %v1565, %v1571
        %v1573 = vcombine.low %v1564, %v1572
        %v1574 = vcombine.high %v1564, %v1572
        %v1576 = vunpack.c.l.s4 1934713408
        %v1577 = vunpack.c.0.s8 %v1576
        %v1578 = vlaneseq
        %v1579 = vshrl.u32 %v1578, 7
        %v1580 = vsub.s32 %v1577, %v1579
        %v1581 = vrot.slane %v1573, %v1580
        %v1583 = vunpack.c.l.s4 1934713408
        %v1584 = vunpack.c.0.s8 %v1583
        %v1585 = vlaneseq
        %v1586 = vshrl.u32 %v1585, 7
        %v1587 = vsub.s32 %v1584, %v1586
        %v1588 = vrot.slane %v1574, %v1587
        %v1589 = vcombine.high %v1581, 0
        %v1590 = vcombine.high %v1588, 0
        %v1593 = vpack.i.b16 %v1581, %v1547
        %v1595 = vshrl.u32 %v1547, 16
        %v1596 = vshrl.u32 %v1581, 16
        %v1597 = vpack.i.b16 %v1596, %v1595
        %v1601 = vpack.i.b16 %v1589, %v1555
        %v1603 = vshrl.u32 %v1555, 16
        %v1604 = vshrl.u32 %v1589, 16
        %v1605 = vpack.i.b16 %v1604, %v1603
        %v1609 = vpack.i.b16 %v1588, %v1554
        %v1611 = vshrl.u32 %v1554, 16
        %v1612 = vshrl.u32 %v1588, 16
        %v1613 = vpack.i.b16 %v1612, %v1611
        %v1617 = vpack.i.b16 %v1590, %v1556
        %v1619 = vshrl.u32 %v1556, 16
        %v1620 = vshrl.u32 %v1590, 16
        %v1621 = vpack.i.b16 %v1620, %v1619
        %v1623 = vcombine.low %v1593, %v1609
        %v1625 = vunpack.c.l.s4 1983009808
        %v1626 = vunpack.c.0.s8 %v1625
        %v1627 = vlaneseq
        %v1628 = vshrl.u32 %v1627, 7
        %v1629 = vsub.s32 %v1626, %v1628
        %v1630 = vrot.slane %v1623, %v1629
        %v1631 = vcombine.low %v1601, %v1617
        %v1633 = vunpack.c.l.s4 1983009808
        %v1634 = vunpack.c.0.s8 %v1633
        %v1635 = vlaneseq
        %v1636 = vshrl.u32 %v1635, 7
        %v1637 = vsub.s32 %v1634, %v1636
        %v1638 = vrot.slane %v1631, %v1637
        %v1639 = vcombine.low %v1630, %v1638
        %v1640 = vcombine.high %v1630, %v1638
        %v1642 = vunpack.c.l.s4 1934713408
        %v1643 = vunpack.c.0.s8 %v1642
        %v1644 = vlaneseq
        %v1645 = vshrl.u32 %v1644, 7
        %v1646 = vsub.s32 %v1643, %v1645
        %v1647 = vrot.slane %v1639, %v1646
        %v1649 = vunpack.c.l.s4 1934713408
        %v1650 = vunpack.c.0.s8 %v1649
        %v1651 = vlaneseq
        %v1652 = vshrl.u32 %v1651, 7
        %v1653 = vsub.s32 %v1650, %v1652
        %v1654 = vrot.slane %v1640, %v1653
        %v1655 = vcombine.high %v1647, 0
        %v1656 = vcombine.high %v1654, 0
        %v1657 = vcombine.low %v1597, %v1613
        %v1659 = vunpack.c.l.s4 1983009808
        %v1660 = vunpack.c.0.s8 %v1659
        %v1661 = vlaneseq
        %v1662 = vshrl.u32 %v1661, 7
        %v1663 = vsub.s32 %v1660, %v1662
        %v1664 = vrot.slane %v1657, %v1663
        %v1665 = vcombine.low %v1605, %v1621
        %v1667 = vunpack.c.l.s4 1983009808
        %v1668 = vunpack.c.0.s8 %v1667
        %v1669 = vlaneseq
        %v1670 = vshrl.u32 %v1669, 7
        %v1671 = vsub.s32 %v1668, %v1670
        %v1672 = vrot.slane %v1665, %v1671
        %v1673 = vcombine.low %v1664, %v1672
        %v1674 = vcombine.high %v1664, %v1672
        %v1676 = vunpack.c.l.s4 1934713408
        %v1677 = vunpack.c.0.s8 %v1676
        %v1678 = vlaneseq
        %v1679 = vshrl.u32 %v1678, 7
        %v1680 = vsub.s32 %v1677, %v1679
        %v1681 = vrot.slane %v1673, %v1680
        %v1683 = vunpack.c.l.s4 1934713408
        %v1684 = vunpack.c.0.s8 %v1683
        %v1685 = vlaneseq
        %v1686 = vshrl.u32 %v1685, 7
        %v1687 = vsub.s32 %v1684, %v1686
        %v1688 = vrot.slane %v1674, %v1687
        %v1689 = vcombine.high %v1681, 0
        %v1690 = vcombine.high %v1688, 0
        %v1693 = vpack.i.b16 %v1681, %v1647
        %v1694 = vshrl.u32 %v1647, 16
        %v1695 = vshrl.u32 %v1681, 16
        %v1696 = vpack.i.b16 %v1695, %v1694
        %v1699 = vpack.i.b16 %v1689, %v1655
        %v1700 = vshrl.u32 %v1655, 16
        %v1701 = vshrl.u32 %v1689, 16
        %v1702 = vpack.i.b16 %v1701, %v1700
        %v1705 = vpack.i.b16 %v1688, %v1654
        %v1706 = vshrl.u32 %v1654, 16
        %v1707 = vshrl.u32 %v1688, 16
        %v1708 = vpack.i.b16 %v1707, %v1706
        %v1711 = vpack.i.b16 %v1690, %v1656
        %v1712 = vshrl.u32 %v1656, 16
        %v1713 = vshrl.u32 %v1690, 16
        %v1714 = vpack.i.b16 %v1713, %v1712
        %1716 = vrot.lane.b32.xlu0 %v1269, 112
        %v1717 = vpop.permute.xlu0 %1716
        %1719 = vrot.lane.b32.xlu0 %v1269, 96
        %v1720 = vpop.permute.xlu0 %1719
        %1722 = vrot.lane.b32.xlu0 %v1269, 80
        %v1723 = vpop.permute.xlu0 %1722
        %1725 = vrot.lane.b32.xlu0 %v1269, 64
        %v1726 = vpop.permute.xlu0 %1725
        %1728 = vrot.lane.b32.xlu0 %v1269, 48
        %v1729 = vpop.permute.xlu0 %1728
        %1731 = vrot.lane.b32.xlu0 %v1269, 32
        %v1732 = vpop.permute.xlu0 %1731
        %1734 = vrot.lane.b32.xlu0 %v1269, 16
        %v1735 = vpop.permute.xlu0 %1734
        %v1737 = vcombine.low %v1269, %v1726
        %v1739 = vunpack.c.l.s4 1983009808
        %v1740 = vunpack.c.0.s8 %v1739
        %v1741 = vlaneseq
        %v1742 = vshrl.u32 %v1741, 7
        %v1743 = vsub.s32 %v1740, %v1742
        %v1744 = vrot.slane %v1737, %v1743
        %v1745 = vcombine.low %v1720, %v1732
        %v1747 = vunpack.c.l.s4 1983009808
        %v1748 = vunpack.c.0.s8 %v1747
        %v1749 = vlaneseq
        %v1750 = vshrl.u32 %v1749, 7
        %v1751 = vsub.s32 %v1748, %v1750
        %v1752 = vrot.slane %v1745, %v1751
        %v1753 = vcombine.low %v1744, %v1752
        %v1754 = vcombine.high %v1744, %v1752
        %v1756 = vunpack.c.l.s4 1934713408
        %v1757 = vunpack.c.0.s8 %v1756
        %v1758 = vlaneseq
        %v1759 = vshrl.u32 %v1758, 7
        %v1760 = vsub.s32 %v1757, %v1759
        %v1761 = vrot.slane %v1753, %v1760
        %v1763 = vunpack.c.l.s4 1934713408
        %v1764 = vunpack.c.0.s8 %v1763
        %v1765 = vlaneseq
        %v1766 = vshrl.u32 %v1765, 7
        %v1767 = vsub.s32 %v1764, %v1766
        %v1768 = vrot.slane %v1754, %v1767
        %v1769 = vcombine.high %v1761, 0
        %v1770 = vcombine.high %v1768, 0
        %v1771 = vcombine.low %v1717, %v1729
        %v1773 = vunpack.c.l.s4 1983009808
        %v1774 = vunpack.c.0.s8 %v1773
        %v1775 = vlaneseq
        %v1776 = vshrl.u32 %v1775, 7
        %v1777 = vsub.s32 %v1774, %v1776
        %v1778 = vrot.slane %v1771, %v1777
        %v1779 = vcombine.low %v1723, %v1735
        %v1781 = vunpack.c.l.s4 1983009808
        %v1782 = vunpack.c.0.s8 %v1781
        %v1783 = vlaneseq
        %v1784 = vshrl.u32 %v1783, 7
        %v1785 = vsub.s32 %v1782, %v1784
        %v1786 = vrot.slane %v1779, %v1785
        %v1787 = vcombine.low %v1778, %v1786
        %v1788 = vcombine.high %v1778, %v1786
        %v1790 = vunpack.c.l.s4 1934713408
        %v1791 = vunpack.c.0.s8 %v1790
        %v1792 = vlaneseq
        %v1793 = vshrl.u32 %v1792, 7
        %v1794 = vsub.s32 %v1791, %v1793
        %v1795 = vrot.slane %v1787, %v1794
        %v1797 = vunpack.c.l.s4 1934713408
        %v1798 = vunpack.c.0.s8 %v1797
        %v1799 = vlaneseq
        %v1800 = vshrl.u32 %v1799, 7
        %v1801 = vsub.s32 %v1798, %v1800
        %v1802 = vrot.slane %v1788, %v1801
        %v1803 = vcombine.high %v1795, 0
        %v1804 = vcombine.high %v1802, 0
        %v1807 = vpack.i.b16 %v1795, %v1761
        %v1809 = vshrl.u32 %v1761, 16
        %v1810 = vshrl.u32 %v1795, 16
        %v1811 = vpack.i.b16 %v1810, %v1809
        %v1815 = vpack.i.b16 %v1803, %v1769
        %v1817 = vshrl.u32 %v1769, 16
        %v1818 = vshrl.u32 %v1803, 16
        %v1819 = vpack.i.b16 %v1818, %v1817
        %v1823 = vpack.i.b16 %v1802, %v1768
        %v1825 = vshrl.u32 %v1768, 16
        %v1826 = vshrl.u32 %v1802, 16
        %v1827 = vpack.i.b16 %v1826, %v1825
        %v1831 = vpack.i.b16 %v1804, %v1770
        %v1833 = vshrl.u32 %v1770, 16
        %v1834 = vshrl.u32 %v1804, 16
        %v1835 = vpack.i.b16 %v1834, %v1833
        %v1837 = vcombine.low %v1807, %v1823
        %v1839 = vunpack.c.l.s4 1983009808
        %v1840 = vunpack.c.0.s8 %v1839
        %v1841 = vlaneseq
        %v1842 = vshrl.u32 %v1841, 7
        %v1843 = vsub.s32 %v1840, %v1842
        %v1844 = vrot.slane %v1837, %v1843
        %v1845 = vcombine.low %v1815, %v1831
        %v1847 = vunpack.c.l.s4 1983009808
        %v1848 = vunpack.c.0.s8 %v1847
        %v1849 = vlaneseq
        %v1850 = vshrl.u32 %v1849, 7
        %v1851 = vsub.s32 %v1848, %v1850
        %v1852 = vrot.slane %v1845, %v1851
        %v1853 = vcombine.low %v1844, %v1852
        %v1854 = vcombine.high %v1844, %v1852
        %v1856 = vunpack.c.l.s4 1934713408
        %v1857 = vunpack.c.0.s8 %v1856
        %v1858 = vlaneseq
        %v1859 = vshrl.u32 %v1858, 7
        %v1860 = vsub.s32 %v1857, %v1859
        %v1861 = vrot.slane %v1853, %v1860
        %v1863 = vunpack.c.l.s4 1934713408
        %v1864 = vunpack.c.0.s8 %v1863
        %v1865 = vlaneseq
        %v1866 = vshrl.u32 %v1865, 7
        %v1867 = vsub.s32 %v1864, %v1866
        %v1868 = vrot.slane %v1854, %v1867
        %v1869 = vcombine.high %v1861, 0
        %v1870 = vcombine.high %v1868, 0
        %v1871 = vcombine.low %v1811, %v1827
        %v1873 = vunpack.c.l.s4 1983009808
        %v1874 = vunpack.c.0.s8 %v1873
        %v1875 = vlaneseq
        %v1876 = vshrl.u32 %v1875, 7
        %v1877 = vsub.s32 %v1874, %v1876
        %v1878 = vrot.slane %v1871, %v1877
        %v1879 = vcombine.low %v1819, %v1835
        %v1881 = vunpack.c.l.s4 1983009808
        %v1882 = vunpack.c.0.s8 %v1881
        %v1883 = vlaneseq
        %v1884 = vshrl.u32 %v1883, 7
        %v1885 = vsub.s32 %v1882, %v1884
        %v1886 = vrot.slane %v1879, %v1885
        %v1887 = vcombine.low %v1878, %v1886
        %v1888 = vcombine.high %v1878, %v1886
        %v1890 = vunpack.c.l.s4 1934713408
        %v1891 = vunpack.c.0.s8 %v1890
        %v1892 = vlaneseq
        %v1893 = vshrl.u32 %v1892, 7
        %v1894 = vsub.s32 %v1891, %v1893
        %v1895 = vrot.slane %v1887, %v1894
        %v1897 = vunpack.c.l.s4 1934713408
        %v1898 = vunpack.c.0.s8 %v1897
        %v1899 = vlaneseq
        %v1900 = vshrl.u32 %v1899, 7
        %v1901 = vsub.s32 %v1898, %v1900
        %v1902 = vrot.slane %v1888, %v1901
        %v1903 = vcombine.high %v1895, 0
        %v1904 = vcombine.high %v1902, 0
        %v1907 = vpack.i.b16 %v1895, %v1861
        %v1908 = vshrl.u32 %v1861, 16
        %v1909 = vshrl.u32 %v1895, 16
        %v1910 = vpack.i.b16 %v1909, %v1908
        %v1913 = vpack.i.b16 %v1903, %v1869
        %v1914 = vshrl.u32 %v1869, 16
        %v1915 = vshrl.u32 %v1903, 16
        %v1916 = vpack.i.b16 %v1915, %v1914
        %v1919 = vpack.i.b16 %v1902, %v1868
        %v1920 = vshrl.u32 %v1868, 16
        %v1921 = vshrl.u32 %v1902, 16
        %v1922 = vpack.i.b16 %v1921, %v1920
        %v1925 = vpack.i.b16 %v1904, %v1870
        %v1926 = vshrl.u32 %v1870, 16
        %v1927 = vshrl.u32 %v1904, 16
        %v1928 = vpack.i.b16 %v1927, %v1926
        %vm1929 = vcmask 130048
        %v1931 = vsel %vm1929, %v1479, 0
        %v1934 = vsel %vm1929, %v1693, 0
        %1936 = vmatprep.subr.bf16.mxu0 0
        %1937 = vmatpush1.bf16.xpose.msra.mxu0 %v1934
        %1938 = vmatprep.subr.bf16.mxu0 0
        %1939 = vmatpush1.bf16.xpose.msra.mxu0 0
        %1940 = vmatprep.subr.bf16.mxu0 0
        %1941 = vmatpush1.bf16.xpose.msra.mxu0 0
        %1942 = vmatprep.subr.bf16.mxu0 0
        %1943 = vmatpush1.bf16.xpose.msra.mxu0 0
        %1944 = vmatprep.subr.bf16.mxu0 0
        %1945 = vmatpush1.bf16.xpose.msra.mxu0 0
        %1946 = vmatprep.subr.bf16.mxu0 0
        %1947 = vmatpush1.bf16.xpose.msra.mxu0 0
        %1948 = vmatprep.subr.bf16.mxu0 0
        %1949 = vmatpush1.bf16.xpose.msra.mxu0 0
        %1950 = vmatprep.subr.bf16.mxu0 0
        %1951 = vmatpush1.bf16.xpose.msra.mxu0 0
        %1952 = vmatprep.subr.bf16.mxu0 0
        %1953 = vmatpush1.bf16.xpose.msra.mxu0 0
        %1954 = vmatprep.subr.bf16.mxu0 0
        %1955 = vmatpush1.bf16.xpose.msra.mxu0 0
        %1956 = vmatprep.subr.bf16.mxu0 0
        %1957 = vmatpush1.bf16.xpose.msra.mxu0 0
        %1958 = vmatprep.subr.bf16.mxu0 0
        %1959 = vmatpush1.bf16.xpose.msra.mxu0 0
        %1960 = vmatprep.subr.bf16.mxu0 0
        %1961 = vmatpush1.bf16.xpose.msra.mxu0 0
        %1962 = vmatprep.subr.bf16.mxu0 0
        %1963 = vmatpush1.bf16.xpose.msra.mxu0 0
        %1964 = vmatprep.subr.bf16.mxu0 0
        %1965 = vmatpush1.bf16.xpose.msra.mxu0 0
        %1966 = vmatprep.subr.bf16.mxu0 0
        %1967 = vmatpush1.bf16.xpose.msra.mxu0 0
        %1968 = vmatprep.mubr.bf16.mxu0 0
        %1969 = vmatmul.mubr.bf16.gmra.mrb[0].mxu0 %v1931
        %v1970 = vpop.f32.mrb[0].mxu0
        %v1971 = vadd.f32 0.0, %v1970
        %v1972 = vpop.f32.mrb[0].mxu0
        %v1973 = vpop.f32.mrb[0].mxu0
        %v1974 = vpop.f32.mrb[0].mxu0
        %1975 = vdwg.mxu0
        %v1977 = vsel %vm1929, %v1482, 0
        %v1980 = vsel %vm1929, %v1696, 0
        %1982 = vmatprep.subr.bf16.mxu0 0
        %1983 = vmatpush1.bf16.xpose.msra.mxu0 %v1980
        %1984 = vmatprep.subr.bf16.mxu0 0
        %1985 = vmatpush1.bf16.xpose.msra.mxu0 0
        %1986 = vmatprep.subr.bf16.mxu0 0
        %1987 = vmatpush1.bf16.xpose.msra.mxu0 0
        %1988 = vmatprep.subr.bf16.mxu0 0
        %1989 = vmatpush1.bf16.xpose.msra.mxu0 0
        %1990 = vmatprep.subr.bf16.mxu0 0
        %1991 = vmatpush1.bf16.xpose.msra.mxu0 0
        %1992 = vmatprep.subr.bf16.mxu0 0
        %1993 = vmatpush1.bf16.xpose.msra.mxu0 0
        %1994 = vmatprep.subr.bf16.mxu0 0
        %1995 = vmatpush1.bf16.xpose.msra.mxu0 0
        %1996 = vmatprep.subr.bf16.mxu0 0
        %1997 = vmatpush1.bf16.xpose.msra.mxu0 0
        %1998 = vmatprep.subr.bf16.mxu0 0
        %1999 = vmatpush1.bf16.xpose.msra.mxu0 0
        %2000 = vmatprep.subr.bf16.mxu0 0
        %2001 = vmatpush1.bf16.xpose.msra.mxu0 0
        %2002 = vmatprep.subr.bf16.mxu0 0
        %2003 = vmatpush1.bf16.xpose.msra.mxu0 0
        %2004 = vmatprep.subr.bf16.mxu0 0
        %2005 = vmatpush1.bf16.xpose.msra.mxu0 0
        %2006 = vmatprep.subr.bf16.mxu0 0
        %2007 = vmatpush1.bf16.xpose.msra.mxu0 0
        %2008 = vmatprep.subr.bf16.mxu0 0
        %2009 = vmatpush1.bf16.xpose.msra.mxu0 0
        %2010 = vmatprep.subr.bf16.mxu0 0
        %2011 = vmatpush1.bf16.xpose.msra.mxu0 0
        %2012 = vmatprep.subr.bf16.mxu0 0
        %2013 = vmatpush1.bf16.xpose.msra.mxu0 0
        %2014 = vmatprep.mubr.bf16.mxu0 0
        %2015 = vmatmul.mubr.bf16.gmra.mrb[0].mxu0 %v1977
        %v2016 = vpop.f32.mrb[0].mxu0
        %v2017 = vadd.f32 0.0, %v2016
        %v2018 = vpop.f32.mrb[0].mxu0
        %v2019 = vpop.f32.mrb[0].mxu0
        %v2020 = vpop.f32.mrb[0].mxu0
        %2021 = vdwg.mxu0
        %v2023 = vsel %vm1929, %v1485, 0
        %v2026 = vsel %vm1929, %v1699, 0
        %2028 = vmatprep.subr.bf16.mxu0 0
        %2029 = vmatpush1.bf16.xpose.msra.mxu0 %v2026
        %2030 = vmatprep.subr.bf16.mxu0 0
        %2031 = vmatpush1.bf16.xpose.msra.mxu0 0
        %2032 = vmatprep.subr.bf16.mxu0 0
        %2033 = vmatpush1.bf16.xpose.msra.mxu0 0
        %2034 = vmatprep.subr.bf16.mxu0 0
        %2035 = vmatpush1.bf16.xpose.msra.mxu0 0
        %2036 = vmatprep.subr.bf16.mxu0 0
        %2037 = vmatpush1.bf16.xpose.msra.mxu0 0
        %2038 = vmatprep.subr.bf16.mxu0 0
        %2039 = vmatpush1.bf16.xpose.msra.mxu0 0
        %2040 = vmatprep.subr.bf16.mxu0 0
        %2041 = vmatpush1.bf16.xpose.msra.mxu0 0
        %2042 = vmatprep.subr.bf16.mxu0 0
        %2043 = vmatpush1.bf16.xpose.msra.mxu0 0
        %2044 = vmatprep.subr.bf16.mxu0 0
        %2045 = vmatpush1.bf16.xpose.msra.mxu0 0
        %2046 = vmatprep.subr.bf16.mxu0 0
        %2047 = vmatpush1.bf16.xpose.msra.mxu0 0
        %2048 = vmatprep.subr.bf16.mxu0 0
        %2049 = vmatpush1.bf16.xpose.msra.mxu0 0
        %2050 = vmatprep.subr.bf16.mxu0 0
        %2051 = vmatpush1.bf16.xpose.msra.mxu0 0
        %2052 = vmatprep.subr.bf16.mxu0 0
        %2053 = vmatpush1.bf16.xpose.msra.mxu0 0
        %2054 = vmatprep.subr.bf16.mxu0 0
        %2055 = vmatpush1.bf16.xpose.msra.mxu0 0
        %2056 = vmatprep.subr.bf16.mxu0 0
        %2057 = vmatpush1.bf16.xpose.msra.mxu0 0
        %2058 = vmatprep.subr.bf16.mxu0 0
        %2059 = vmatpush1.bf16.xpose.msra.mxu0 0
        %2060 = vmatprep.mubr.bf16.mxu0 0
        %2061 = vmatmul.mubr.bf16.gmra.mrb[0].mxu0 %v2023
        %v2062 = vpop.f32.mrb[0].mxu0
        %v2063 = vadd.f32 0.0, %v2062
        %v2064 = vpop.f32.mrb[0].mxu0
        %v2065 = vpop.f32.mrb[0].mxu0
        %v2066 = vpop.f32.mrb[0].mxu0
        %2067 = vdwg.mxu0
        %v2069 = vsel %vm1929, %v1488, 0
        %v2072 = vsel %vm1929, %v1702, 0
        %2074 = vmatprep.subr.bf16.mxu0 0
        %2075 = vmatpush1.bf16.xpose.msra.mxu0 %v2072
        %2076 = vmatprep.subr.bf16.mxu0 0
        %2077 = vmatpush1.bf16.xpose.msra.mxu0 0
        %2078 = vmatprep.subr.bf16.mxu0 0
        %2079 = vmatpush1.bf16.xpose.msra.mxu0 0
        %2080 = vmatprep.subr.bf16.mxu0 0
        %2081 = vmatpush1.bf16.xpose.msra.mxu0 0
        %2082 = vmatprep.subr.bf16.mxu0 0
        %2083 = vmatpush1.bf16.xpose.msra.mxu0 0
        %2084 = vmatprep.subr.bf16.mxu0 0
        %2085 = vmatpush1.bf16.xpose.msra.mxu0 0
        %2086 = vmatprep.subr.bf16.mxu0 0
        %2087 = vmatpush1.bf16.xpose.msra.mxu0 0
        %2088 = vmatprep.subr.bf16.mxu0 0
        %2089 = vmatpush1.bf16.xpose.msra.mxu0 0
        %2090 = vmatprep.subr.bf16.mxu0 0
        %2091 = vmatpush1.bf16.xpose.msra.mxu0 0
        %2092 = vmatprep.subr.bf16.mxu0 0
        %2093 = vmatpush1.bf16.xpose.msra.mxu0 0
        %2094 = vmatprep.subr.bf16.mxu0 0
        %2095 = vmatpush1.bf16.xpose.msra.mxu0 0
        %2096 = vmatprep.subr.bf16.mxu0 0
        %2097 = vmatpush1.bf16.xpose.msra.mxu0 0
        %2098 = vmatprep.subr.bf16.mxu0 0
        %2099 = vmatpush1.bf16.xpose.msra.mxu0 0
        %2100 = vmatprep.subr.bf16.mxu0 0
        %2101 = vmatpush1.bf16.xpose.msra.mxu0 0
        %2102 = vmatprep.subr.bf16.mxu0 0
        %2103 = vmatpush1.bf16.xpose.msra.mxu0 0
        %2104 = vmatprep.subr.bf16.mxu0 0
        %2105 = vmatpush1.bf16.xpose.msra.mxu0 0
        %2106 = vmatprep.mubr.bf16.mxu0 0
        %2107 = vmatmul.mubr.bf16.gmra.mrb[0].mxu0 %v2069
        %v2108 = vpop.f32.mrb[0].mxu0
        %v2109 = vadd.f32 0.0, %v2108
        %v2110 = vpop.f32.mrb[0].mxu0
        %v2111 = vpop.f32.mrb[0].mxu0
        %v2112 = vpop.f32.mrb[0].mxu0
        %2113 = vdwg.mxu0
        %v2115 = vsel %vm1929, %v1491, 0
        %v2118 = vsel %vm1929, %v1705, 0
        %2120 = vmatprep.subr.bf16.mxu0 0
        %2121 = vmatpush1.bf16.xpose.msra.mxu0 %v2118
        %2122 = vmatprep.subr.bf16.mxu0 0
        %2123 = vmatpush1.bf16.xpose.msra.mxu0 0
        %2124 = vmatprep.subr.bf16.mxu0 0
        %2125 = vmatpush1.bf16.xpose.msra.mxu0 0
        %2126 = vmatprep.subr.bf16.mxu0 0
        %2127 = vmatpush1.bf16.xpose.msra.mxu0 0
        %2128 = vmatprep.subr.bf16.mxu0 0
        %2129 = vmatpush1.bf16.xpose.msra.mxu0 0
        %2130 = vmatprep.subr.bf16.mxu0 0
        %2131 = vmatpush1.bf16.xpose.msra.mxu0 0
        %2132 = vmatprep.subr.bf16.mxu0 0
        %2133 = vmatpush1.bf16.xpose.msra.mxu0 0
        %2134 = vmatprep.subr.bf16.mxu0 0
        %2135 = vmatpush1.bf16.xpose.msra.mxu0 0
        %2136 = vmatprep.subr.bf16.mxu0 0
        %2137 = vmatpush1.bf16.xpose.msra.mxu0 0
        %2138 = vmatprep.subr.bf16.mxu0 0
        %2139 = vmatpush1.bf16.xpose.msra.mxu0 0
        %2140 = vmatprep.subr.bf16.mxu0 0
        %2141 = vmatpush1.bf16.xpose.msra.mxu0 0
        %2142 = vmatprep.subr.bf16.mxu0 0
        %2143 = vmatpush1.bf16.xpose.msra.mxu0 0
        %2144 = vmatprep.subr.bf16.mxu0 0
        %2145 = vmatpush1.bf16.xpose.msra.mxu0 0
        %2146 = vmatprep.subr.bf16.mxu0 0
        %2147 = vmatpush1.bf16.xpose.msra.mxu0 0
        %2148 = vmatprep.subr.bf16.mxu0 0
        %2149 = vmatpush1.bf16.xpose.msra.mxu0 0
        %2150 = vmatprep.subr.bf16.mxu0 0
        %2151 = vmatpush1.bf16.xpose.msra.mxu0 0
        %2152 = vmatprep.mubr.bf16.mxu0 0
        %2153 = vmatmul.mubr.bf16.gmra.mrb[0].mxu0 %v2115
        %v2154 = vpop.f32.mrb[0].mxu0
        %v2155 = vadd.f32 0.0, %v2154
        %v2156 = vpop.f32.mrb[0].mxu0
        %v2157 = vpop.f32.mrb[0].mxu0
        %v2158 = vpop.f32.mrb[0].mxu0
        %2159 = vdwg.mxu0
        %v2161 = vsel %vm1929, %v1494, 0
        %v2164 = vsel %vm1929, %v1708, 0
        %2166 = vmatprep.subr.bf16.mxu0 0
        %2167 = vmatpush1.bf16.xpose.msra.mxu0 %v2164
        %2168 = vmatprep.subr.bf16.mxu0 0
        %2169 = vmatpush1.bf16.xpose.msra.mxu0 0
        %2170 = vmatprep.subr.bf16.mxu0 0
        %2171 = vmatpush1.bf16.xpose.msra.mxu0 0
        %2172 = vmatprep.subr.bf16.mxu0 0
        %2173 = vmatpush1.bf16.xpose.msra.mxu0 0
        %2174 = vmatprep.subr.bf16.mxu0 0
        %2175 = vmatpush1.bf16.xpose.msra.mxu0 0
        %2176 = vmatprep.subr.bf16.mxu0 0
        %2177 = vmatpush1.bf16.xpose.msra.mxu0 0
        %2178 = vmatprep.subr.bf16.mxu0 0
        %2179 = vmatpush1.bf16.xpose.msra.mxu0 0
        %2180 = vmatprep.subr.bf16.mxu0 0
        %2181 = vmatpush1.bf16.xpose.msra.mxu0 0
        %2182 = vmatprep.subr.bf16.mxu0 0
        %2183 = vmatpush1.bf16.xpose.msra.mxu0 0
        %2184 = vmatprep.subr.bf16.mxu0 0
        %2185 = vmatpush1.bf16.xpose.msra.mxu0 0
        %2186 = vmatprep.subr.bf16.mxu0 0
        %2187 = vmatpush1.bf16.xpose.msra.mxu0 0
        %2188 = vmatprep.subr.bf16.mxu0 0
        %2189 = vmatpush1.bf16.xpose.msra.mxu0 0
        %2190 = vmatprep.subr.bf16.mxu0 0
        %2191 = vmatpush1.bf16.xpose.msra.mxu0 0
        %2192 = vmatprep.subr.bf16.mxu0 0
        %2193 = vmatpush1.bf16.xpose.msra.mxu0 0
        %2194 = vmatprep.subr.bf16.mxu0 0
        %2195 = vmatpush1.bf16.xpose.msra.mxu0 0
        %2196 = vmatprep.subr.bf16.mxu0 0
        %2197 = vmatpush1.bf16.xpose.msra.mxu0 0
        %2198 = vmatprep.mubr.bf16.mxu0 0
        %2199 = vmatmul.mubr.bf16.gmra.mrb[0].mxu0 %v2161
        %v2200 = vpop.f32.mrb[0].mxu0
        %v2201 = vadd.f32 0.0, %v2200
        %v2202 = vpop.f32.mrb[0].mxu0
        %v2203 = vpop.f32.mrb[0].mxu0
        %v2204 = vpop.f32.mrb[0].mxu0
        %2205 = vdwg.mxu0
        %v2207 = vsel %vm1929, %v1497, 0
        %v2210 = vsel %vm1929, %v1711, 0
        %2212 = vmatprep.subr.bf16.mxu0 0
        %2213 = vmatpush1.bf16.xpose.msra.mxu0 %v2210
        %2214 = vmatprep.subr.bf16.mxu0 0
        %2215 = vmatpush1.bf16.xpose.msra.mxu0 0
        %2216 = vmatprep.subr.bf16.mxu0 0
        %2217 = vmatpush1.bf16.xpose.msra.mxu0 0
        %2218 = vmatprep.subr.bf16.mxu0 0
        %2219 = vmatpush1.bf16.xpose.msra.mxu0 0
        %2220 = vmatprep.subr.bf16.mxu0 0
        %2221 = vmatpush1.bf16.xpose.msra.mxu0 0
        %2222 = vmatprep.subr.bf16.mxu0 0
        %2223 = vmatpush1.bf16.xpose.msra.mxu0 0
        %2224 = vmatprep.subr.bf16.mxu0 0
        %2225 = vmatpush1.bf16.xpose.msra.mxu0 0
        %2226 = vmatprep.subr.bf16.mxu0 0
        %2227 = vmatpush1.bf16.xpose.msra.mxu0 0
        %2228 = vmatprep.subr.bf16.mxu0 0
        %2229 = vmatpush1.bf16.xpose.msra.mxu0 0
        %2230 = vmatprep.subr.bf16.mxu0 0
        %2231 = vmatpush1.bf16.xpose.msra.mxu0 0
        %2232 = vmatprep.subr.bf16.mxu0 0
        %2233 = vmatpush1.bf16.xpose.msra.mxu0 0
        %2234 = vmatprep.subr.bf16.mxu0 0
        %2235 = vmatpush1.bf16.xpose.msra.mxu0 0
        %2236 = vmatprep.subr.bf16.mxu0 0
        %2237 = vmatpush1.bf16.xpose.msra.mxu0 0
        %2238 = vmatprep.subr.bf16.mxu0 0
        %2239 = vmatpush1.bf16.xpose.msra.mxu0 0
        %2240 = vmatprep.subr.bf16.mxu0 0
        %2241 = vmatpush1.bf16.xpose.msra.mxu0 0
        %2242 = vmatprep.subr.bf16.mxu0 0
        %2243 = vmatpush1.bf16.xpose.msra.mxu0 0
        %2244 = vmatprep.mubr.bf16.mxu0 0
        %2245 = vmatmul.mubr.bf16.gmra.mrb[0].mxu0 %v2207
        %v2246 = vpop.f32.mrb[0].mxu0
        %v2247 = vadd.f32 0.0, %v2246
        %v2248 = vpop.f32.mrb[0].mxu0
        %v2249 = vpop.f32.mrb[0].mxu0
        %v2250 = vpop.f32.mrb[0].mxu0
        %2251 = vdwg.mxu0
        %v2253 = vsel %vm1929, %v1500, 0
        %v2256 = vsel %vm1929, %v1714, 0
        %2258 = vmatprep.subr.bf16.mxu0 0
        %2259 = vmatpush1.bf16.xpose.msra.mxu0 %v2256
        %2260 = vmatprep.subr.bf16.mxu0 0
        %2261 = vmatpush1.bf16.xpose.msra.mxu0 0
        %2262 = vmatprep.subr.bf16.mxu0 0
        %2263 = vmatpush1.bf16.xpose.msra.mxu0 0
        %2264 = vmatprep.subr.bf16.mxu0 0
        %2265 = vmatpush1.bf16.xpose.msra.mxu0 0
        %2266 = vmatprep.subr.bf16.mxu0 0
        %2267 = vmatpush1.bf16.xpose.msra.mxu0 0
        %2268 = vmatprep.subr.bf16.mxu0 0
        %2269 = vmatpush1.bf16.xpose.msra.mxu0 0
        %2270 = vmatprep.subr.bf16.mxu0 0
        %2271 = vmatpush1.bf16.xpose.msra.mxu0 0
        %2272 = vmatprep.subr.bf16.mxu0 0
        %2273 = vmatpush1.bf16.xpose.msra.mxu0 0
        %2274 = vmatprep.subr.bf16.mxu0 0
        %2275 = vmatpush1.bf16.xpose.msra.mxu0 0
        %2276 = vmatprep.subr.bf16.mxu0 0
        %2277 = vmatpush1.bf16.xpose.msra.mxu0 0
        %2278 = vmatprep.subr.bf16.mxu0 0
        %2279 = vmatpush1.bf16.xpose.msra.mxu0 0
        %2280 = vmatprep.subr.bf16.mxu0 0
        %2281 = vmatpush1.bf16.xpose.msra.mxu0 0
        %2282 = vmatprep.subr.bf16.mxu0 0
        %2283 = vmatpush1.bf16.xpose.msra.mxu0 0
        %2284 = vmatprep.subr.bf16.mxu0 0
        %2285 = vmatpush1.bf16.xpose.msra.mxu0 0
        %2286 = vmatprep.subr.bf16.mxu0 0
        %2287 = vmatpush1.bf16.xpose.msra.mxu0 0
        %2288 = vmatprep.subr.bf16.mxu0 0
        %2289 = vmatpush1.bf16.xpose.msra.mxu0 0
        %2290 = vmatprep.mubr.bf16.mxu0 0
        %2291 = vmatmul.mubr.bf16.gmra.mrb[0].mxu0 %v2253
        %v2292 = vpop.f32.mrb[0].mxu0
        %v2293 = vadd.f32 0.0, %v2292
        %v2294 = vpop.f32.mrb[0].mxu0
        %v2295 = vpop.f32.mrb[0].mxu0
        %v2296 = vpop.f32.mrb[0].mxu0
        %2297 = vdwg.mxu0
        %vm2298 = vcmask 64512
        %v2299 = vsel %vm2298, %v1971, -inf
        %2300 = vmax.xlane.f32.xlu0 %v2299
        %v2301 = vpop.xlane.xlu0 %2300
        %v2302 = vsel %vm2298, %v2017, -inf
        %2303 = vmax.xlane.f32.xlu0 %v2302
        %v2304 = vpop.xlane.xlu0 %2303
        %v2305 = vsel %vm2298, %v2063, -inf
        %2306 = vmax.xlane.f32.xlu0 %v2305
        %v2307 = vpop.xlane.xlu0 %2306
        %v2308 = vsel %vm2298, %v2109, -inf
        %2309 = vmax.xlane.f32.xlu0 %v2308
        %v2310 = vpop.xlane.xlu0 %2309
        %v2311 = vsel %vm2298, %v2155, -inf
        %2312 = vmax.xlane.f32.xlu0 %v2311
        %v2313 = vpop.xlane.xlu0 %2312
        %v2314 = vsel %vm2298, %v2201, -inf
        %2315 = vmax.xlane.f32.xlu0 %v2314
        %v2316 = vpop.xlane.xlu0 %2315
        %v2317 = vsel %vm2298, %v2247, -inf
        %2318 = vmax.xlane.f32.xlu0 %v2317
        %v2319 = vpop.xlane.xlu0 %2318
        %v2320 = vsel %vm2298, %v2293, -inf
        %2321 = vmax.xlane.f32.xlu0 %v2320
        %v2322 = vpop.xlane.xlu0 %2321
        %v2323 = vsub.f32 %v1971, %v2301
        %v2324 = vsub.f32 %v2017, %v2304
        %v2325 = vsub.f32 %v2063, %v2307
        %v2326 = vsub.f32 %v2109, %v2310
        %v2327 = vsub.f32 %v2155, %v2313
        %v2328 = vsub.f32 %v2201, %v2316
        %v2329 = vsub.f32 %v2247, %v2319
        %v2330 = vsub.f32 %v2293, %v2322
        %v2331 = vmul.f32 %v2323, 1.442695
        %v2332 = vpow.pop %v2331
        %v2333 = vmul.f32 %v2324, 1.442695
        %v2334 = vpow.pop %v2333
        %v2335 = vmul.f32 %v2325, 1.442695
        %v2336 = vpow.pop %v2335
        %v2337 = vmul.f32 %v2326, 1.442695
        %v2338 = vpow.pop %v2337
        %v2339 = vmul.f32 %v2327, 1.442695
        %v2340 = vpow.pop %v2339
        %v2341 = vmul.f32 %v2328, 1.442695
        %v2342 = vpow.pop %v2341
        %v2343 = vmul.f32 %v2329, 1.442695
        %v2344 = vpow.pop %v2343
        %v2345 = vmul.f32 %v2330, 1.442695
        %v2346 = vpow.pop %v2345
        %v2347 = vsel %vm2298, %v2332, 0.0
        %2348 = vadd.xlane.f32.xlu0 %v2347
        %v2349 = vpop.xlane.xlu0 %2348
        %v2350 = vsel %vm2298, %v2334, 0.0
        %2351 = vadd.xlane.f32.xlu0 %v2350
        %v2352 = vpop.xlane.xlu0 %2351
        %v2353 = vsel %vm2298, %v2336, 0.0
        %2354 = vadd.xlane.f32.xlu0 %v2353
        %v2355 = vpop.xlane.xlu0 %2354
        %v2356 = vsel %vm2298, %v2338, 0.0
        %2357 = vadd.xlane.f32.xlu0 %v2356
        %v2358 = vpop.xlane.xlu0 %2357
        %v2359 = vsel %vm2298, %v2340, 0.0
        %2360 = vadd.xlane.f32.xlu0 %v2359
        %v2361 = vpop.xlane.xlu0 %2360
        %v2362 = vsel %vm2298, %v2342, 0.0
        %2363 = vadd.xlane.f32.xlu0 %v2362
        %v2364 = vpop.xlane.xlu0 %2363
        %v2365 = vsel %vm2298, %v2344, 0.0
        %2366 = vadd.xlane.f32.xlu0 %v2365
        %v2367 = vpop.xlane.xlu0 %2366
        %v2368 = vsel %vm2298, %v2346, 0.0
        %2369 = vadd.xlane.f32.xlu0 %v2368
        %v2370 = vpop.xlane.xlu0 %2369
        %v2371 = vrcp.pop %v2349
        %v2372 = vrcp.pop %v2352
        %v2373 = vrcp.pop %v2355
        %v2374 = vrcp.pop %v2358
        %v2375 = vrcp.pop %v2361
        %v2376 = vrcp.pop %v2364
        %v2377 = vrcp.pop %v2367
        %v2378 = vrcp.pop %v2370
        %v2379 = vmul.f32 %v2332, %v2371
        %v2380 = vmul.f32 %v2334, %v2372
        %v2381 = vmul.f32 %v2336, %v2373
        %v2382 = vmul.f32 %v2338, %v2374
        %v2383 = vmul.f32 %v2340, %v2375
        %v2384 = vmul.f32 %v2342, %v2376
        %v2385 = vmul.f32 %v2344, %v2377
        %v2386 = vmul.f32 %v2346, %v2378
        %v2387 = vpack.c.bf16 %v2379, %v2379
        %v2388 = vpack.c.bf16 %v2380, %v2380
        %v2389 = vpack.c.bf16 %v2381, %v2381
        %v2390 = vpack.c.bf16 %v2382, %v2382
        %v2391 = vpack.c.bf16 %v2383, %v2383
        %v2392 = vpack.c.bf16 %v2384, %v2384
        %v2393 = vpack.c.bf16 %v2385, %v2385
        %v2394 = vpack.c.bf16 %v2386, %v2386
        %v2396 = vsel %vm2298, %v2387, 0
        %vm2398 = vcmask 1043456
        %v2400 = vsel %vm2398, %v1907, 0
        %2402 = vmatprep.subr.bf16.mxu0 0
        %2403 = vmatpush1.bf16.msra.mxu0 %v2400
        %2404 = vmatprep.subr.bf16.mxu0 0
        %2405 = vmatpush1.bf16.msra.mxu0 0
        %2406 = vmatprep.subr.bf16.mxu0 0
        %2407 = vmatpush1.bf16.msra.mxu0 0
        %2408 = vmatprep.subr.bf16.mxu0 0
        %2409 = vmatpush1.bf16.msra.mxu0 0
        %2410 = vmatprep.subr.bf16.mxu0 0
        %2411 = vmatpush1.bf16.msra.mxu0 0
        %2412 = vmatprep.subr.bf16.mxu0 0
        %2413 = vmatpush1.bf16.msra.mxu0 0
        %2414 = vmatprep.subr.bf16.mxu0 0
        %2415 = vmatpush1.bf16.msra.mxu0 0
        %2416 = vmatprep.subr.bf16.mxu0 0
        %2417 = vmatpush1.bf16.msra.mxu0 0
        %2418 = vmatprep.subr.bf16.mxu0 0
        %2419 = vmatpush1.bf16.msra.mxu0 0
        %2420 = vmatprep.subr.bf16.mxu0 0
        %2421 = vmatpush1.bf16.msra.mxu0 0
        %2422 = vmatprep.subr.bf16.mxu0 0
        %2423 = vmatpush1.bf16.msra.mxu0 0
        %2424 = vmatprep.subr.bf16.mxu0 0
        %2425 = vmatpush1.bf16.msra.mxu0 0
        %2426 = vmatprep.subr.bf16.mxu0 0
        %2427 = vmatpush1.bf16.msra.mxu0 0
        %2428 = vmatprep.subr.bf16.mxu0 0
        %2429 = vmatpush1.bf16.msra.mxu0 0
        %2430 = vmatprep.subr.bf16.mxu0 0
        %2431 = vmatpush1.bf16.msra.mxu0 0
        %2432 = vmatprep.subr.bf16.mxu0 0
        %2433 = vmatpush1.bf16.msra.mxu0 0
        %2434 = vmatprep.mubr.bf16.mxu0 0
        %2435 = vmatmul.mubr.bf16.gmra.mrb[0].mxu0 %v2396
        %v2436 = vpop.f32.mrb[0].mxu0
        %v2437 = vadd.f32 0.0, %v2436
        %v2438 = vpop.f32.mrb[0].mxu0
        %v2439 = vpop.f32.mrb[0].mxu0
        %v2440 = vpop.f32.mrb[0].mxu0
        %2441 = vdwg.mxu0
        %v2443 = vsel %vm2298, %v2388, 0
        %v2446 = vsel %vm2398, %v1910, 0
        %2448 = vmatprep.subr.bf16.mxu0 0
        %2449 = vmatpush1.bf16.msra.mxu0 %v2446
        %2450 = vmatprep.subr.bf16.mxu0 0
        %2451 = vmatpush1.bf16.msra.mxu0 0
        %2452 = vmatprep.subr.bf16.mxu0 0
        %2453 = vmatpush1.bf16.msra.mxu0 0
        %2454 = vmatprep.subr.bf16.mxu0 0
        %2455 = vmatpush1.bf16.msra.mxu0 0
        %2456 = vmatprep.subr.bf16.mxu0 0
        %2457 = vmatpush1.bf16.msra.mxu0 0
        %2458 = vmatprep.subr.bf16.mxu0 0
        %2459 = vmatpush1.bf16.msra.mxu0 0
        %2460 = vmatprep.subr.bf16.mxu0 0
        %2461 = vmatpush1.bf16.msra.mxu0 0
        %2462 = vmatprep.subr.bf16.mxu0 0
        %2463 = vmatpush1.bf16.msra.mxu0 0
        %2464 = vmatprep.subr.bf16.mxu0 0
        %2465 = vmatpush1.bf16.msra.mxu0 0
        %2466 = vmatprep.subr.bf16.mxu0 0
        %2467 = vmatpush1.bf16.msra.mxu0 0
        %2468 = vmatprep.subr.bf16.mxu0 0
        %2469 = vmatpush1.bf16.msra.mxu0 0
        %2470 = vmatprep.subr.bf16.mxu0 0
        %2471 = vmatpush1.bf16.msra.mxu0 0
        %2472 = vmatprep.subr.bf16.mxu0 0
        %2473 = vmatpush1.bf16.msra.mxu0 0
        %2474 = vmatprep.subr.bf16.mxu0 0
        %2475 = vmatpush1.bf16.msra.mxu0 0
        %2476 = vmatprep.subr.bf16.mxu0 0
        %2477 = vmatpush1.bf16.msra.mxu0 0
        %2478 = vmatprep.subr.bf16.mxu0 0
        %2479 = vmatpush1.bf16.msra.mxu0 0
        %2480 = vmatprep.mubr.bf16.mxu0 0
        %2481 = vmatmul.mubr.bf16.gmra.mrb[0].mxu0 %v2443
        %v2482 = vpop.f32.mrb[0].mxu0
        %v2483 = vadd.f32 0.0, %v2482
        %v2484 = vpop.f32.mrb[0].mxu0
        %v2485 = vpop.f32.mrb[0].mxu0
        %v2486 = vpop.f32.mrb[0].mxu0
        %2487 = vdwg.mxu0
        %v2489 = vsel %vm2298, %v2389, 0
        %v2492 = vsel %vm2398, %v1913, 0
        %2494 = vmatprep.subr.bf16.mxu0 0
        %2495 = vmatpush1.bf16.msra.mxu0 %v2492
        %2496 = vmatprep.subr.bf16.mxu0 0
        %2497 = vmatpush1.bf16.msra.mxu0 0
        %2498 = vmatprep.subr.bf16.mxu0 0
        %2499 = vmatpush1.bf16.msra.mxu0 0
        %2500 = vmatprep.subr.bf16.mxu0 0
        %2501 = vmatpush1.bf16.msra.mxu0 0
        %2502 = vmatprep.subr.bf16.mxu0 0
        %2503 = vmatpush1.bf16.msra.mxu0 0
        %2504 = vmatprep.subr.bf16.mxu0 0
        %2505 = vmatpush1.bf16.msra.mxu0 0
        %2506 = vmatprep.subr.bf16.mxu0 0
        %2507 = vmatpush1.bf16.msra.mxu0 0
        %2508 = vmatprep.subr.bf16.mxu0 0
        %2509 = vmatpush1.bf16.msra.mxu0 0
        %2510 = vmatprep.subr.bf16.mxu0 0
        %2511 = vmatpush1.bf16.msra.mxu0 0
        %2512 = vmatprep.subr.bf16.mxu0 0
        %2513 = vmatpush1.bf16.msra.mxu0 0
        %2514 = vmatprep.subr.bf16.mxu0 0
        %2515 = vmatpush1.bf16.msra.mxu0 0
        %2516 = vmatprep.subr.bf16.mxu0 0
        %2517 = vmatpush1.bf16.msra.mxu0 0
        %2518 = vmatprep.subr.bf16.mxu0 0
        %2519 = vmatpush1.bf16.msra.mxu0 0
        %2520 = vmatprep.subr.bf16.mxu0 0
        %2521 = vmatpush1.bf16.msra.mxu0 0
        %2522 = vmatprep.subr.bf16.mxu0 0
        %2523 = vmatpush1.bf16.msra.mxu0 0
        %2524 = vmatprep.subr.bf16.mxu0 0
        %2525 = vmatpush1.bf16.msra.mxu0 0
        %2526 = vmatprep.mubr.bf16.mxu0 0
        %2527 = vmatmul.mubr.bf16.gmra.mrb[0].mxu0 %v2489
        %v2528 = vpop.f32.mrb[0].mxu0
        %v2529 = vadd.f32 0.0, %v2528
        %v2530 = vpop.f32.mrb[0].mxu0
        %v2531 = vpop.f32.mrb[0].mxu0
        %v2532 = vpop.f32.mrb[0].mxu0
        %2533 = vdwg.mxu0
        %v2535 = vsel %vm2298, %v2390, 0
        %v2538 = vsel %vm2398, %v1916, 0
        %2540 = vmatprep.subr.bf16.mxu0 0
        %2541 = vmatpush1.bf16.msra.mxu0 %v2538
        %2542 = vmatprep.subr.bf16.mxu0 0
        %2543 = vmatpush1.bf16.msra.mxu0 0
        %2544 = vmatprep.subr.bf16.mxu0 0
        %2545 = vmatpush1.bf16.msra.mxu0 0
        %2546 = vmatprep.subr.bf16.mxu0 0
        %2547 = vmatpush1.bf16.msra.mxu0 0
        %2548 = vmatprep.subr.bf16.mxu0 0
        %2549 = vmatpush1.bf16.msra.mxu0 0
        %2550 = vmatprep.subr.bf16.mxu0 0
        %2551 = vmatpush1.bf16.msra.mxu0 0
        %2552 = vmatprep.subr.bf16.mxu0 0
        %2553 = vmatpush1.bf16.msra.mxu0 0
        %2554 = vmatprep.subr.bf16.mxu0 0
        %2555 = vmatpush1.bf16.msra.mxu0 0
        %2556 = vmatprep.subr.bf16.mxu0 0
        %2557 = vmatpush1.bf16.msra.mxu0 0
        %2558 = vmatprep.subr.bf16.mxu0 0
        %2559 = vmatpush1.bf16.msra.mxu0 0
        %2560 = vmatprep.subr.bf16.mxu0 0
        %2561 = vmatpush1.bf16.msra.mxu0 0
        %2562 = vmatprep.subr.bf16.mxu0 0
        %2563 = vmatpush1.bf16.msra.mxu0 0
        %2564 = vmatprep.subr.bf16.mxu0 0
        %2565 = vmatpush1.bf16.msra.mxu0 0
        %2566 = vmatprep.subr.bf16.mxu0 0
        %2567 = vmatpush1.bf16.msra.mxu0 0
        %2568 = vmatprep.subr.bf16.mxu0 0
        %2569 = vmatpush1.bf16.msra.mxu0 0
        %2570 = vmatprep.subr.bf16.mxu0 0
        %2571 = vmatpush1.bf16.msra.mxu0 0
        %2572 = vmatprep.mubr.bf16.mxu0 0
        %2573 = vmatmul.mubr.bf16.gmra.mrb[0].mxu0 %v2535
        %v2574 = vpop.f32.mrb[0].mxu0
        %v2575 = vadd.f32 0.0, %v2574
        %v2576 = vpop.f32.mrb[0].mxu0
        %v2577 = vpop.f32.mrb[0].mxu0
        %v2578 = vpop.f32.mrb[0].mxu0
        %2579 = vdwg.mxu0
        %v2581 = vsel %vm2298, %v2391, 0
        %v2584 = vsel %vm2398, %v1919, 0
        %2586 = vmatprep.subr.bf16.mxu0 0
        %2587 = vmatpush1.bf16.msra.mxu0 %v2584
        %2588 = vmatprep.subr.bf16.mxu0 0
        %2589 = vmatpush1.bf16.msra.mxu0 0
        %2590 = vmatprep.subr.bf16.mxu0 0
        %2591 = vmatpush1.bf16.msra.mxu0 0
        %2592 = vmatprep.subr.bf16.mxu0 0
        %2593 = vmatpush1.bf16.msra.mxu0 0
        %2594 = vmatprep.subr.bf16.mxu0 0
        %2595 = vmatpush1.bf16.msra.mxu0 0
        %2596 = vmatprep.subr.bf16.mxu0 0
        %2597 = vmatpush1.bf16.msra.mxu0 0
        %2598 = vmatprep.subr.bf16.mxu0 0
        %2599 = vmatpush1.bf16.msra.mxu0 0
        %2600 = vmatprep.subr.bf16.mxu0 0
        %2601 = vmatpush1.bf16.msra.mxu0 0
        %2602 = vmatprep.subr.bf16.mxu0 0
        %2603 = vmatpush1.bf16.msra.mxu0 0
        %2604 = vmatprep.subr.bf16.mxu0 0
        %2605 = vmatpush1.bf16.msra.mxu0 0
        %2606 = vmatprep.subr.bf16.mxu0 0
        %2607 = vmatpush1.bf16.msra.mxu0 0
        %2608 = vmatprep.subr.bf16.mxu0 0
        %2609 = vmatpush1.bf16.msra.mxu0 0
        %2610 = vmatprep.subr.bf16.mxu0 0
        %2611 = vmatpush1.bf16.msra.mxu0 0
        %2612 = vmatprep.subr.bf16.mxu0 0
        %2613 = vmatpush1.bf16.msra.mxu0 0
        %2614 = vmatprep.subr.bf16.mxu0 0
        %2615 = vmatpush1.bf16.msra.mxu0 0
        %2616 = vmatprep.subr.bf16.mxu0 0
        %2617 = vmatpush1.bf16.msra.mxu0 0
        %2618 = vmatprep.mubr.bf16.mxu0 0
        %2619 = vmatmul.mubr.bf16.gmra.mrb[0].mxu0 %v2581
        %v2620 = vpop.f32.mrb[0].mxu0
        %v2621 = vadd.f32 0.0, %v2620
        %v2622 = vpop.f32.mrb[0].mxu0
        %v2623 = vpop.f32.mrb[0].mxu0
        %v2624 = vpop.f32.mrb[0].mxu0
        %2625 = vdwg.mxu0
        %v2627 = vsel %vm2298, %v2392, 0
        %v2630 = vsel %vm2398, %v1922, 0
        %2632 = vmatprep.subr.bf16.mxu0 0
        %2633 = vmatpush1.bf16.msra.mxu0 %v2630
        %2634 = vmatprep.subr.bf16.mxu0 0
        %2635 = vmatpush1.bf16.msra.mxu0 0
        %2636 = vmatprep.subr.bf16.mxu0 0
        %2637 = vmatpush1.bf16.msra.mxu0 0
        %2638 = vmatprep.subr.bf16.mxu0 0
        %2639 = vmatpush1.bf16.msra.mxu0 0
        %2640 = vmatprep.subr.bf16.mxu0 0
        %2641 = vmatpush1.bf16.msra.mxu0 0
        %2642 = vmatprep.subr.bf16.mxu0 0
        %2643 = vmatpush1.bf16.msra.mxu0 0
        %2644 = vmatprep.subr.bf16.mxu0 0
        %2645 = vmatpush1.bf16.msra.mxu0 0
        %2646 = vmatprep.subr.bf16.mxu0 0
        %2647 = vmatpush1.bf16.msra.mxu0 0
        %2648 = vmatprep.subr.bf16.mxu0 0
        %2649 = vmatpush1.bf16.msra.mxu0 0
        %2650 = vmatprep.subr.bf16.mxu0 0
        %2651 = vmatpush1.bf16.msra.mxu0 0
        %2652 = vmatprep.subr.bf16.mxu0 0
        %2653 = vmatpush1.bf16.msra.mxu0 0
        %2654 = vmatprep.subr.bf16.mxu0 0
        %2655 = vmatpush1.bf16.msra.mxu0 0
        %2656 = vmatprep.subr.bf16.mxu0 0
        %2657 = vmatpush1.bf16.msra.mxu0 0
        %2658 = vmatprep.subr.bf16.mxu0 0
        %2659 = vmatpush1.bf16.msra.mxu0 0
        %2660 = vmatprep.subr.bf16.mxu0 0
        %2661 = vmatpush1.bf16.msra.mxu0 0
        %2662 = vmatprep.subr.bf16.mxu0 0
        %2663 = vmatpush1.bf16.msra.mxu0 0
        %2664 = vmatprep.mubr.bf16.mxu0 0
        %2665 = vmatmul.mubr.bf16.gmra.mrb[0].mxu0 %v2627
        %v2666 = vpop.f32.mrb[0].mxu0
        %v2667 = vadd.f32 0.0, %v2666
        %v2668 = vpop.f32.mrb[0].mxu0
        %v2669 = vpop.f32.mrb[0].mxu0
        %v2670 = vpop.f32.mrb[0].mxu0
        %2671 = vdwg.mxu0
        %v2673 = vsel %vm2298, %v2393, 0
        %v2676 = vsel %vm2398, %v1925, 0
        %2678 = vmatprep.subr.bf16.mxu0 0
        %2679 = vmatpush1.bf16.msra.mxu0 %v2676
        %2680 = vmatprep.subr.bf16.mxu0 0
        %2681 = vmatpush1.bf16.msra.mxu0 0
        %2682 = vmatprep.subr.bf16.mxu0 0
        %2683 = vmatpush1.bf16.msra.mxu0 0
        %2684 = vmatprep.subr.bf16.mxu0 0
        %2685 = vmatpush1.bf16.msra.mxu0 0
        %2686 = vmatprep.subr.bf16.mxu0 0
        %2687 = vmatpush1.bf16.msra.mxu0 0
        %2688 = vmatprep.subr.bf16.mxu0 0
        %2689 = vmatpush1.bf16.msra.mxu0 0
        %2690 = vmatprep.subr.bf16.mxu0 0
        %2691 = vmatpush1.bf16.msra.mxu0 0
        %2692 = vmatprep.subr.bf16.mxu0 0
        %2693 = vmatpush1.bf16.msra.mxu0 0
        %2694 = vmatprep.subr.bf16.mxu0 0
        %2695 = vmatpush1.bf16.msra.mxu0 0
        %2696 = vmatprep.subr.bf16.mxu0 0
        %2697 = vmatpush1.bf16.msra.mxu0 0
        %2698 = vmatprep.subr.bf16.mxu0 0
        %2699 = vmatpush1.bf16.msra.mxu0 0
        %2700 = vmatprep.subr.bf16.mxu0 0
        %2701 = vmatpush1.bf16.msra.mxu0 0
        %2702 = vmatprep.subr.bf16.mxu0 0
        %2703 = vmatpush1.bf16.msra.mxu0 0
        %2704 = vmatprep.subr.bf16.mxu0 0
        %2705 = vmatpush1.bf16.msra.mxu0 0
        %2706 = vmatprep.subr.bf16.mxu0 0
        %2707 = vmatpush1.bf16.msra.mxu0 0
        %2708 = vmatprep.subr.bf16.mxu0 0
        %2709 = vmatpush1.bf16.msra.mxu0 0
        %2710 = vmatprep.mubr.bf16.mxu0 0
        %2711 = vmatmul.mubr.bf16.gmra.mrb[0].mxu0 %v2673
        %v2712 = vpop.f32.mrb[0].mxu0
        %v2713 = vadd.f32 0.0, %v2712
        %v2714 = vpop.f32.mrb[0].mxu0
        %v2715 = vpop.f32.mrb[0].mxu0
        %v2716 = vpop.f32.mrb[0].mxu0
        %2717 = vdwg.mxu0
        %v2719 = vsel %vm2298, %v2394, 0
        %v2722 = vsel %vm2398, %v1928, 0
        %2724 = vmatprep.subr.bf16.mxu0 0
        %2725 = vmatpush1.bf16.msra.mxu0 %v2722
        %2726 = vmatprep.subr.bf16.mxu0 0
        %2727 = vmatpush1.bf16.msra.mxu0 0
        %2728 = vmatprep.subr.bf16.mxu0 0
        %2729 = vmatpush1.bf16.msra.mxu0 0
        %2730 = vmatprep.subr.bf16.mxu0 0
        %2731 = vmatpush1.bf16.msra.mxu0 0
        %2732 = vmatprep.subr.bf16.mxu0 0
        %2733 = vmatpush1.bf16.msra.mxu0 0
        %2734 = vmatprep.subr.bf16.mxu0 0
        %2735 = vmatpush1.bf16.msra.mxu0 0
        %2736 = vmatprep.subr.bf16.mxu0 0
        %2737 = vmatpush1.bf16.msra.mxu0 0
        %2738 = vmatprep.subr.bf16.mxu0 0
        %2739 = vmatpush1.bf16.msra.mxu0 0
        %2740 = vmatprep.subr.bf16.mxu0 0
        %2741 = vmatpush1.bf16.msra.mxu0 0
        %2742 = vmatprep.subr.bf16.mxu0 0
        %2743 = vmatpush1.bf16.msra.mxu0 0
        %2744 = vmatprep.subr.bf16.mxu0 0
        %2745 = vmatpush1.bf16.msra.mxu0 0
        %2746 = vmatprep.subr.bf16.mxu0 0
        %2747 = vmatpush1.bf16.msra.mxu0 0
        %2748 = vmatprep.subr.bf16.mxu0 0
        %2749 = vmatpush1.bf16.msra.mxu0 0
        %2750 = vmatprep.subr.bf16.mxu0 0
        %2751 = vmatpush1.bf16.msra.mxu0 0
        %2752 = vmatprep.subr.bf16.mxu0 0
        %2753 = vmatpush1.bf16.msra.mxu0 0
        %2754 = vmatprep.subr.bf16.mxu0 0
        %2755 = vmatpush1.bf16.msra.mxu0 0
        %2756 = vmatprep.mubr.bf16.mxu0 0
        %2757 = vmatmul.mubr.bf16.gmra.mrb[0].mxu0 %v2719
        %v2758 = vpop.f32.mrb[0].mxu0
        %v2759 = vadd.f32 0.0, %v2758
        %v2760 = vpop.f32.mrb[0].mxu0
        %v2761 = vpop.f32.mrb[0].mxu0
        %v2762 = vpop.f32.mrb[0].mxu0
        %2763 = vdwg.mxu0
        %v2764 = vcombine.low %v2437, %v2529
        %v2765 = vcombine.high %v2437, %v2529
        %v2767 = vunpack.c.l.s4 1983009808
        %v2768 = vunpack.c.0.s8 %v2767
        %v2769 = vlaneseq
        %v2770 = vshrl.u32 %v2769, 7
        %v2771 = vsub.s32 %v2768, %v2770
        %v2772 = vrot.slane %v2764, %v2771
        %v2774 = vunpack.c.l.s4 1983009808
        %v2775 = vunpack.c.0.s8 %v2774
        %v2776 = vlaneseq
        %v2777 = vshrl.u32 %v2776, 7
        %v2778 = vsub.s32 %v2775, %v2777
        %v2779 = vrot.slane %v2765, %v2778
        %v2780 = vcombine.low %v2483, %v2575
        %v2781 = vcombine.high %v2483, %v2575
        %v2783 = vunpack.c.l.s4 1983009808
        %v2784 = vunpack.c.0.s8 %v2783
        %v2785 = vlaneseq
        %v2786 = vshrl.u32 %v2785, 7
        %v2787 = vsub.s32 %v2784, %v2786
        %v2788 = vrot.slane %v2780, %v2787
        %v2790 = vunpack.c.l.s4 1983009808
        %v2791 = vunpack.c.0.s8 %v2790
        %v2792 = vlaneseq
        %v2793 = vshrl.u32 %v2792, 7
        %v2794 = vsub.s32 %v2791, %v2793
        %v2795 = vrot.slane %v2781, %v2794
        %v2796 = vcombine.low %v2621, %v2713
        %v2797 = vcombine.high %v2621, %v2713
        %v2799 = vunpack.c.l.s4 1983009808
        %v2800 = vunpack.c.0.s8 %v2799
        %v2801 = vlaneseq
        %v2802 = vshrl.u32 %v2801, 7
        %v2803 = vsub.s32 %v2800, %v2802
        %v2804 = vrot.slane %v2796, %v2803
        %v2806 = vunpack.c.l.s4 1983009808
        %v2807 = vunpack.c.0.s8 %v2806
        %v2808 = vlaneseq
        %v2809 = vshrl.u32 %v2808, 7
        %v2810 = vsub.s32 %v2807, %v2809
        %v2811 = vrot.slane %v2797, %v2810
        %v2812 = vcombine.low %v2667, %v2759
        %v2813 = vcombine.high %v2667, %v2759
        %v2815 = vunpack.c.l.s4 1983009808
        %v2816 = vunpack.c.0.s8 %v2815
        %v2817 = vlaneseq
        %v2818 = vshrl.u32 %v2817, 7
        %v2819 = vsub.s32 %v2816, %v2818
        %v2820 = vrot.slane %v2812, %v2819
        %v2822 = vunpack.c.l.s4 1983009808
        %v2823 = vunpack.c.0.s8 %v2822
        %v2824 = vlaneseq
        %v2825 = vshrl.u32 %v2824, 7
        %v2826 = vsub.s32 %v2823, %v2825
        %v2827 = vrot.slane %v2813, %v2826
        %v2828 = vcombine.low %v2772, %v2788
        %v2829 = vcombine.high %v2772, %v2788
        %v2831 = vunpack.c.l.s4 1934713408
        %v2832 = vunpack.c.0.s8 %v2831
        %v2833 = vlaneseq
        %v2834 = vshrl.u32 %v2833, 7
        %v2835 = vsub.s32 %v2832, %v2834
        %v2836 = vrot.slane %v2828, %v2835
        %v2838 = vunpack.c.l.s4 1934713408
        %v2839 = vunpack.c.0.s8 %v2838
        %v2840 = vlaneseq
        %v2841 = vshrl.u32 %v2840, 7
        %v2842 = vsub.s32 %v2839, %v2841
        %v2843 = vrot.slane %v2829, %v2842
        %v2844 = vcombine.low %v2779, %v2795
        %v2845 = vcombine.high %v2779, %v2795
        %v2847 = vunpack.c.l.s4 1934713408
        %v2848 = vunpack.c.0.s8 %v2847
        %v2849 = vlaneseq
        %v2850 = vshrl.u32 %v2849, 7
        %v2851 = vsub.s32 %v2848, %v2850
        %v2852 = vrot.slane %v2844, %v2851
        %v2854 = vunpack.c.l.s4 1934713408
        %v2855 = vunpack.c.0.s8 %v2854
        %v2856 = vlaneseq
        %v2857 = vshrl.u32 %v2856, 7
        %v2858 = vsub.s32 %v2855, %v2857
        %v2859 = vrot.slane %v2845, %v2858
        %v2860 = vcombine.low %v2804, %v2820
        %v2861 = vcombine.high %v2804, %v2820
        %v2863 = vunpack.c.l.s4 1934713408
        %v2864 = vunpack.c.0.s8 %v2863
        %v2865 = vlaneseq
        %v2866 = vshrl.u32 %v2865, 7
        %v2867 = vsub.s32 %v2864, %v2866
        %v2868 = vrot.slane %v2860, %v2867
        %v2870 = vunpack.c.l.s4 1934713408
        %v2871 = vunpack.c.0.s8 %v2870
        %v2872 = vlaneseq
        %v2873 = vshrl.u32 %v2872, 7
        %v2874 = vsub.s32 %v2871, %v2873
        %v2875 = vrot.slane %v2861, %v2874
        %v2876 = vcombine.low %v2811, %v2827
        %v2877 = vcombine.high %v2811, %v2827
        %v2879 = vunpack.c.l.s4 1934713408
        %v2880 = vunpack.c.0.s8 %v2879
        %v2881 = vlaneseq
        %v2882 = vshrl.u32 %v2881, 7
        %v2883 = vsub.s32 %v2880, %v2882
        %v2884 = vrot.slane %v2876, %v2883
        %v2886 = vunpack.c.l.s4 1934713408
        %v2887 = vunpack.c.0.s8 %v2886
        %v2888 = vlaneseq
        %v2889 = vshrl.u32 %v2888, 7
        %v2890 = vsub.s32 %v2887, %v2889
        %v2891 = vrot.slane %v2877, %v2890
        %v2892 = vcombine.low %v2836, %v2868
        %v2893 = vcombine.high %v2836, %v2868
        %v2894 = vcombine.low %v2843, %v2875
        %v2895 = vcombine.high %v2843, %v2875
        %v2896 = vcombine.low %v2852, %v2884
        %v2897 = vcombine.high %v2852, %v2884
        %v2898 = vcombine.low %v2859, %v2891
        %v2899 = vcombine.high %v2859, %v2891
        %v2900 = vcombine.low %v2892, %v2894
        %v2901 = vcombine.high %v2892, %v2894
        %v2903 = vunpack.c.l.s4 1983009808
        %v2904 = vunpack.c.0.s8 %v2903
        %v2905 = vlaneseq
        %v2906 = vshrl.u32 %v2905, 7
        %v2907 = vsub.s32 %v2904, %v2906
        %v2908 = vrot.slane %v2900, %v2907
        %v2910 = vunpack.c.l.s4 1983009808
        %v2911 = vunpack.c.0.s8 %v2910
        %v2912 = vlaneseq
        %v2913 = vshrl.u32 %v2912, 7
        %v2914 = vsub.s32 %v2911, %v2913
        %v2915 = vrot.slane %v2901, %v2914
        %v2916 = vcombine.low %v2893, %v2895
        %v2917 = vcombine.high %v2893, %v2895
        %v2919 = vunpack.c.l.s4 1983009808
        %v2920 = vunpack.c.0.s8 %v2919
        %v2921 = vlaneseq
        %v2922 = vshrl.u32 %v2921, 7
        %v2923 = vsub.s32 %v2920, %v2922
        %v2924 = vrot.slane %v2916, %v2923
        %v2926 = vunpack.c.l.s4 1983009808
        %v2927 = vunpack.c.0.s8 %v2926
        %v2928 = vlaneseq
        %v2929 = vshrl.u32 %v2928, 7
        %v2930 = vsub.s32 %v2927, %v2929
        %v2931 = vrot.slane %v2917, %v2930
        %v2932 = vcombine.low %v2896, %v2898
        %v2933 = vcombine.high %v2896, %v2898
        %v2935 = vunpack.c.l.s4 1983009808
        %v2936 = vunpack.c.0.s8 %v2935
        %v2937 = vlaneseq
        %v2938 = vshrl.u32 %v2937, 7
        %v2939 = vsub.s32 %v2936, %v2938
        %v2940 = vrot.slane %v2932, %v2939
        %v2942 = vunpack.c.l.s4 1983009808
        %v2943 = vunpack.c.0.s8 %v2942
        %v2944 = vlaneseq
        %v2945 = vshrl.u32 %v2944, 7
        %v2946 = vsub.s32 %v2943, %v2945
        %v2947 = vrot.slane %v2933, %v2946
        %v2948 = vcombine.low %v2897, %v2899
        %v2949 = vcombine.high %v2897, %v2899
        %v2951 = vunpack.c.l.s4 1983009808
        %v2952 = vunpack.c.0.s8 %v2951
        %v2953 = vlaneseq
        %v2954 = vshrl.u32 %v2953, 7
        %v2955 = vsub.s32 %v2952, %v2954
        %v2956 = vrot.slane %v2948, %v2955
        %v2958 = vunpack.c.l.s4 1983009808
        %v2959 = vunpack.c.0.s8 %v2958
        %v2960 = vlaneseq
        %v2961 = vshrl.u32 %v2960, 7
        %v2962 = vsub.s32 %v2959, %v2961
        %v2963 = vrot.slane %v2949, %v2962
        %v2964 = vcombine.low %v2908, %v2924
        %v2965 = vcombine.high %v2908, %v2924
        %v2967 = vunpack.c.l.s4 1934713408
        %v2968 = vunpack.c.0.s8 %v2967
        %v2969 = vlaneseq
        %v2970 = vshrl.u32 %v2969, 7
        %v2971 = vsub.s32 %v2968, %v2970
        %v2972 = vrot.slane %v2964, %v2971
        %v2974 = vunpack.c.l.s4 1934713408
        %v2975 = vunpack.c.0.s8 %v2974
        %v2976 = vlaneseq
        %v2977 = vshrl.u32 %v2976, 7
        %v2978 = vsub.s32 %v2975, %v2977
        %v2979 = vrot.slane %v2965, %v2978
        %v2980 = vcombine.low %v2915, %v2931
        %v2981 = vcombine.high %v2915, %v2931
        %v2983 = vunpack.c.l.s4 1934713408
        %v2984 = vunpack.c.0.s8 %v2983
        %v2985 = vlaneseq
        %v2986 = vshrl.u32 %v2985, 7
        %v2987 = vsub.s32 %v2984, %v2986
        %v2988 = vrot.slane %v2980, %v2987
        %v2990 = vunpack.c.l.s4 1934713408
        %v2991 = vunpack.c.0.s8 %v2990
        %v2992 = vlaneseq
        %v2993 = vshrl.u32 %v2992, 7
        %v2994 = vsub.s32 %v2991, %v2993
        %v2995 = vrot.slane %v2981, %v2994
        %v2996 = vcombine.low %v2940, %v2956
        %v2997 = vcombine.high %v2940, %v2956
        %v2999 = vunpack.c.l.s4 1934713408
        %v3000 = vunpack.c.0.s8 %v2999
        %v3001 = vlaneseq
        %v3002 = vshrl.u32 %v3001, 7
        %v3003 = vsub.s32 %v3000, %v3002
        %v3004 = vrot.slane %v2996, %v3003
        %v3006 = vunpack.c.l.s4 1934713408
        %v3007 = vunpack.c.0.s8 %v3006
        %v3008 = vlaneseq
        %v3009 = vshrl.u32 %v3008, 7
        %v3010 = vsub.s32 %v3007, %v3009
        %v3011 = vrot.slane %v2997, %v3010
        %v3012 = vcombine.low %v2947, %v2963
        %v3013 = vcombine.high %v2947, %v2963
        %v3015 = vunpack.c.l.s4 1934713408
        %v3016 = vunpack.c.0.s8 %v3015
        %v3017 = vlaneseq
        %v3018 = vshrl.u32 %v3017, 7
        %v3019 = vsub.s32 %v3016, %v3018
        %v3020 = vrot.slane %v3012, %v3019
        %v3022 = vunpack.c.l.s4 1934713408
        %v3023 = vunpack.c.0.s8 %v3022
        %v3024 = vlaneseq
        %v3025 = vshrl.u32 %v3024, 7
        %v3026 = vsub.s32 %v3023, %v3025
        %v3027 = vrot.slane %v3013, %v3026
        %v3028 = vcombine.low %v2972, %v3004
        %v3029 = vcombine.high %v2972, %v3004
        %v3030 = vcombine.low %v2979, %v3011
        %v3031 = vcombine.high %v2979, %v3011
        %v3032 = vcombine.low %v2988, %v3020
        %v3033 = vcombine.high %v2988, %v3020
        %v3034 = vcombine.low %v2995, %v3027
        %v3035 = vcombine.high %v2995, %v3027
        %3037 = vrot.lane.b32.xlu0 %v3029, 16
        %v3038 = vpop.permute.xlu0 %3037
        %3041 = vrot.lane.b32.xlu0 %v3030, 32
        %v3042 = vpop.permute.xlu0 %3041
        %3045 = vrot.lane.b32.xlu0 %v3031, 48
        %v3046 = vpop.permute.xlu0 %3045
        %3049 = vrot.lane.b32.xlu0 %v3032, 64
        %v3050 = vpop.permute.xlu0 %3049
        %3053 = vrot.lane.b32.xlu0 %v3033, 80
        %v3054 = vpop.permute.xlu0 %3053
        %3057 = vrot.lane.b32.xlu0 %v3034, 96
        %v3058 = vpop.permute.xlu0 %3057
        %3061 = vrot.lane.b32.xlu0 %v3035, 112
        %v3062 = vpop.permute.xlu0 %3061
        %v3064 = vsel %vm1929, %v3028, %v3038
        %vm3065 = vcmask 261120
        %v3066 = vsel %vm3065, %v3064, %v3042
        %vm3067 = vcmask 392192
        %v3068 = vsel %vm3067, %v3066, %v3046
        %vm3069 = vcmask 523264
        %v3070 = vsel %vm3069, %v3068, %v3050
        %vm3071 = vcmask 654336
        %v3072 = vsel %vm3071, %v3070, %v3054
        %vm3073 = vcmask 785408
        %v3074 = vsel %vm3073, %v3072, %v3058
        %vm3075 = vcmask 916480
        %v3076 = vsel %vm3075, %v3074, %v3062
        %v3077 = vpack.c.bf16 %v3076, %v3076
        %v3079 = vlaneseq
        %v3080 = vshrl.u32 %v3079, 7
        %v3081 = vsub.s32 0, %v3080
        %v3082 = vrot.slane %v1286, %v3081
        %v3100 = vunpack.c.l.b16 %v1270
        %v3101 = vunpack.c.l.b16 %v1271
        %v3102 = vunpack.c.l.b16 %v1272
        %v3103 = vunpack.c.l.b16 %v1273
        %v3104 = vunpack.c.l.b16 %v1274
        %v3105 = vunpack.c.l.b16 %v1275
        %v3106 = vunpack.c.l.b16 %v1276
        %v3107 = vunpack.c.l.b16 %v1277
        %v3108 = vunpack.c.l.b16 %v1278
        %v3109 = vunpack.c.l.b16 %v1279
        %v3110 = vunpack.c.l.b16 %v1280
        %v3111 = vunpack.c.l.b16 %v1281
        %v3112 = vunpack.c.l.b16 %v1282
        %v3113 = vunpack.c.l.b16 %v1283
        %v3114 = vunpack.c.l.b16 %v1284
        %v3115 = vunpack.c.l.b16 %v1285
        %v3116 = vpack.c.b16 %v3101, %v3100
        %v3117 = vpack.c.b16 %v3103, %v3102
        %v3118 = vpack.c.b16 %v3105, %v3104
        %v3119 = vpack.c.b16 %v3107, %v3106
        %v3120 = vpack.c.b16 %v3109, %v3108
        %v3121 = vpack.c.b16 %v3111, %v3110
        %v3122 = vpack.c.b16 %v3113, %v3112
        %v3123 = vpack.c.b16 %v3115, %v3114
        %3132 = vmatprep.subr.bf16.mxu0 0
        %3133 = vmatpush1.bf16.msra.mxu0 %v3116
        %3134 = vmatprep.subr.bf16.mxu0 0
        %3135 = vmatpush1.bf16.msra.mxu0 %v3117
        %3136 = vmatprep.subr.bf16.mxu0 0
        %3137 = vmatpush1.bf16.msra.mxu0 %v3118
        %3138 = vmatprep.subr.bf16.mxu0 0
        %3139 = vmatpush1.bf16.msra.mxu0 %v3119
        %3140 = vmatprep.subr.bf16.mxu0 0
        %3141 = vmatpush1.bf16.msra.mxu0 %v3120
        %3142 = vmatprep.subr.bf16.mxu0 0
        %3143 = vmatpush1.bf16.msra.mxu0 %v3121
        %3144 = vmatprep.subr.bf16.mxu0 0
        %3145 = vmatpush1.bf16.msra.mxu0 %v3122
        %3146 = vmatprep.subr.bf16.mxu0 0
        %3147 = vmatpush1.bf16.msra.mxu0 %v3123
        %3148 = vmatprep.subr.bf16.mxu0 0
        %3149 = vmatpush1.bf16.msra.mxu0 0
        %3150 = vmatprep.subr.bf16.mxu0 0
        %3151 = vmatpush1.bf16.msra.mxu0 0
        %3152 = vmatprep.subr.bf16.mxu0 0
        %3153 = vmatpush1.bf16.msra.mxu0 0
        %3154 = vmatprep.subr.bf16.mxu0 0
        %3155 = vmatpush1.bf16.msra.mxu0 0
        %3156 = vmatprep.subr.bf16.mxu0 0
        %3157 = vmatpush1.bf16.msra.mxu0 0
        %3158 = vmatprep.subr.bf16.mxu0 0
        %3159 = vmatpush1.bf16.msra.mxu0 0
        %3160 = vmatprep.subr.bf16.mxu0 0
        %3161 = vmatpush1.bf16.msra.mxu0 0
        %3162 = vmatprep.subr.bf16.mxu0 0
        %3163 = vmatpush1.bf16.msra.mxu0 0
        %3164 = vmatprep.mubr.bf16.mxu0 0
        %3165 = vmatmul.mubr.bf16.gmra.mrb[0].mxu0 %v3077
        %v3166 = vpop.f32.mrb[0].mxu0
        %v3167 = vadd.f32 %v3082, %v3166
        %v3168 = vpop.f32.mrb[0].mxu0
        %v3169 = vpop.f32.mrb[0].mxu0
        %v3170 = vpop.f32.mrb[0].mxu0
        %3171 = vdwg.mxu0
        %v3172 = vadd.f32 %v1004, %v3167
        %v3173 = vld [vmem:[#allocation13] sm:$0x1]
        %v3174 = vld [vmem:[#allocation14] sm:$0x1]
        %3175 = vadd.xlane.f32.xlu0 %v3172
        %v3176 = vpop.xlane.xlu0 %3175
        %v3177 = vrcp.pop 128.0
        %v3178 = vmul.f32 %v3176, %v3177
        %v3179 = vsub.f32 %v3172, %v3178
        %v3180 = vmul.f32 %v3179, %v3179
        %3181 = vadd.xlane.f32.xlu0 %v3180
        %v3182 = vpop.xlane.xlu0 %3181
        %v3183 = vmul.f32 %v3182, %v3177
        %v3184 = vadd.f32 %v3183, 1e-05
        %v3185 = vrsqrt.pop %v3184
        %v3186 = vmul.f32 %v3179, %v3185
        %v3188 = vlaneseq
        %v3189 = vshrl.u32 %v3188, 7
        %v3190 = vsub.s32 0, %v3189
        %v3191 = vrot.slane %v3173, %v3190
        %v3193 = vmul.f32 %v3186, %v3191
        %v3195 = vlaneseq
        %v3196 = vshrl.u32 %v3195, 7
        %v3197 = vsub.s32 0, %v3196
        %v3198 = vrot.slane %v3174, %v3197
        %v3200 = vadd.f32 %v3193, %v3198
        %v3201 = vpack.c.bf16 %v3200, %v3200
        %v3202 = vld [vmem:[#allocation16] sm:$0xf]
        %v3203 = vld [vmem:[#allocation16 + $0x4] sm:$0xf]
        %v3204 = vld [vmem:[#allocation16 + $0x8] sm:$0xf]
        %v3205 = vld [vmem:[#allocation16 + $0xc] sm:$0xf]
        %v3206 = vld [vmem:[#allocation16 + $0x10] sm:$0xf]
        %v3207 = vld [vmem:[#allocation16 + $0x14] sm:$0xf]
        %v3208 = vld [vmem:[#allocation16 + $0x18] sm:$0xf]
        %v3209 = vld [vmem:[#allocation16 + $0x1c] sm:$0xf]
        %v3210 = vld [vmem:[#allocation16 + $0x20] sm:$0xf]
        %v3211 = vld [vmem:[#allocation16 + $0x24] sm:$0xf]
        %v3212 = vld [vmem:[#allocation16 + $0x28] sm:$0xf]
        %v3213 = vld [vmem:[#allocation16 + $0x2c] sm:$0xf]
        %v3214 = vld [vmem:[#allocation16 + $0x30] sm:$0xf]
        %v3215 = vld [vmem:[#allocation16 + $0x34] sm:$0xf]
        %v3216 = vld [vmem:[#allocation16 + $0x38] sm:$0xf]
        %v3217 = vld [vmem:[#allocation16 + $0x3c] sm:$0xf]
        %v3218 = vld [vmem:[#allocation17] sm:$0x1]
        %v3220 = vlaneseq
        %v3221 = vshrl.u32 %v3220, 7
        %v3222 = vsub.s32 0, %v3221
        %v3223 = vrot.slane %v3218, %v3222
        %v3241 = vunpack.c.l.b16 %v3202
        %v3242 = vunpack.c.l.b16 %v3203
        %v3243 = vunpack.c.l.b16 %v3204
        %v3244 = vunpack.c.l.b16 %v3205
        %v3245 = vunpack.c.l.b16 %v3206
        %v3246 = vunpack.c.l.b16 %v3207
        %v3247 = vunpack.c.l.b16 %v3208
        %v3248 = vunpack.c.l.b16 %v3209
        %v3249 = vunpack.c.l.b16 %v3210
        %v3250 = vunpack.c.l.b16 %v3211
        %v3251 = vunpack.c.l.b16 %v3212
        %v3252 = vunpack.c.l.b16 %v3213
        %v3253 = vunpack.c.l.b16 %v3214
        %v3254 = vunpack.c.l.b16 %v3215
        %v3255 = vunpack.c.l.b16 %v3216
        %v3256 = vunpack.c.l.b16 %v3217
        %v3257 = vpack.c.b16 %v3242, %v3241
        %v3258 = vpack.c.b16 %v3244, %v3243
        %v3259 = vpack.c.b16 %v3246, %v3245
        %v3260 = vpack.c.b16 %v3248, %v3247
        %v3261 = vpack.c.b16 %v3250, %v3249
        %v3262 = vpack.c.b16 %v3252, %v3251
        %v3263 = vpack.c.b16 %v3254, %v3253
        %v3264 = vpack.c.b16 %v3256, %v3255
        %3273 = vmatprep.subr.bf16.mxu0 0
        %3274 = vmatpush1.bf16.msra.mxu0 %v3257
        %3275 = vmatprep.subr.bf16.mxu0 0
        %3276 = vmatpush1.bf16.msra.mxu0 %v3258
        %3277 = vmatprep.subr.bf16.mxu0 0
        %3278 = vmatpush1.bf16.msra.mxu0 %v3259
        %3279 = vmatprep.subr.bf16.mxu0 0
        %3280 = vmatpush1.bf16.msra.mxu0 %v3260
        %3281 = vmatprep.subr.bf16.mxu0 0
        %3282 = vmatpush1.bf16.msra.mxu0 %v3261
        %3283 = vmatprep.subr.bf16.mxu0 0
        %3284 = vmatpush1.bf16.msra.mxu0 %v3262
        %3285 = vmatprep.subr.bf16.mxu0 0
        %3286 = vmatpush1.bf16.msra.mxu0 %v3263
        %3287 = vmatprep.subr.bf16.mxu0 0
        %3288 = vmatpush1.bf16.msra.mxu0 %v3264
        %3289 = vmatprep.subr.bf16.mxu0 0
        %3290 = vmatpush1.bf16.msra.mxu0 0
        %3291 = vmatprep.subr.bf16.mxu0 0
        %3292 = vmatpush1.bf16.msra.mxu0 0
        %3293 = vmatprep.subr.bf16.mxu0 0
        %3294 = vmatpush1.bf16.msra.mxu0 0
        %3295 = vmatprep.subr.bf16.mxu0 0
        %3296 = vmatpush1.bf16.msra.mxu0 0
        %3297 = vmatprep.subr.bf16.mxu0 0
        %3298 = vmatpush1.bf16.msra.mxu0 0
        %3299 = vmatprep.subr.bf16.mxu0 0
        %3300 = vmatpush1.bf16.msra.mxu0 0
        %3301 = vmatprep.subr.bf16.mxu0 0
        %3302 = vmatpush1.bf16.msra.mxu0 0
        %3303 = vmatprep.subr.bf16.mxu0 0
        %3304 = vmatpush1.bf16.msra.mxu0 0
        %3305 = vmatprep.mubr.bf16.mxu0 0
        %3306 = vmatmul.mubr.bf16.gmra.mrb[0].mxu0 %v3201
        %v3307 = vpop.f32.mrb[0].mxu0
        %v3308 = vadd.f32 %v3223, %v3307
        %v3309 = vpop.f32.mrb[0].mxu0
        %v3310 = vpop.f32.mrb[0].mxu0
        %v3311 = vpop.f32.mrb[0].mxu0
        %3312 = vdwg.mxu0
        %v3313 = vld [vmem:[#allocation19] sm:$0xff]
        %v3314 = vld [vmem:[#allocation19 + $0x8] sm:$0xff]
        %v3315 = vld [vmem:[#allocation19 + $0x10] sm:$0xff]
        %v3316 = vld [vmem:[#allocation19 + $0x18] sm:$0xff]
        %v3317 = vld [vmem:[#allocation19 + $0x20] sm:$0xff]
        %v3318 = vld [vmem:[#allocation19 + $0x28] sm:$0xff]
        %v3319 = vld [vmem:[#allocation19 + $0x30] sm:$0xff]
        %v3320 = vld [vmem:[#allocation19 + $0x38] sm:$0xff]
        %v3321 = vld [vmem:[#allocation19 + $0x40] sm:$0xff]
        %v3322 = vld [vmem:[#allocation19 + $0x48] sm:$0xff]
        %v3323 = vld [vmem:[#allocation19 + $0x50] sm:$0xff]
        %v3324 = vld [vmem:[#allocation19 + $0x58] sm:$0xff]
        %v3325 = vld [vmem:[#allocation19 + $0x60] sm:$0xff]
        %v3326 = vld [vmem:[#allocation19 + $0x68] sm:$0xff]
        %v3327 = vld [vmem:[#allocation19 + $0x70] sm:$0xff]
        %v3328 = vld [vmem:[#allocation19 + $0x78] sm:$0xff]
        %v3329 = vld [vmem:[#allocation20] sm:$0x3]
        %v3331 = vlaneseq
        %v3332 = vshrl.u32 %v3331, 7
        %v3333 = vsub.s32 0, %v3332
        %v3334 = vrot.slane %v3329, %v3333
        %v3335 = vlaneseq
        %v3336 = vshrl.u32 %v3335, 7
        %v3337 = vsub.s32 1, %v3336
        %v3338 = vrot.slane %v3329, %v3337
        %v3357 = vunpack.c.l.b16 %v3313
        %v3358 = vunpack.c.h.b16 %v3313
        %v3359 = vunpack.c.l.b16 %v3314
        %v3360 = vunpack.c.h.b16 %v3314
        %v3361 = vunpack.c.l.b16 %v3315
        %v3362 = vunpack.c.h.b16 %v3315
        %v3363 = vunpack.c.l.b16 %v3316
        %v3364 = vunpack.c.h.b16 %v3316
        %v3365 = vunpack.c.l.b16 %v3317
        %v3366 = vunpack.c.h.b16 %v3317
        %v3367 = vunpack.c.l.b16 %v3318
        %v3368 = vunpack.c.h.b16 %v3318
        %v3369 = vunpack.c.l.b16 %v3319
        %v3370 = vunpack.c.h.b16 %v3319
        %v3371 = vunpack.c.l.b16 %v3320
        %v3372 = vunpack.c.h.b16 %v3320
        %v3373 = vunpack.c.l.b16 %v3321
        %v3374 = vunpack.c.h.b16 %v3321
        %v3375 = vunpack.c.l.b16 %v3322
        %v3376 = vunpack.c.h.b16 %v3322
        %v3377 = vunpack.c.l.b16 %v3323
        %v3378 = vunpack.c.h.b16 %v3323
        %v3379 = vunpack.c.l.b16 %v3324
        %v3380 = vunpack.c.h.b16 %v3324
        %v3381 = vunpack.c.l.b16 %v3325
        %v3382 = vunpack.c.h.b16 %v3325
        %v3383 = vunpack.c.l.b16 %v3326
        %v3384 = vunpack.c.h.b16 %v3326
        %v3385 = vunpack.c.l.b16 %v3327
        %v3386 = vunpack.c.h.b16 %v3327
        %v3387 = vunpack.c.l.b16 %v3328
        %v3388 = vunpack.c.h.b16 %v3328
        %v3389 = vpack.c.b16 %v3359, %v3357
        %v3390 = vpack.c.b16 %v3360, %v3358
        %v3391 = vpack.c.b16 %v3363, %v3361
        %v3392 = vpack.c.b16 %v3364, %v3362
        %v3393 = vpack.c.b16 %v3367, %v3365
        %v3394 = vpack.c.b16 %v3368, %v3366
        %v3395 = vpack.c.b16 %v3371, %v3369
        %v3396 = vpack.c.b16 %v3372, %v3370
        %v3397 = vpack.c.b16 %v3375, %v3373
        %v3398 = vpack.c.b16 %v3376, %v3374
        %v3399 = vpack.c.b16 %v3379, %v3377
        %v3400 = vpack.c.b16 %v3380, %v3378
        %v3401 = vpack.c.b16 %v3383, %v3381
        %v3402 = vpack.c.b16 %v3384, %v3382
        %v3403 = vpack.c.b16 %v3387, %v3385
        %v3404 = vpack.c.b16 %v3388, %v3386
        %3421 = vmatprep.subr.bf16.mxu0 %v3390
        %3422 = vmatpush1.bf16.msra.mxu0 %v3389
        %3423 = vmatprep.subr.bf16.mxu0 %v3392
        %3424 = vmatpush1.bf16.msra.mxu0 %v3391
        %3425 = vmatprep.subr.bf16.mxu0 %v3394
        %3426 = vmatpush1.bf16.msra.mxu0 %v3393
        %3427 = vmatprep.subr.bf16.mxu0 %v3396
        %3428 = vmatpush1.bf16.msra.mxu0 %v3395
        %3429 = vmatprep.subr.bf16.mxu0 %v3398
        %3430 = vmatpush1.bf16.msra.mxu0 %v3397
        %3431 = vmatprep.subr.bf16.mxu0 %v3400
        %3432 = vmatpush1.bf16.msra.mxu0 %v3399
        %3433 = vmatprep.subr.bf16.mxu0 %v3402
        %3434 = vmatpush1.bf16.msra.mxu0 %v3401
        %3435 = vmatprep.subr.bf16.mxu0 %v3404
        %3436 = vmatpush1.bf16.msra.mxu0 %v3403
        %3437 = vmatprep.subr.bf16.mxu0 0
        %3438 = vmatpush1.bf16.msra.mxu0 0
        %3439 = vmatprep.subr.bf16.mxu0 0
        %3440 = vmatpush1.bf16.msra.mxu0 0
        %3441 = vmatprep.subr.bf16.mxu0 0
        %3442 = vmatpush1.bf16.msra.mxu0 0
        %3443 = vmatprep.subr.bf16.mxu0 0
        %3444 = vmatpush1.bf16.msra.mxu0 0
        %3445 = vmatprep.subr.bf16.mxu0 0
        %3446 = vmatpush1.bf16.msra.mxu0 0
        %3447 = vmatprep.subr.bf16.mxu0 0
        %3448 = vmatpush1.bf16.msra.mxu0 0
        %3449 = vmatprep.subr.bf16.mxu0 0
        %3450 = vmatpush1.bf16.msra.mxu0 0
        %3451 = vmatprep.subr.bf16.mxu0 0
        %3452 = vmatpush1.bf16.msra.mxu0 0
        %3453 = vmatprep.mubr.bf16.mxu0 0
        %3454 = vmatmul.mubr.bf16.gmra.mrb[0].mxu0 %v1007
        %v3455 = vpop.f32.mrb[0].mxu0
        %v3456 = vadd.f32 %v3334, %v3455
        %v3457 = vpop.f32.mrb[0].mxu0
        %v3458 = vadd.f32 %v3338, %v3457
        %v3459 = vpop.f32.mrb[0].mxu0
        %v3460 = vadd.f32 %v3334, %v3459
        %v3461 = vpop.f32.mrb[0].mxu0
        %v3462 = vadd.f32 %v3338, %v3461
        %3463 = vdwg.mxu0
        %v3464 = vpack.c.bf16 %v3460, %v3456
        %v3465 = vpack.c.bf16 %v3462, %v3458
        %v3466 = vpack.c.bf16 %v3308, %v3308
        %v3467 = vld [vmem:[#allocation22] sm:$0xf]
        %v3468 = vld [vmem:[#allocation22 + $0x4] sm:$0xf]
        %v3469 = vld [vmem:[#allocation22 + $0x8] sm:$0xf]
        %v3470 = vld [vmem:[#allocation22 + $0xc] sm:$0xf]
        %v3471 = vld [vmem:[#allocation22 + $0x10] sm:$0xf]
        %v3472 = vld [vmem:[#allocation22 + $0x14] sm:$0xf]
        %v3473 = vld [vmem:[#allocation22 + $0x18] sm:$0xf]
        %v3474 = vld [vmem:[#allocation22 + $0x1c] sm:$0xf]
        %v3475 = vld [vmem:[#allocation22 + $0x20] sm:$0xf]
        %v3476 = vld [vmem:[#allocation22 + $0x24] sm:$0xf]
        %v3477 = vld [vmem:[#allocation22 + $0x28] sm:$0xf]
        %v3478 = vld [vmem:[#allocation22 + $0x2c] sm:$0xf]
        %v3479 = vld [vmem:[#allocation22 + $0x30] sm:$0xf]
        %v3480 = vld [vmem:[#allocation22 + $0x34] sm:$0xf]
        %v3481 = vld [vmem:[#allocation22 + $0x38] sm:$0xf]
        %v3482 = vld [vmem:[#allocation22 + $0x3c] sm:$0xf]
        %v3483 = vld [vmem:[#allocation23] sm:$0x1]
        %3485 = vrot.lane.b32.xlu0 %v3466, 112
        %v3486 = vpop.permute.xlu0 %3485
        %3488 = vrot.lane.b32.xlu0 %v3466, 96
        %v3489 = vpop.permute.xlu0 %3488
        %3491 = vrot.lane.b32.xlu0 %v3466, 80
        %v3492 = vpop.permute.xlu0 %3491
        %3494 = vrot.lane.b32.xlu0 %v3466, 64
        %v3495 = vpop.permute.xlu0 %3494
        %3497 = vrot.lane.b32.xlu0 %v3466, 48
        %v3498 = vpop.permute.xlu0 %3497
        %3500 = vrot.lane.b32.xlu0 %v3466, 32
        %v3501 = vpop.permute.xlu0 %3500
        %3503 = vrot.lane.b32.xlu0 %v3466, 16
        %v3504 = vpop.permute.xlu0 %3503
        %v3506 = vcombine.low %v3466, %v3495
        %v3508 = vunpack.c.l.s4 1983009808
        %v3509 = vunpack.c.0.s8 %v3508
        %v3510 = vlaneseq
        %v3511 = vshrl.u32 %v3510, 7
        %v3512 = vsub.s32 %v3509, %v3511
        %v3513 = vrot.slane %v3506, %v3512
        %v3514 = vcombine.low %v3489, %v3501
        %v3516 = vunpack.c.l.s4 1983009808
        %v3517 = vunpack.c.0.s8 %v3516
        %v3518 = vlaneseq
        %v3519 = vshrl.u32 %v3518, 7
        %v3520 = vsub.s32 %v3517, %v3519
        %v3521 = vrot.slane %v3514, %v3520
        %v3522 = vcombine.low %v3513, %v3521
        %v3523 = vcombine.high %v3513, %v3521
        %v3525 = vunpack.c.l.s4 1934713408
        %v3526 = vunpack.c.0.s8 %v3525
        %v3527 = vlaneseq
        %v3528 = vshrl.u32 %v3527, 7
        %v3529 = vsub.s32 %v3526, %v3528
        %v3530 = vrot.slane %v3522, %v3529
        %v3532 = vunpack.c.l.s4 1934713408
        %v3533 = vunpack.c.0.s8 %v3532
        %v3534 = vlaneseq
        %v3535 = vshrl.u32 %v3534, 7
        %v3536 = vsub.s32 %v3533, %v3535
        %v3537 = vrot.slane %v3523, %v3536
        %v3538 = vcombine.high %v3530, 0
        %v3539 = vcombine.high %v3537, 0
        %v3540 = vcombine.low %v3486, %v3498
        %v3542 = vunpack.c.l.s4 1983009808
        %v3543 = vunpack.c.0.s8 %v3542
        %v3544 = vlaneseq
        %v3545 = vshrl.u32 %v3544, 7
        %v3546 = vsub.s32 %v3543, %v3545
        %v3547 = vrot.slane %v3540, %v3546
        %v3548 = vcombine.low %v3492, %v3504
        %v3550 = vunpack.c.l.s4 1983009808
        %v3551 = vunpack.c.0.s8 %v3550
        %v3552 = vlaneseq
        %v3553 = vshrl.u32 %v3552, 7
        %v3554 = vsub.s32 %v3551, %v3553
        %v3555 = vrot.slane %v3548, %v3554
        %v3556 = vcombine.low %v3547, %v3555
        %v3557 = vcombine.high %v3547, %v3555
        %v3559 = vunpack.c.l.s4 1934713408
        %v3560 = vunpack.c.0.s8 %v3559
        %v3561 = vlaneseq
        %v3562 = vshrl.u32 %v3561, 7
        %v3563 = vsub.s32 %v3560, %v3562
        %v3564 = vrot.slane %v3556, %v3563
        %v3566 = vunpack.c.l.s4 1934713408
        %v3567 = vunpack.c.0.s8 %v3566
        %v3568 = vlaneseq
        %v3569 = vshrl.u32 %v3568, 7
        %v3570 = vsub.s32 %v3567, %v3569
        %v3571 = vrot.slane %v3557, %v3570
        %v3572 = vcombine.high %v3564, 0
        %v3573 = vcombine.high %v3571, 0
        %v3576 = vpack.i.b16 %v3564, %v3530
        %v3578 = vshrl.u32 %v3530, 16
        %v3579 = vshrl.u32 %v3564, 16
        %v3580 = vpack.i.b16 %v3579, %v3578
        %v3584 = vpack.i.b16 %v3572, %v3538
        %v3586 = vshrl.u32 %v3538, 16
        %v3587 = vshrl.u32 %v3572, 16
        %v3588 = vpack.i.b16 %v3587, %v3586
        %v3592 = vpack.i.b16 %v3571, %v3537
        %v3594 = vshrl.u32 %v3537, 16
        %v3595 = vshrl.u32 %v3571, 16
        %v3596 = vpack.i.b16 %v3595, %v3594
        %v3600 = vpack.i.b16 %v3573, %v3539
        %v3602 = vshrl.u32 %v3539, 16
        %v3603 = vshrl.u32 %v3573, 16
        %v3604 = vpack.i.b16 %v3603, %v3602
        %v3606 = vcombine.low %v3576, %v3592
        %v3608 = vunpack.c.l.s4 1983009808
        %v3609 = vunpack.c.0.s8 %v3608
        %v3610 = vlaneseq
        %v3611 = vshrl.u32 %v3610, 7
        %v3612 = vsub.s32 %v3609, %v3611
        %v3613 = vrot.slane %v3606, %v3612
        %v3614 = vcombine.low %v3584, %v3600
        %v3616 = vunpack.c.l.s4 1983009808
        %v3617 = vunpack.c.0.s8 %v3616
        %v3618 = vlaneseq
        %v3619 = vshrl.u32 %v3618, 7
        %v3620 = vsub.s32 %v3617, %v3619
        %v3621 = vrot.slane %v3614, %v3620
        %v3622 = vcombine.low %v3613, %v3621
        %v3623 = vcombine.high %v3613, %v3621
        %v3625 = vunpack.c.l.s4 1934713408
        %v3626 = vunpack.c.0.s8 %v3625
        %v3627 = vlaneseq
        %v3628 = vshrl.u32 %v3627, 7
        %v3629 = vsub.s32 %v3626, %v3628
        %v3630 = vrot.slane %v3622, %v3629
        %v3632 = vunpack.c.l.s4 1934713408
        %v3633 = vunpack.c.0.s8 %v3632
        %v3634 = vlaneseq
        %v3635 = vshrl.u32 %v3634, 7
        %v3636 = vsub.s32 %v3633, %v3635
        %v3637 = vrot.slane %v3623, %v3636
        %v3638 = vcombine.high %v3630, 0
        %v3639 = vcombine.high %v3637, 0
        %v3640 = vcombine.low %v3580, %v3596
        %v3642 = vunpack.c.l.s4 1983009808
        %v3643 = vunpack.c.0.s8 %v3642
        %v3644 = vlaneseq
        %v3645 = vshrl.u32 %v3644, 7
        %v3646 = vsub.s32 %v3643, %v3645
        %v3647 = vrot.slane %v3640, %v3646
        %v3648 = vcombine.low %v3588, %v3604
        %v3650 = vunpack.c.l.s4 1983009808
        %v3651 = vunpack.c.0.s8 %v3650
        %v3652 = vlaneseq
        %v3653 = vshrl.u32 %v3652, 7
        %v3654 = vsub.s32 %v3651, %v3653
        %v3655 = vrot.slane %v3648, %v3654
        %v3656 = vcombine.low %v3647, %v3655
        %v3657 = vcombine.high %v3647, %v3655
        %v3659 = vunpack.c.l.s4 1934713408
        %v3660 = vunpack.c.0.s8 %v3659
        %v3661 = vlaneseq
        %v3662 = vshrl.u32 %v3661, 7
        %v3663 = vsub.s32 %v3660, %v3662
        %v3664 = vrot.slane %v3656, %v3663
        %v3666 = vunpack.c.l.s4 1934713408
        %v3667 = vunpack.c.0.s8 %v3666
        %v3668 = vlaneseq
        %v3669 = vshrl.u32 %v3668, 7
        %v3670 = vsub.s32 %v3667, %v3669
        %v3671 = vrot.slane %v3657, %v3670
        %v3672 = vcombine.high %v3664, 0
        %v3673 = vcombine.high %v3671, 0
        %v3676 = vpack.i.b16 %v3664, %v3630
        %v3677 = vshrl.u32 %v3630, 16
        %v3678 = vshrl.u32 %v3664, 16
        %v3679 = vpack.i.b16 %v3678, %v3677
        %v3682 = vpack.i.b16 %v3672, %v3638
        %v3683 = vshrl.u32 %v3638, 16
        %v3684 = vshrl.u32 %v3672, 16
        %v3685 = vpack.i.b16 %v3684, %v3683
        %v3688 = vpack.i.b16 %v3671, %v3637
        %v3689 = vshrl.u32 %v3637, 16
        %v3690 = vshrl.u32 %v3671, 16
        %v3691 = vpack.i.b16 %v3690, %v3689
        %v3694 = vpack.i.b16 %v3673, %v3639
        %v3695 = vshrl.u32 %v3639, 16
        %v3696 = vshrl.u32 %v3673, 16
        %v3697 = vpack.i.b16 %v3696, %v3695
        %3699 = vrot.lane.b32.xlu0 %v3464, 112
        %v3700 = vpop.permute.xlu0 %3699
        %3701 = vrot.lane.b32.xlu0 %v3464, 96
        %v3702 = vpop.permute.xlu0 %3701
        %3703 = vrot.lane.b32.xlu0 %v3464, 80
        %v3704 = vpop.permute.xlu0 %3703
        %3705 = vrot.lane.b32.xlu0 %v3464, 64
        %v3706 = vpop.permute.xlu0 %3705
        %3707 = vrot.lane.b32.xlu0 %v3464, 48
        %v3708 = vpop.permute.xlu0 %3707
        %3709 = vrot.lane.b32.xlu0 %v3464, 32
        %v3710 = vpop.permute.xlu0 %3709
        %3711 = vrot.lane.b32.xlu0 %v3464, 16
        %v3712 = vpop.permute.xlu0 %3711
        %v3715 = vpack.i.b16 %v3700, %v3464
        %v3717 = vshrl.u32 %v3464, 16
        %v3718 = vshrl.u32 %v3700, 16
        %v3719 = vpack.i.b16 %v3718, %v3717
        %v3723 = vpack.i.b16 %v3704, %v3702
        %v3725 = vshrl.u32 %v3702, 16
        %v3726 = vshrl.u32 %v3704, 16
        %v3727 = vpack.i.b16 %v3726, %v3725
        %v3731 = vpack.i.b16 %v3708, %v3706
        %v3733 = vshrl.u32 %v3706, 16
        %v3734 = vshrl.u32 %v3708, 16
        %v3735 = vpack.i.b16 %v3734, %v3733
        %v3739 = vpack.i.b16 %v3712, %v3710
        %v3741 = vshrl.u32 %v3710, 16
        %v3742 = vshrl.u32 %v3712, 16
        %v3743 = vpack.i.b16 %v3742, %v3741
        %v3745 = vcombine.low %v3715, %v3731
        %v3746 = vcombine.high %v3715, %v3731
        %v3748 = vunpack.c.l.s4 1983009808
        %v3749 = vunpack.c.0.s8 %v3748
        %v3750 = vlaneseq
        %v3751 = vshrl.u32 %v3750, 7
        %v3752 = vsub.s32 %v3749, %v3751
        %v3753 = vrot.slane %v3745, %v3752
        %v3755 = vunpack.c.l.s4 1983009808
        %v3756 = vunpack.c.0.s8 %v3755
        %v3757 = vlaneseq
        %v3758 = vshrl.u32 %v3757, 7
        %v3759 = vsub.s32 %v3756, %v3758
        %v3760 = vrot.slane %v3746, %v3759
        %v3761 = vcombine.low %v3723, %v3739
        %v3762 = vcombine.high %v3723, %v3739
        %v3764 = vunpack.c.l.s4 1983009808
        %v3765 = vunpack.c.0.s8 %v3764
        %v3766 = vlaneseq
        %v3767 = vshrl.u32 %v3766, 7
        %v3768 = vsub.s32 %v3765, %v3767
        %v3769 = vrot.slane %v3761, %v3768
        %v3771 = vunpack.c.l.s4 1983009808
        %v3772 = vunpack.c.0.s8 %v3771
        %v3773 = vlaneseq
        %v3774 = vshrl.u32 %v3773, 7
        %v3775 = vsub.s32 %v3772, %v3774
        %v3776 = vrot.slane %v3762, %v3775
        %v3777 = vcombine.low %v3753, %v3769
        %v3778 = vcombine.high %v3753, %v3769
        %v3780 = vunpack.c.l.s4 1934713408
        %v3781 = vunpack.c.0.s8 %v3780
        %v3782 = vlaneseq
        %v3783 = vshrl.u32 %v3782, 7
        %v3784 = vsub.s32 %v3781, %v3783
        %v3785 = vrot.slane %v3777, %v3784
        %v3787 = vunpack.c.l.s4 1934713408
        %v3788 = vunpack.c.0.s8 %v3787
        %v3789 = vlaneseq
        %v3790 = vshrl.u32 %v3789, 7
        %v3791 = vsub.s32 %v3788, %v3790
        %v3792 = vrot.slane %v3778, %v3791
        %v3793 = vcombine.low %v3760, %v3776
        %v3794 = vcombine.high %v3760, %v3776
        %v3796 = vunpack.c.l.s4 1934713408
        %v3797 = vunpack.c.0.s8 %v3796
        %v3798 = vlaneseq
        %v3799 = vshrl.u32 %v3798, 7
        %v3800 = vsub.s32 %v3797, %v3799
        %v3801 = vrot.slane %v3793, %v3800
        %v3803 = vunpack.c.l.s4 1934713408
        %v3804 = vunpack.c.0.s8 %v3803
        %v3805 = vlaneseq
        %v3806 = vshrl.u32 %v3805, 7
        %v3807 = vsub.s32 %v3804, %v3806
        %v3808 = vrot.slane %v3794, %v3807
        %v3809 = vcombine.high %v3785, 0
        %v3810 = vcombine.high %v3792, 0
        %v3811 = vcombine.high %v3801, 0
        %v3812 = vcombine.high %v3808, 0
        %v3813 = vcombine.low %v3719, %v3735
        %v3814 = vcombine.high %v3719, %v3735
        %v3816 = vunpack.c.l.s4 1983009808
        %v3817 = vunpack.c.0.s8 %v3816
        %v3818 = vlaneseq
        %v3819 = vshrl.u32 %v3818, 7
        %v3820 = vsub.s32 %v3817, %v3819
        %v3821 = vrot.slane %v3813, %v3820
        %v3823 = vunpack.c.l.s4 1983009808
        %v3824 = vunpack.c.0.s8 %v3823
        %v3825 = vlaneseq
        %v3826 = vshrl.u32 %v3825, 7
        %v3827 = vsub.s32 %v3824, %v3826
        %v3828 = vrot.slane %v3814, %v3827
        %v3829 = vcombine.low %v3727, %v3743
        %v3830 = vcombine.high %v3727, %v3743
        %v3832 = vunpack.c.l.s4 1983009808
        %v3833 = vunpack.c.0.s8 %v3832
        %v3834 = vlaneseq
        %v3835 = vshrl.u32 %v3834, 7
        %v3836 = vsub.s32 %v3833, %v3835
        %v3837 = vrot.slane %v3829, %v3836
        %v3839 = vunpack.c.l.s4 1983009808
        %v3840 = vunpack.c.0.s8 %v3839
        %v3841 = vlaneseq
        %v3842 = vshrl.u32 %v3841, 7
        %v3843 = vsub.s32 %v3840, %v3842
        %v3844 = vrot.slane %v3830, %v3843
        %v3845 = vcombine.low %v3821, %v3837
        %v3846 = vcombine.high %v3821, %v3837
        %v3848 = vunpack.c.l.s4 1934713408
        %v3849 = vunpack.c.0.s8 %v3848
        %v3850 = vlaneseq
        %v3851 = vshrl.u32 %v3850, 7
        %v3852 = vsub.s32 %v3849, %v3851
        %v3853 = vrot.slane %v3845, %v3852
        %v3855 = vunpack.c.l.s4 1934713408
        %v3856 = vunpack.c.0.s8 %v3855
        %v3857 = vlaneseq
        %v3858 = vshrl.u32 %v3857, 7
        %v3859 = vsub.s32 %v3856, %v3858
        %v3860 = vrot.slane %v3846, %v3859
        %v3861 = vcombine.low %v3828, %v3844
        %v3862 = vcombine.high %v3828, %v3844
        %v3864 = vunpack.c.l.s4 1934713408
        %v3865 = vunpack.c.0.s8 %v3864
        %v3866 = vlaneseq
        %v3867 = vshrl.u32 %v3866, 7
        %v3868 = vsub.s32 %v3865, %v3867
        %v3869 = vrot.slane %v3861, %v3868
        %v3871 = vunpack.c.l.s4 1934713408
        %v3872 = vunpack.c.0.s8 %v3871
        %v3873 = vlaneseq
        %v3874 = vshrl.u32 %v3873, 7
        %v3875 = vsub.s32 %v3872, %v3874
        %v3876 = vrot.slane %v3862, %v3875
        %v3877 = vcombine.high %v3853, 0
        %v3878 = vcombine.high %v3860, 0
        %v3879 = vcombine.high %v3869, 0
        %v3880 = vcombine.high %v3876, 0
        %v3881 = vcombine.low %v3785, %v3792
        %v3883 = vunpack.c.l.s4 1983009808
        %v3884 = vunpack.c.0.s8 %v3883
        %v3885 = vlaneseq
        %v3886 = vshrl.u32 %v3885, 7
        %v3887 = vsub.s32 %v3884, %v3886
        %v3888 = vrot.slane %v3881, %v3887
        %v3889 = vcombine.low %v3809, %v3810
        %v3891 = vunpack.c.l.s4 1983009808
        %v3892 = vunpack.c.0.s8 %v3891
        %v3893 = vlaneseq
        %v3894 = vshrl.u32 %v3893, 7
        %v3895 = vsub.s32 %v3892, %v3894
        %v3896 = vrot.slane %v3889, %v3895
        %v3897 = vcombine.low %v3801, %v3808
        %v3899 = vunpack.c.l.s4 1983009808
        %v3900 = vunpack.c.0.s8 %v3899
        %v3901 = vlaneseq
        %v3902 = vshrl.u32 %v3901, 7
        %v3903 = vsub.s32 %v3900, %v3902
        %v3904 = vrot.slane %v3897, %v3903
        %v3905 = vcombine.low %v3811, %v3812
        %v3907 = vunpack.c.l.s4 1983009808
        %v3908 = vunpack.c.0.s8 %v3907
        %v3909 = vlaneseq
        %v3910 = vshrl.u32 %v3909, 7
        %v3911 = vsub.s32 %v3908, %v3910
        %v3912 = vrot.slane %v3905, %v3911
        %v3913 = vcombine.low %v3888, %v3896
        %v3914 = vcombine.high %v3888, %v3896
        %v3916 = vunpack.c.l.s4 1934713408
        %v3917 = vunpack.c.0.s8 %v3916
        %v3918 = vlaneseq
        %v3919 = vshrl.u32 %v3918, 7
        %v3920 = vsub.s32 %v3917, %v3919
        %v3921 = vrot.slane %v3913, %v3920
        %v3923 = vunpack.c.l.s4 1934713408
        %v3924 = vunpack.c.0.s8 %v3923
        %v3925 = vlaneseq
        %v3926 = vshrl.u32 %v3925, 7
        %v3927 = vsub.s32 %v3924, %v3926
        %v3928 = vrot.slane %v3914, %v3927
        %v3929 = vcombine.low %v3904, %v3912
        %v3930 = vcombine.high %v3904, %v3912
        %v3932 = vunpack.c.l.s4 1934713408
        %v3933 = vunpack.c.0.s8 %v3932
        %v3934 = vlaneseq
        %v3935 = vshrl.u32 %v3934, 7
        %v3936 = vsub.s32 %v3933, %v3935
        %v3937 = vrot.slane %v3929, %v3936
        %v3939 = vunpack.c.l.s4 1934713408
        %v3940 = vunpack.c.0.s8 %v3939
        %v3941 = vlaneseq
        %v3942 = vshrl.u32 %v3941, 7
        %v3943 = vsub.s32 %v3940, %v3942
        %v3944 = vrot.slane %v3930, %v3943
        %v3945 = vcombine.low %v3921, %v3937
        %v3946 = vcombine.high %v3921, %v3937
        %v3947 = vcombine.low %v3928, %v3944
        %v3948 = vcombine.high %v3928, %v3944
        %v3949 = vcombine.low %v3853, %v3860
        %v3951 = vunpack.c.l.s4 1983009808
        %v3952 = vunpack.c.0.s8 %v3951
        %v3953 = vlaneseq
        %v3954 = vshrl.u32 %v3953, 7
        %v3955 = vsub.s32 %v3952, %v3954
        %v3956 = vrot.slane %v3949, %v3955
        %v3957 = vcombine.low %v3877, %v3878
        %v3959 = vunpack.c.l.s4 1983009808
        %v3960 = vunpack.c.0.s8 %v3959
        %v3961 = vlaneseq
        %v3962 = vshrl.u32 %v3961, 7
        %v3963 = vsub.s32 %v3960, %v3962
        %v3964 = vrot.slane %v3957, %v3963
        %v3965 = vcombine.low %v3869, %v3876
        %v3967 = vunpack.c.l.s4 1983009808
        %v3968 = vunpack.c.0.s8 %v3967
        %v3969 = vlaneseq
        %v3970 = vshrl.u32 %v3969, 7
        %v3971 = vsub.s32 %v3968, %v3970
        %v3972 = vrot.slane %v3965, %v3971
        %v3973 = vcombine.low %v3879, %v3880
        %v3975 = vunpack.c.l.s4 1983009808
        %v3976 = vunpack.c.0.s8 %v3975
        %v3977 = vlaneseq
        %v3978 = vshrl.u32 %v3977, 7
        %v3979 = vsub.s32 %v3976, %v3978
        %v3980 = vrot.slane %v3973, %v3979
        %v3981 = vcombine.low %v3956, %v3964
        %v3982 = vcombine.high %v3956, %v3964
        %v3984 = vunpack.c.l.s4 1934713408
        %v3985 = vunpack.c.0.s8 %v3984
        %v3986 = vlaneseq
        %v3987 = vshrl.u32 %v3986, 7
        %v3988 = vsub.s32 %v3985, %v3987
        %v3989 = vrot.slane %v3981, %v3988
        %v3991 = vunpack.c.l.s4 1934713408
        %v3992 = vunpack.c.0.s8 %v3991
        %v3993 = vlaneseq
        %v3994 = vshrl.u32 %v3993, 7
        %v3995 = vsub.s32 %v3992, %v3994
        %v3996 = vrot.slane %v3982, %v3995
        %v3997 = vcombine.low %v3972, %v3980
        %v3998 = vcombine.high %v3972, %v3980
        %v4000 = vunpack.c.l.s4 1934713408
        %v4001 = vunpack.c.0.s8 %v4000
        %v4002 = vlaneseq
        %v4003 = vshrl.u32 %v4002, 7
        %v4004 = vsub.s32 %v4001, %v4003
        %v4005 = vrot.slane %v3997, %v4004
        %v4007 = vunpack.c.l.s4 1934713408
        %v4008 = vunpack.c.0.s8 %v4007
        %v4009 = vlaneseq
        %v4010 = vshrl.u32 %v4009, 7
        %v4011 = vsub.s32 %v4008, %v4010
        %v4012 = vrot.slane %v3998, %v4011
        %v4013 = vcombine.low %v3989, %v4005
        %v4014 = vcombine.high %v3989, %v4005
        %v4015 = vcombine.low %v3996, %v4012
        %v4016 = vcombine.high %v3996, %v4012
        %v4019 = vpack.i.b16 %v4013, %v3945
        %v4020 = vshrl.u32 %v3945, 16
        %v4021 = vshrl.u32 %v4013, 16
        %v4022 = vpack.i.b16 %v4021, %v4020
        %v4025 = vpack.i.b16 %v4014, %v3946
        %v4026 = vshrl.u32 %v3946, 16
        %v4027 = vshrl.u32 %v4014, 16
        %v4028 = vpack.i.b16 %v4027, %v4026
        %v4031 = vpack.i.b16 %v4015, %v3947
        %v4032 = vshrl.u32 %v3947, 16
        %v4033 = vshrl.u32 %v4015, 16
        %v4034 = vpack.i.b16 %v4033, %v4032
        %v4037 = vpack.i.b16 %v4016, %v3948
        %v4038 = vshrl.u32 %v3948, 16
        %v4039 = vshrl.u32 %v4016, 16
        %v4040 = vpack.i.b16 %v4039, %v4038
        %4042 = vrot.lane.b32.xlu0 %v3465, 112
        %v4043 = vpop.permute.xlu0 %4042
        %4044 = vrot.lane.b32.xlu0 %v3465, 96
        %v4045 = vpop.permute.xlu0 %4044
        %4046 = vrot.lane.b32.xlu0 %v3465, 80
        %v4047 = vpop.permute.xlu0 %4046
        %4048 = vrot.lane.b32.xlu0 %v3465, 64
        %v4049 = vpop.permute.xlu0 %4048
        %4050 = vrot.lane.b32.xlu0 %v3465, 48
        %v4051 = vpop.permute.xlu0 %4050
        %4052 = vrot.lane.b32.xlu0 %v3465, 32
        %v4053 = vpop.permute.xlu0 %4052
        %4054 = vrot.lane.b32.xlu0 %v3465, 16
        %v4055 = vpop.permute.xlu0 %4054
        %v4058 = vpack.i.b16 %v4043, %v3465
        %v4060 = vshrl.u32 %v3465, 16
        %v4061 = vshrl.u32 %v4043, 16
        %v4062 = vpack.i.b16 %v4061, %v4060
        %v4066 = vpack.i.b16 %v4047, %v4045
        %v4068 = vshrl.u32 %v4045, 16
        %v4069 = vshrl.u32 %v4047, 16
        %v4070 = vpack.i.b16 %v4069, %v4068
        %v4074 = vpack.i.b16 %v4051, %v4049
        %v4076 = vshrl.u32 %v4049, 16
        %v4077 = vshrl.u32 %v4051, 16
        %v4078 = vpack.i.b16 %v4077, %v4076
        %v4082 = vpack.i.b16 %v4055, %v4053
        %v4084 = vshrl.u32 %v4053, 16
        %v4085 = vshrl.u32 %v4055, 16
        %v4086 = vpack.i.b16 %v4085, %v4084
        %v4088 = vcombine.low %v4058, %v4074
        %v4089 = vcombine.high %v4058, %v4074
        %v4091 = vunpack.c.l.s4 1983009808
        %v4092 = vunpack.c.0.s8 %v4091
        %v4093 = vlaneseq
        %v4094 = vshrl.u32 %v4093, 7
        %v4095 = vsub.s32 %v4092, %v4094
        %v4096 = vrot.slane %v4088, %v4095
        %v4098 = vunpack.c.l.s4 1983009808
        %v4099 = vunpack.c.0.s8 %v4098
        %v4100 = vlaneseq
        %v4101 = vshrl.u32 %v4100, 7
        %v4102 = vsub.s32 %v4099, %v4101
        %v4103 = vrot.slane %v4089, %v4102
        %v4104 = vcombine.low %v4066, %v4082
        %v4105 = vcombine.high %v4066, %v4082
        %v4107 = vunpack.c.l.s4 1983009808
        %v4108 = vunpack.c.0.s8 %v4107
        %v4109 = vlaneseq
        %v4110 = vshrl.u32 %v4109, 7
        %v4111 = vsub.s32 %v4108, %v4110
        %v4112 = vrot.slane %v4104, %v4111
        %v4114 = vunpack.c.l.s4 1983009808
        %v4115 = vunpack.c.0.s8 %v4114
        %v4116 = vlaneseq
        %v4117 = vshrl.u32 %v4116, 7
        %v4118 = vsub.s32 %v4115, %v4117
        %v4119 = vrot.slane %v4105, %v4118
        %v4120 = vcombine.low %v4096, %v4112
        %v4121 = vcombine.high %v4096, %v4112
        %v4123 = vunpack.c.l.s4 1934713408
        %v4124 = vunpack.c.0.s8 %v4123
        %v4125 = vlaneseq
        %v4126 = vshrl.u32 %v4125, 7
        %v4127 = vsub.s32 %v4124, %v4126
        %v4128 = vrot.slane %v4120, %v4127
        %v4130 = vunpack.c.l.s4 1934713408
        %v4131 = vunpack.c.0.s8 %v4130
        %v4132 = vlaneseq
        %v4133 = vshrl.u32 %v4132, 7
        %v4134 = vsub.s32 %v4131, %v4133
        %v4135 = vrot.slane %v4121, %v4134
        %v4136 = vcombine.low %v4103, %v4119
        %v4137 = vcombine.high %v4103, %v4119
        %v4139 = vunpack.c.l.s4 1934713408
        %v4140 = vunpack.c.0.s8 %v4139
        %v4141 = vlaneseq
        %v4142 = vshrl.u32 %v4141, 7
        %v4143 = vsub.s32 %v4140, %v4142
        %v4144 = vrot.slane %v4136, %v4143
        %v4146 = vunpack.c.l.s4 1934713408
        %v4147 = vunpack.c.0.s8 %v4146
        %v4148 = vlaneseq
        %v4149 = vshrl.u32 %v4148, 7
        %v4150 = vsub.s32 %v4147, %v4149
        %v4151 = vrot.slane %v4137, %v4150
        %v4152 = vcombine.high %v4128, 0
        %v4153 = vcombine.high %v4135, 0
        %v4154 = vcombine.high %v4144, 0
        %v4155 = vcombine.high %v4151, 0
        %v4156 = vcombine.low %v4062, %v4078
        %v4157 = vcombine.high %v4062, %v4078
        %v4159 = vunpack.c.l.s4 1983009808
        %v4160 = vunpack.c.0.s8 %v4159
        %v4161 = vlaneseq
        %v4162 = vshrl.u32 %v4161, 7
        %v4163 = vsub.s32 %v4160, %v4162
        %v4164 = vrot.slane %v4156, %v4163
        %v4166 = vunpack.c.l.s4 1983009808
        %v4167 = vunpack.c.0.s8 %v4166
        %v4168 = vlaneseq
        %v4169 = vshrl.u32 %v4168, 7
        %v4170 = vsub.s32 %v4167, %v4169
        %v4171 = vrot.slane %v4157, %v4170
        %v4172 = vcombine.low %v4070, %v4086
        %v4173 = vcombine.high %v4070, %v4086
        %v4175 = vunpack.c.l.s4 1983009808
        %v4176 = vunpack.c.0.s8 %v4175
        %v4177 = vlaneseq
        %v4178 = vshrl.u32 %v4177, 7
        %v4179 = vsub.s32 %v4176, %v4178
        %v4180 = vrot.slane %v4172, %v4179
        %v4182 = vunpack.c.l.s4 1983009808
        %v4183 = vunpack.c.0.s8 %v4182
        %v4184 = vlaneseq
        %v4185 = vshrl.u32 %v4184, 7
        %v4186 = vsub.s32 %v4183, %v4185
        %v4187 = vrot.slane %v4173, %v4186
        %v4188 = vcombine.low %v4164, %v4180
        %v4189 = vcombine.high %v4164, %v4180
        %v4191 = vunpack.c.l.s4 1934713408
        %v4192 = vunpack.c.0.s8 %v4191
        %v4193 = vlaneseq
        %v4194 = vshrl.u32 %v4193, 7
        %v4195 = vsub.s32 %v4192, %v4194
        %v4196 = vrot.slane %v4188, %v4195
        %v4198 = vunpack.c.l.s4 1934713408
        %v4199 = vunpack.c.0.s8 %v4198
        %v4200 = vlaneseq
        %v4201 = vshrl.u32 %v4200, 7
        %v4202 = vsub.s32 %v4199, %v4201
        %v4203 = vrot.slane %v4189, %v4202
        %v4204 = vcombine.low %v4171, %v4187
        %v4205 = vcombine.high %v4171, %v4187
        %v4207 = vunpack.c.l.s4 1934713408
        %v4208 = vunpack.c.0.s8 %v4207
        %v4209 = vlaneseq
        %v4210 = vshrl.u32 %v4209, 7
        %v4211 = vsub.s32 %v4208, %v4210
        %v4212 = vrot.slane %v4204, %v4211
        %v4214 = vunpack.c.l.s4 1934713408
        %v4215 = vunpack.c.0.s8 %v4214
        %v4216 = vlaneseq
        %v4217 = vshrl.u32 %v4216, 7
        %v4218 = vsub.s32 %v4215, %v4217
        %v4219 = vrot.slane %v4205, %v4218
        %v4220 = vcombine.high %v4196, 0
        %v4221 = vcombine.high %v4203, 0
        %v4222 = vcombine.high %v4212, 0
        %v4223 = vcombine.high %v4219, 0
        %v4224 = vcombine.low %v4128, %v4135
        %v4226 = vunpack.c.l.s4 1983009808
        %v4227 = vunpack.c.0.s8 %v4226
        %v4228 = vlaneseq
        %v4229 = vshrl.u32 %v4228, 7
        %v4230 = vsub.s32 %v4227, %v4229
        %v4231 = vrot.slane %v4224, %v4230
        %v4232 = vcombine.low %v4152, %v4153
        %v4234 = vunpack.c.l.s4 1983009808
        %v4235 = vunpack.c.0.s8 %v4234
        %v4236 = vlaneseq
        %v4237 = vshrl.u32 %v4236, 7
        %v4238 = vsub.s32 %v4235, %v4237
        %v4239 = vrot.slane %v4232, %v4238
        %v4240 = vcombine.low %v4144, %v4151
        %v4242 = vunpack.c.l.s4 1983009808
        %v4243 = vunpack.c.0.s8 %v4242
        %v4244 = vlaneseq
        %v4245 = vshrl.u32 %v4244, 7
        %v4246 = vsub.s32 %v4243, %v4245
        %v4247 = vrot.slane %v4240, %v4246
        %v4248 = vcombine.low %v4154, %v4155
        %v4250 = vunpack.c.l.s4 1983009808
        %v4251 = vunpack.c.0.s8 %v4250
        %v4252 = vlaneseq
        %v4253 = vshrl.u32 %v4252, 7
        %v4254 = vsub.s32 %v4251, %v4253
        %v4255 = vrot.slane %v4248, %v4254
        %v4256 = vcombine.low %v4231, %v4239
        %v4257 = vcombine.high %v4231, %v4239
        %v4259 = vunpack.c.l.s4 1934713408
        %v4260 = vunpack.c.0.s8 %v4259
        %v4261 = vlaneseq
        %v4262 = vshrl.u32 %v4261, 7
        %v4263 = vsub.s32 %v4260, %v4262
        %v4264 = vrot.slane %v4256, %v4263
        %v4266 = vunpack.c.l.s4 1934713408
        %v4267 = vunpack.c.0.s8 %v4266
        %v4268 = vlaneseq
        %v4269 = vshrl.u32 %v4268, 7
        %v4270 = vsub.s32 %v4267, %v4269
        %v4271 = vrot.slane %v4257, %v4270
        %v4272 = vcombine.low %v4247, %v4255
        %v4273 = vcombine.high %v4247, %v4255
        %v4275 = vunpack.c.l.s4 1934713408
        %v4276 = vunpack.c.0.s8 %v4275
        %v4277 = vlaneseq
        %v4278 = vshrl.u32 %v4277, 7
        %v4279 = vsub.s32 %v4276, %v4278
        %v4280 = vrot.slane %v4272, %v4279
        %v4282 = vunpack.c.l.s4 1934713408
        %v4283 = vunpack.c.0.s8 %v4282
        %v4284 = vlaneseq
        %v4285 = vshrl.u32 %v4284, 7
        %v4286 = vsub.s32 %v4283, %v4285
        %v4287 = vrot.slane %v4273, %v4286
        %v4288 = vcombine.low %v4264, %v4280
        %v4289 = vcombine.high %v4264, %v4280
        %v4290 = vcombine.low %v4271, %v4287
        %v4291 = vcombine.high %v4271, %v4287
        %v4292 = vcombine.low %v4196, %v4203
        %v4294 = vunpack.c.l.s4 1983009808
        %v4295 = vunpack.c.0.s8 %v4294
        %v4296 = vlaneseq
        %v4297 = vshrl.u32 %v4296, 7
        %v4298 = vsub.s32 %v4295, %v4297
        %v4299 = vrot.slane %v4292, %v4298
        %v4300 = vcombine.low %v4220, %v4221
        %v4302 = vunpack.c.l.s4 1983009808
        %v4303 = vunpack.c.0.s8 %v4302
        %v4304 = vlaneseq
        %v4305 = vshrl.u32 %v4304, 7
        %v4306 = vsub.s32 %v4303, %v4305
        %v4307 = vrot.slane %v4300, %v4306
        %v4308 = vcombine.low %v4212, %v4219
        %v4310 = vunpack.c.l.s4 1983009808
        %v4311 = vunpack.c.0.s8 %v4310
        %v4312 = vlaneseq
        %v4313 = vshrl.u32 %v4312, 7
        %v4314 = vsub.s32 %v4311, %v4313
        %v4315 = vrot.slane %v4308, %v4314
        %v4316 = vcombine.low %v4222, %v4223
        %v4318 = vunpack.c.l.s4 1983009808
        %v4319 = vunpack.c.0.s8 %v4318
        %v4320 = vlaneseq
        %v4321 = vshrl.u32 %v4320, 7
        %v4322 = vsub.s32 %v4319, %v4321
        %v4323 = vrot.slane %v4316, %v4322
        %v4324 = vcombine.low %v4299, %v4307
        %v4325 = vcombine.high %v4299, %v4307
        %v4327 = vunpack.c.l.s4 1934713408
        %v4328 = vunpack.c.0.s8 %v4327
        %v4329 = vlaneseq
        %v4330 = vshrl.u32 %v4329, 7
        %v4331 = vsub.s32 %v4328, %v4330
        %v4332 = vrot.slane %v4324, %v4331
        %v4334 = vunpack.c.l.s4 1934713408
        %v4335 = vunpack.c.0.s8 %v4334
        %v4336 = vlaneseq
        %v4337 = vshrl.u32 %v4336, 7
        %v4338 = vsub.s32 %v4335, %v4337
        %v4339 = vrot.slane %v4325, %v4338
        %v4340 = vcombine.low %v4315, %v4323
        %v4341 = vcombine.high %v4315, %v4323
        %v4343 = vunpack.c.l.s4 1934713408
        %v4344 = vunpack.c.0.s8 %v4343
        %v4345 = vlaneseq
        %v4346 = vshrl.u32 %v4345, 7
        %v4347 = vsub.s32 %v4344, %v4346
        %v4348 = vrot.slane %v4340, %v4347
        %v4350 = vunpack.c.l.s4 1934713408
        %v4351 = vunpack.c.0.s8 %v4350
        %v4352 = vlaneseq
        %v4353 = vshrl.u32 %v4352, 7
        %v4354 = vsub.s32 %v4351, %v4353
        %v4355 = vrot.slane %v4341, %v4354
        %v4356 = vcombine.low %v4332, %v4348
        %v4357 = vcombine.high %v4332, %v4348
        %v4358 = vcombine.low %v4339, %v4355
        %v4359 = vcombine.high %v4339, %v4355
        %v4362 = vpack.i.b16 %v4356, %v4288
        %v4364 = vshrl.u32 %v4288, 16
        %v4365 = vshrl.u32 %v4356, 16
        %v4366 = vpack.i.b16 %v4365, %v4364
        %v4370 = vpack.i.b16 %v4357, %v4289
        %v4372 = vshrl.u32 %v4289, 16
        %v4373 = vshrl.u32 %v4357, 16
        %v4374 = vpack.i.b16 %v4373, %v4372
        %v4378 = vpack.i.b16 %v4358, %v4290
        %v4380 = vshrl.u32 %v4290, 16
        %v4381 = vshrl.u32 %v4358, 16
        %v4382 = vpack.i.b16 %v4381, %v4380
        %v4386 = vpack.i.b16 %v4359, %v4291
        %v4388 = vshrl.u32 %v4291, 16
        %v4389 = vshrl.u32 %v4359, 16
        %v4390 = vpack.i.b16 %v4389, %v4388
        %v4393 = vsel %vm1929, %v3676, 0
        %v4396 = vsel %vm1929, %v4019, 0
        %4398 = vmatprep.subr.bf16.mxu0 0
        %4399 = vmatpush1.bf16.xpose.msra.mxu0 %v4396
        %4400 = vmatprep.subr.bf16.mxu0 0
        %4401 = vmatpush1.bf16.xpose.msra.mxu0 0
        %4402 = vmatprep.subr.bf16.mxu0 0
        %4403 = vmatpush1.bf16.xpose.msra.mxu0 0
        %4404 = vmatprep.subr.bf16.mxu0 0
        %4405 = vmatpush1.bf16.xpose.msra.mxu0 0
        %4406 = vmatprep.subr.bf16.mxu0 0
        %4407 = vmatpush1.bf16.xpose.msra.mxu0 0
        %4408 = vmatprep.subr.bf16.mxu0 0
        %4409 = vmatpush1.bf16.xpose.msra.mxu0 0
        %4410 = vmatprep.subr.bf16.mxu0 0
        %4411 = vmatpush1.bf16.xpose.msra.mxu0 0
        %4412 = vmatprep.subr.bf16.mxu0 0
        %4413 = vmatpush1.bf16.xpose.msra.mxu0 0
        %4414 = vmatprep.subr.bf16.mxu0 0
        %4415 = vmatpush1.bf16.xpose.msra.mxu0 0
        %4416 = vmatprep.subr.bf16.mxu0 0
        %4417 = vmatpush1.bf16.xpose.msra.mxu0 0
        %4418 = vmatprep.subr.bf16.mxu0 0
        %4419 = vmatpush1.bf16.xpose.msra.mxu0 0
        %4420 = vmatprep.subr.bf16.mxu0 0
        %4421 = vmatpush1.bf16.xpose.msra.mxu0 0
        %4422 = vmatprep.subr.bf16.mxu0 0
        %4423 = vmatpush1.bf16.xpose.msra.mxu0 0
        %4424 = vmatprep.subr.bf16.mxu0 0
        %4425 = vmatpush1.bf16.xpose.msra.mxu0 0
        %4426 = vmatprep.subr.bf16.mxu0 0
        %4427 = vmatpush1.bf16.xpose.msra.mxu0 0
        %4428 = vmatprep.subr.bf16.mxu0 0
        %4429 = vmatpush1.bf16.xpose.msra.mxu0 0
        %4430 = vmatprep.mubr.bf16.mxu0 0
        %4431 = vmatmul.mubr.bf16.gmra.mrb[0].mxu0 %v4393
        %v4432 = vpop.f32.mrb[0].mxu0
        %v4433 = vadd.f32 0.0, %v4432
        %v4434 = vpop.f32.mrb[0].mxu0
        %v4435 = vpop.f32.mrb[0].mxu0
        %v4436 = vpop.f32.mrb[0].mxu0
        %4437 = vdwg.mxu0
        %v4439 = vsel %vm1929, %v3679, 0
        %v4442 = vsel %vm1929, %v4022, 0
        %4444 = vmatprep.subr.bf16.mxu0 0
        %4445 = vmatpush1.bf16.xpose.msra.mxu0 %v4442
        %4446 = vmatprep.subr.bf16.mxu0 0
        %4447 = vmatpush1.bf16.xpose.msra.mxu0 0
        %4448 = vmatprep.subr.bf16.mxu0 0
        %4449 = vmatpush1.bf16.xpose.msra.mxu0 0
        %4450 = vmatprep.subr.bf16.mxu0 0
        %4451 = vmatpush1.bf16.xpose.msra.mxu0 0
        %4452 = vmatprep.subr.bf16.mxu0 0
        %4453 = vmatpush1.bf16.xpose.msra.mxu0 0
        %4454 = vmatprep.subr.bf16.mxu0 0
        %4455 = vmatpush1.bf16.xpose.msra.mxu0 0
        %4456 = vmatprep.subr.bf16.mxu0 0
        %4457 = vmatpush1.bf16.xpose.msra.mxu0 0
        %4458 = vmatprep.subr.bf16.mxu0 0
        %4459 = vmatpush1.bf16.xpose.msra.mxu0 0
        %4460 = vmatprep.subr.bf16.mxu0 0
        %4461 = vmatpush1.bf16.xpose.msra.mxu0 0
        %4462 = vmatprep.subr.bf16.mxu0 0
        %4463 = vmatpush1.bf16.xpose.msra.mxu0 0
        %4464 = vmatprep.subr.bf16.mxu0 0
        %4465 = vmatpush1.bf16.xpose.msra.mxu0 0
        %4466 = vmatprep.subr.bf16.mxu0 0
        %4467 = vmatpush1.bf16.xpose.msra.mxu0 0
        %4468 = vmatprep.subr.bf16.mxu0 0
        %4469 = vmatpush1.bf16.xpose.msra.mxu0 0
        %4470 = vmatprep.subr.bf16.mxu0 0
        %4471 = vmatpush1.bf16.xpose.msra.mxu0 0
        %4472 = vmatprep.subr.bf16.mxu0 0
        %4473 = vmatpush1.bf16.xpose.msra.mxu0 0
        %4474 = vmatprep.subr.bf16.mxu0 0
        %4475 = vmatpush1.bf16.xpose.msra.mxu0 0
        %4476 = vmatprep.mubr.bf16.mxu0 0
        %4477 = vmatmul.mubr.bf16.gmra.mrb[0].mxu0 %v4439
        %v4478 = vpop.f32.mrb[0].mxu0
        %v4479 = vadd.f32 0.0, %v4478
        %v4480 = vpop.f32.mrb[0].mxu0
        %v4481 = vpop.f32.mrb[0].mxu0
        %v4482 = vpop.f32.mrb[0].mxu0
        %4483 = vdwg.mxu0
        %v4485 = vsel %vm1929, %v3682, 0
        %v4488 = vsel %vm1929, %v4025, 0
        %4490 = vmatprep.subr.bf16.mxu0 0
        %4491 = vmatpush1.bf16.xpose.msra.mxu0 %v4488
        %4492 = vmatprep.subr.bf16.mxu0 0
        %4493 = vmatpush1.bf16.xpose.msra.mxu0 0
        %4494 = vmatprep.subr.bf16.mxu0 0
        %4495 = vmatpush1.bf16.xpose.msra.mxu0 0
        %4496 = vmatprep.subr.bf16.mxu0 0
        %4497 = vmatpush1.bf16.xpose.msra.mxu0 0
        %4498 = vmatprep.subr.bf16.mxu0 0
        %4499 = vmatpush1.bf16.xpose.msra.mxu0 0
        %4500 = vmatprep.subr.bf16.mxu0 0
        %4501 = vmatpush1.bf16.xpose.msra.mxu0 0
        %4502 = vmatprep.subr.bf16.mxu0 0
        %4503 = vmatpush1.bf16.xpose.msra.mxu0 0
        %4504 = vmatprep.subr.bf16.mxu0 0
        %4505 = vmatpush1.bf16.xpose.msra.mxu0 0
        %4506 = vmatprep.subr.bf16.mxu0 0
        %4507 = vmatpush1.bf16.xpose.msra.mxu0 0
        %4508 = vmatprep.subr.bf16.mxu0 0
        %4509 = vmatpush1.bf16.xpose.msra.mxu0 0
        %4510 = vmatprep.subr.bf16.mxu0 0
        %4511 = vmatpush1.bf16.xpose.msra.mxu0 0
        %4512 = vmatprep.subr.bf16.mxu0 0
        %4513 = vmatpush1.bf16.xpose.msra.mxu0 0
        %4514 = vmatprep.subr.bf16.mxu0 0
        %4515 = vmatpush1.bf16.xpose.msra.mxu0 0
        %4516 = vmatprep.subr.bf16.mxu0 0
        %4517 = vmatpush1.bf16.xpose.msra.mxu0 0
        %4518 = vmatprep.subr.bf16.mxu0 0
        %4519 = vmatpush1.bf16.xpose.msra.mxu0 0
        %4520 = vmatprep.subr.bf16.mxu0 0
        %4521 = vmatpush1.bf16.xpose.msra.mxu0 0
        %4522 = vmatprep.mubr.bf16.mxu0 0
        %4523 = vmatmul.mubr.bf16.gmra.mrb[0].mxu0 %v4485
        %v4524 = vpop.f32.mrb[0].mxu0
        %v4525 = vadd.f32 0.0, %v4524
        %v4526 = vpop.f32.mrb[0].mxu0
        %v4527 = vpop.f32.mrb[0].mxu0
        %v4528 = vpop.f32.mrb[0].mxu0
        %4529 = vdwg.mxu0
        %v4531 = vsel %vm1929, %v3685, 0
        %v4534 = vsel %vm1929, %v4028, 0
        %4536 = vmatprep.subr.bf16.mxu0 0
        %4537 = vmatpush1.bf16.xpose.msra.mxu0 %v4534
        %4538 = vmatprep.subr.bf16.mxu0 0
        %4539 = vmatpush1.bf16.xpose.msra.mxu0 0
        %4540 = vmatprep.subr.bf16.mxu0 0
        %4541 = vmatpush1.bf16.xpose.msra.mxu0 0
        %4542 = vmatprep.subr.bf16.mxu0 0
        %4543 = vmatpush1.bf16.xpose.msra.mxu0 0
        %4544 = vmatprep.subr.bf16.mxu0 0
        %4545 = vmatpush1.bf16.xpose.msra.mxu0 0
        %4546 = vmatprep.subr.bf16.mxu0 0
        %4547 = vmatpush1.bf16.xpose.msra.mxu0 0
        %4548 = vmatprep.subr.bf16.mxu0 0
        %4549 = vmatpush1.bf16.xpose.msra.mxu0 0
        %4550 = vmatprep.subr.bf16.mxu0 0
        %4551 = vmatpush1.bf16.xpose.msra.mxu0 0
        %4552 = vmatprep.subr.bf16.mxu0 0
        %4553 = vmatpush1.bf16.xpose.msra.mxu0 0
        %4554 = vmatprep.subr.bf16.mxu0 0
        %4555 = vmatpush1.bf16.xpose.msra.mxu0 0
        %4556 = vmatprep.subr.bf16.mxu0 0
        %4557 = vmatpush1.bf16.xpose.msra.mxu0 0
        %4558 = vmatprep.subr.bf16.mxu0 0
        %4559 = vmatpush1.bf16.xpose.msra.mxu0 0
        %4560 = vmatprep.subr.bf16.mxu0 0
        %4561 = vmatpush1.bf16.xpose.msra.mxu0 0
        %4562 = vmatprep.subr.bf16.mxu0 0
        %4563 = vmatpush1.bf16.xpose.msra.mxu0 0
        %4564 = vmatprep.subr.bf16.mxu0 0
        %4565 = vmatpush1.bf16.xpose.msra.mxu0 0
        %4566 = vmatprep.subr.bf16.mxu0 0
        %4567 = vmatpush1.bf16.xpose.msra.mxu0 0
        %4568 = vmatprep.mubr.bf16.mxu0 0
        %4569 = vmatmul.mubr.bf16.gmra.mrb[0].mxu0 %v4531
        %v4570 = vpop.f32.mrb[0].mxu0
        %v4571 = vadd.f32 0.0, %v4570
        %v4572 = vpop.f32.mrb[0].mxu0
        %v4573 = vpop.f32.mrb[0].mxu0
        %v4574 = vpop.f32.mrb[0].mxu0
        %4575 = vdwg.mxu0
        %v4577 = vsel %vm1929, %v3688, 0
        %v4580 = vsel %vm1929, %v4031, 0
        %4582 = vmatprep.subr.bf16.mxu0 0
        %4583 = vmatpush1.bf16.xpose.msra.mxu0 %v4580
        %4584 = vmatprep.subr.bf16.mxu0 0
        %4585 = vmatpush1.bf16.xpose.msra.mxu0 0
        %4586 = vmatprep.subr.bf16.mxu0 0
        %4587 = vmatpush1.bf16.xpose.msra.mxu0 0
        %4588 = vmatprep.subr.bf16.mxu0 0
        %4589 = vmatpush1.bf16.xpose.msra.mxu0 0
        %4590 = vmatprep.subr.bf16.mxu0 0
        %4591 = vmatpush1.bf16.xpose.msra.mxu0 0
        %4592 = vmatprep.subr.bf16.mxu0 0
        %4593 = vmatpush1.bf16.xpose.msra.mxu0 0
        %4594 = vmatprep.subr.bf16.mxu0 0
        %4595 = vmatpush1.bf16.xpose.msra.mxu0 0
        %4596 = vmatprep.subr.bf16.mxu0 0
        %4597 = vmatpush1.bf16.xpose.msra.mxu0 0
        %4598 = vmatprep.subr.bf16.mxu0 0
        %4599 = vmatpush1.bf16.xpose.msra.mxu0 0
        %4600 = vmatprep.subr.bf16.mxu0 0
        %4601 = vmatpush1.bf16.xpose.msra.mxu0 0
        %4602 = vmatprep.subr.bf16.mxu0 0
        %4603 = vmatpush1.bf16.xpose.msra.mxu0 0
        %4604 = vmatprep.subr.bf16.mxu0 0
        %4605 = vmatpush1.bf16.xpose.msra.mxu0 0
        %4606 = vmatprep.subr.bf16.mxu0 0
        %4607 = vmatpush1.bf16.xpose.msra.mxu0 0
        %4608 = vmatprep.subr.bf16.mxu0 0
        %4609 = vmatpush1.bf16.xpose.msra.mxu0 0
        %4610 = vmatprep.subr.bf16.mxu0 0
        %4611 = vmatpush1.bf16.xpose.msra.mxu0 0
        %4612 = vmatprep.subr.bf16.mxu0 0
        %4613 = vmatpush1.bf16.xpose.msra.mxu0 0
        %4614 = vmatprep.mubr.bf16.mxu0 0
        %4615 = vmatmul.mubr.bf16.gmra.mrb[0].mxu0 %v4577
        %v4616 = vpop.f32.mrb[0].mxu0
        %v4617 = vadd.f32 0.0, %v4616
        %v4618 = vpop.f32.mrb[0].mxu0
        %v4619 = vpop.f32.mrb[0].mxu0
        %v4620 = vpop.f32.mrb[0].mxu0
        %4621 = vdwg.mxu0
        %v4623 = vsel %vm1929, %v3691, 0
        %v4626 = vsel %vm1929, %v4034, 0
        %4628 = vmatprep.subr.bf16.mxu0 0
        %4629 = vmatpush1.bf16.xpose.msra.mxu0 %v4626
        %4630 = vmatprep.subr.bf16.mxu0 0
        %4631 = vmatpush1.bf16.xpose.msra.mxu0 0
        %4632 = vmatprep.subr.bf16.mxu0 0
        %4633 = vmatpush1.bf16.xpose.msra.mxu0 0
        %4634 = vmatprep.subr.bf16.mxu0 0
        %4635 = vmatpush1.bf16.xpose.msra.mxu0 0
        %4636 = vmatprep.subr.bf16.mxu0 0
        %4637 = vmatpush1.bf16.xpose.msra.mxu0 0
        %4638 = vmatprep.subr.bf16.mxu0 0
        %4639 = vmatpush1.bf16.xpose.msra.mxu0 0
        %4640 = vmatprep.subr.bf16.mxu0 0
        %4641 = vmatpush1.bf16.xpose.msra.mxu0 0
        %4642 = vmatprep.subr.bf16.mxu0 0
        %4643 = vmatpush1.bf16.xpose.msra.mxu0 0
        %4644 = vmatprep.subr.bf16.mxu0 0
        %4645 = vmatpush1.bf16.xpose.msra.mxu0 0
        %4646 = vmatprep.subr.bf16.mxu0 0
        %4647 = vmatpush1.bf16.xpose.msra.mxu0 0
        %4648 = vmatprep.subr.bf16.mxu0 0
        %4649 = vmatpush1.bf16.xpose.msra.mxu0 0
        %4650 = vmatprep.subr.bf16.mxu0 0
        %4651 = vmatpush1.bf16.xpose.msra.mxu0 0
        %4652 = vmatprep.subr.bf16.mxu0 0
        %4653 = vmatpush1.bf16.xpose.msra.mxu0 0
        %4654 = vmatprep.subr.bf16.mxu0 0
        %4655 = vmatpush1.bf16.xpose.msra.mxu0 0
        %4656 = vmatprep.subr.bf16.mxu0 0
        %4657 = vmatpush1.bf16.xpose.msra.mxu0 0
        %4658 = vmatprep.subr.bf16.mxu0 0
        %4659 = vmatpush1.bf16.xpose.msra.mxu0 0
        %4660 = vmatprep.mubr.bf16.mxu0 0
        %4661 = vmatmul.mubr.bf16.gmra.mrb[0].mxu0 %v4623
        %v4662 = vpop.f32.mrb[0].mxu0
        %v4663 = vadd.f32 0.0, %v4662
        %v4664 = vpop.f32.mrb[0].mxu0
        %v4665 = vpop.f32.mrb[0].mxu0
        %v4666 = vpop.f32.mrb[0].mxu0
        %4667 = vdwg.mxu0
        %v4669 = vsel %vm1929, %v3694, 0
        %v4672 = vsel %vm1929, %v4037, 0
        %4674 = vmatprep.subr.bf16.mxu0 0
        %4675 = vmatpush1.bf16.xpose.msra.mxu0 %v4672
        %4676 = vmatprep.subr.bf16.mxu0 0
        %4677 = vmatpush1.bf16.xpose.msra.mxu0 0
        %4678 = vmatprep.subr.bf16.mxu0 0
        %4679 = vmatpush1.bf16.xpose.msra.mxu0 0
        %4680 = vmatprep.subr.bf16.mxu0 0
        %4681 = vmatpush1.bf16.xpose.msra.mxu0 0
        %4682 = vmatprep.subr.bf16.mxu0 0
        %4683 = vmatpush1.bf16.xpose.msra.mxu0 0
        %4684 = vmatprep.subr.bf16.mxu0 0
        %4685 = vmatpush1.bf16.xpose.msra.mxu0 0
        %4686 = vmatprep.subr.bf16.mxu0 0
        %4687 = vmatpush1.bf16.xpose.msra.mxu0 0
        %4688 = vmatprep.subr.bf16.mxu0 0
        %4689 = vmatpush1.bf16.xpose.msra.mxu0 0
        %4690 = vmatprep.subr.bf16.mxu0 0
        %4691 = vmatpush1.bf16.xpose.msra.mxu0 0
        %4692 = vmatprep.subr.bf16.mxu0 0
        %4693 = vmatpush1.bf16.xpose.msra.mxu0 0
        %4694 = vmatprep.subr.bf16.mxu0 0
        %4695 = vmatpush1.bf16.xpose.msra.mxu0 0
        %4696 = vmatprep.subr.bf16.mxu0 0
        %4697 = vmatpush1.bf16.xpose.msra.mxu0 0
        %4698 = vmatprep.subr.bf16.mxu0 0
        %4699 = vmatpush1.bf16.xpose.msra.mxu0 0
        %4700 = vmatprep.subr.bf16.mxu0 0
        %4701 = vmatpush1.bf16.xpose.msra.mxu0 0
        %4702 = vmatprep.subr.bf16.mxu0 0
        %4703 = vmatpush1.bf16.xpose.msra.mxu0 0
        %4704 = vmatprep.subr.bf16.mxu0 0
        %4705 = vmatpush1.bf16.xpose.msra.mxu0 0
        %4706 = vmatprep.mubr.bf16.mxu0 0
        %4707 = vmatmul.mubr.bf16.gmra.mrb[0].mxu0 %v4669
        %v4708 = vpop.f32.mrb[0].mxu0
        %v4709 = vadd.f32 0.0, %v4708
        %v4710 = vpop.f32.mrb[0].mxu0
        %v4711 = vpop.f32.mrb[0].mxu0
        %v4712 = vpop.f32.mrb[0].mxu0
        %4713 = vdwg.mxu0
        %v4715 = vsel %vm1929, %v3697, 0
        %v4718 = vsel %vm1929, %v4040, 0
        %4720 = vmatprep.subr.bf16.mxu0 0
        %4721 = vmatpush1.bf16.xpose.msra.mxu0 %v4718
        %4722 = vmatprep.subr.bf16.mxu0 0
        %4723 = vmatpush1.bf16.xpose.msra.mxu0 0
        %4724 = vmatprep.subr.bf16.mxu0 0
        %4725 = vmatpush1.bf16.xpose.msra.mxu0 0
        %4726 = vmatprep.subr.bf16.mxu0 0
        %4727 = vmatpush1.bf16.xpose.msra.mxu0 0
        %4728 = vmatprep.subr.bf16.mxu0 0
        %4729 = vmatpush1.bf16.xpose.msra.mxu0 0
        %4730 = vmatprep.subr.bf16.mxu0 0
        %4731 = vmatpush1.bf16.xpose.msra.mxu0 0
        %4732 = vmatprep.subr.bf16.mxu0 0
        %4733 = vmatpush1.bf16.xpose.msra.mxu0 0
        %4734 = vmatprep.subr.bf16.mxu0 0
        %4735 = vmatpush1.bf16.xpose.msra.mxu0 0
        %4736 = vmatprep.subr.bf16.mxu0 0
        %4737 = vmatpush1.bf16.xpose.msra.mxu0 0
        %4738 = vmatprep.subr.bf16.mxu0 0
        %4739 = vmatpush1.bf16.xpose.msra.mxu0 0
        %4740 = vmatprep.subr.bf16.mxu0 0
        %4741 = vmatpush1.bf16.xpose.msra.mxu0 0
        %4742 = vmatprep.subr.bf16.mxu0 0
        %4743 = vmatpush1.bf16.xpose.msra.mxu0 0
        %4744 = vmatprep.subr.bf16.mxu0 0
        %4745 = vmatpush1.bf16.xpose.msra.mxu0 0
        %4746 = vmatprep.subr.bf16.mxu0 0
        %4747 = vmatpush1.bf16.xpose.msra.mxu0 0
        %4748 = vmatprep.subr.bf16.mxu0 0
        %4749 = vmatpush1.bf16.xpose.msra.mxu0 0
        %4750 = vmatprep.subr.bf16.mxu0 0
        %4751 = vmatpush1.bf16.xpose.msra.mxu0 0
        %4752 = vmatprep.mubr.bf16.mxu0 0
        %4753 = vmatmul.mubr.bf16.gmra.mrb[0].mxu0 %v4715
        %v4754 = vpop.f32.mrb[0].mxu0
        %v4755 = vadd.f32 0.0, %v4754
        %v4756 = vpop.f32.mrb[0].mxu0
        %v4757 = vpop.f32.mrb[0].mxu0
        %v4758 = vpop.f32.mrb[0].mxu0
        %4759 = vdwg.mxu0
        %v4760 = vsel %vm1929, %v4433, -inf
        %4761 = vmax.xlane.f32.xlu0 %v4760
        %v4762 = vpop.xlane.xlu0 %4761
        %v4763 = vsel %vm1929, %v4479, -inf
        %4764 = vmax.xlane.f32.xlu0 %v4763
        %v4765 = vpop.xlane.xlu0 %4764
        %v4766 = vsel %vm1929, %v4525, -inf
        %4767 = vmax.xlane.f32.xlu0 %v4766
        %v4768 = vpop.xlane.xlu0 %4767
        %v4769 = vsel %vm1929, %v4571, -inf
        %4770 = vmax.xlane.f32.xlu0 %v4769
        %v4771 = vpop.xlane.xlu0 %4770
        %v4772 = vsel %vm1929, %v4617, -inf
        %4773 = vmax.xlane.f32.xlu0 %v4772
        %v4774 = vpop.xlane.xlu0 %4773
        %v4775 = vsel %vm1929, %v4663, -inf
        %4776 = vmax.xlane.f32.xlu0 %v4775
        %v4777 = vpop.xlane.xlu0 %4776
        %v4778 = vsel %vm1929, %v4709, -inf
        %4779 = vmax.xlane.f32.xlu0 %v4778
        %v4780 = vpop.xlane.xlu0 %4779
        %v4781 = vsel %vm1929, %v4755, -inf
        %4782 = vmax.xlane.f32.xlu0 %v4781
        %v4783 = vpop.xlane.xlu0 %4782
        %v4784 = vsub.f32 %v4433, %v4762
        %v4785 = vsub.f32 %v4479, %v4765
        %v4786 = vsub.f32 %v4525, %v4768
        %v4787 = vsub.f32 %v4571, %v4771
        %v4788 = vsub.f32 %v4617, %v4774
        %v4789 = vsub.f32 %v4663, %v4777
        %v4790 = vsub.f32 %v4709, %v4780
        %v4791 = vsub.f32 %v4755, %v4783
        %v4792 = vmul.f32 %v4784, 1.442695
        %v4793 = vpow.pop %v4792
        %v4794 = vmul.f32 %v4785, 1.442695
        %v4795 = vpow.pop %v4794
        %v4796 = vmul.f32 %v4786, 1.442695
        %v4797 = vpow.pop %v4796
        %v4798 = vmul.f32 %v4787, 1.442695
        %v4799 = vpow.pop %v4798
        %v4800 = vmul.f32 %v4788, 1.442695
        %v4801 = vpow.pop %v4800
        %v4802 = vmul.f32 %v4789, 1.442695
        %v4803 = vpow.pop %v4802
        %v4804 = vmul.f32 %v4790, 1.442695
        %v4805 = vpow.pop %v4804
        %v4806 = vmul.f32 %v4791, 1.442695
        %v4807 = vpow.pop %v4806
        %v4808 = vsel %vm1929, %v4793, 0.0
        %4809 = vadd.xlane.f32.xlu0 %v4808
        %v4810 = vpop.xlane.xlu0 %4809
        %v4811 = vsel %vm1929, %v4795, 0.0
        %4812 = vadd.xlane.f32.xlu0 %v4811
        %v4813 = vpop.xlane.xlu0 %4812
        %v4814 = vsel %vm1929, %v4797, 0.0
        %4815 = vadd.xlane.f32.xlu0 %v4814
        %v4816 = vpop.xlane.xlu0 %4815
        %v4817 = vsel %vm1929, %v4799, 0.0
        %4818 = vadd.xlane.f32.xlu0 %v4817
        %v4819 = vpop.xlane.xlu0 %4818
        %v4820 = vsel %vm1929, %v4801, 0.0
        %4821 = vadd.xlane.f32.xlu0 %v4820
        %v4822 = vpop.xlane.xlu0 %4821
        %v4823 = vsel %vm1929, %v4803, 0.0
        %4824 = vadd.xlane.f32.xlu0 %v4823
        %v4825 = vpop.xlane.xlu0 %4824
        %v4826 = vsel %vm1929, %v4805, 0.0
        %4827 = vadd.xlane.f32.xlu0 %v4826
        %v4828 = vpop.xlane.xlu0 %4827
        %v4829 = vsel %vm1929, %v4807, 0.0
        %4830 = vadd.xlane.f32.xlu0 %v4829
        %v4831 = vpop.xlane.xlu0 %4830
        %v4832 = vrcp.pop %v4810
        %v4833 = vrcp.pop %v4813
        %v4834 = vrcp.pop %v4816
        %v4835 = vrcp.pop %v4819
        %v4836 = vrcp.pop %v4822
        %v4837 = vrcp.pop %v4825
        %v4838 = vrcp.pop %v4828
        %v4839 = vrcp.pop %v4831
        %v4840 = vmul.f32 %v4793, %v4832
        %v4841 = vmul.f32 %v4795, %v4833
        %v4842 = vmul.f32 %v4797, %v4834
        %v4843 = vmul.f32 %v4799, %v4835
        %v4844 = vmul.f32 %v4801, %v4836
        %v4845 = vmul.f32 %v4803, %v4837
        %v4846 = vmul.f32 %v4805, %v4838
        %v4847 = vmul.f32 %v4807, %v4839
        %v4848 = vpack.c.bf16 %v4840, %v4840
        %v4849 = vpack.c.bf16 %v4841, %v4841
        %v4850 = vpack.c.bf16 %v4842, %v4842
        %v4851 = vpack.c.bf16 %v4843, %v4843
        %v4852 = vpack.c.bf16 %v4844, %v4844
        %v4853 = vpack.c.bf16 %v4845, %v4845
        %v4854 = vpack.c.bf16 %v4846, %v4846
        %v4855 = vpack.c.bf16 %v4847, %v4847
        %v4857 = vsel %vm1929, %v4848, 0
        %4859 = vmatprep.subr.bf16.mxu0 0
        %4860 = vmatpush1.bf16.msra.mxu0 %v4362
        %4861 = vmatprep.subr.bf16.mxu0 0
        %4862 = vmatpush1.bf16.msra.mxu0 0
        %4863 = vmatprep.subr.bf16.mxu0 0
        %4864 = vmatpush1.bf16.msra.mxu0 0
        %4865 = vmatprep.subr.bf16.mxu0 0
        %4866 = vmatpush1.bf16.msra.mxu0 0
        %4867 = vmatprep.subr.bf16.mxu0 0
        %4868 = vmatpush1.bf16.msra.mxu0 0
        %4869 = vmatprep.subr.bf16.mxu0 0
        %4870 = vmatpush1.bf16.msra.mxu0 0
        %4871 = vmatprep.subr.bf16.mxu0 0
        %4872 = vmatpush1.bf16.msra.mxu0 0
        %4873 = vmatprep.subr.bf16.mxu0 0
        %4874 = vmatpush1.bf16.msra.mxu0 0
        %4875 = vmatprep.subr.bf16.mxu0 0
        %4876 = vmatpush1.bf16.msra.mxu0 0
        %4877 = vmatprep.subr.bf16.mxu0 0
        %4878 = vmatpush1.bf16.msra.mxu0 0
        %4879 = vmatprep.subr.bf16.mxu0 0
        %4880 = vmatpush1.bf16.msra.mxu0 0
        %4881 = vmatprep.subr.bf16.mxu0 0
        %4882 = vmatpush1.bf16.msra.mxu0 0
        %4883 = vmatprep.subr.bf16.mxu0 0
        %4884 = vmatpush1.bf16.msra.mxu0 0
        %4885 = vmatprep.subr.bf16.mxu0 0
        %4886 = vmatpush1.bf16.msra.mxu0 0
        %4887 = vmatprep.subr.bf16.mxu0 0
        %4888 = vmatpush1.bf16.msra.mxu0 0
        %4889 = vmatprep.subr.bf16.mxu0 0
        %4890 = vmatpush1.bf16.msra.mxu0 0
        %4891 = vmatprep.mubr.bf16.mxu0 0
        %4892 = vmatmul.mubr.bf16.gmra.mrb[0].mxu0 %v4857
        %v4893 = vpop.f32.mrb[0].mxu0
        %v4894 = vadd.f32 0.0, %v4893
        %v4895 = vpop.f32.mrb[0].mxu0
        %v4896 = vpop.f32.mrb[0].mxu0
        %v4897 = vpop.f32.mrb[0].mxu0
        %4898 = vdwg.mxu0
        %v4900 = vsel %vm1929, %v4849, 0
        %4902 = vmatprep.subr.bf16.mxu0 0
        %4903 = vmatpush1.bf16.msra.mxu0 %v4366
        %4904 = vmatprep.subr.bf16.mxu0 0
        %4905 = vmatpush1.bf16.msra.mxu0 0
        %4906 = vmatprep.subr.bf16.mxu0 0
        %4907 = vmatpush1.bf16.msra.mxu0 0
        %4908 = vmatprep.subr.bf16.mxu0 0
        %4909 = vmatpush1.bf16.msra.mxu0 0
        %4910 = vmatprep.subr.bf16.mxu0 0
        %4911 = vmatpush1.bf16.msra.mxu0 0
        %4912 = vmatprep.subr.bf16.mxu0 0
        %4913 = vmatpush1.bf16.msra.mxu0 0
        %4914 = vmatprep.subr.bf16.mxu0 0
        %4915 = vmatpush1.bf16.msra.mxu0 0
        %4916 = vmatprep.subr.bf16.mxu0 0
        %4917 = vmatpush1.bf16.msra.mxu0 0
        %4918 = vmatprep.subr.bf16.mxu0 0
        %4919 = vmatpush1.bf16.msra.mxu0 0
        %4920 = vmatprep.subr.bf16.mxu0 0
        %4921 = vmatpush1.bf16.msra.mxu0 0
        %4922 = vmatprep.subr.bf16.mxu0 0
        %4923 = vmatpush1.bf16.msra.mxu0 0
        %4924 = vmatprep.subr.bf16.mxu0 0
        %4925 = vmatpush1.bf16.msra.mxu0 0
        %4926 = vmatprep.subr.bf16.mxu0 0
        %4927 = vmatpush1.bf16.msra.mxu0 0
        %4928 = vmatprep.subr.bf16.mxu0 0
        %4929 = vmatpush1.bf16.msra.mxu0 0
        %4930 = vmatprep.subr.bf16.mxu0 0
        %4931 = vmatpush1.bf16.msra.mxu0 0
        %4932 = vmatprep.subr.bf16.mxu0 0
        %4933 = vmatpush1.bf16.msra.mxu0 0
        %4934 = vmatprep.mubr.bf16.mxu0 0
        %4935 = vmatmul.mubr.bf16.gmra.mrb[0].mxu0 %v4900
        %v4936 = vpop.f32.mrb[0].mxu0
        %v4937 = vadd.f32 0.0, %v4936
        %v4938 = vpop.f32.mrb[0].mxu0
        %v4939 = vpop.f32.mrb[0].mxu0
        %v4940 = vpop.f32.mrb[0].mxu0
        %4941 = vdwg.mxu0
        %v4943 = vsel %vm1929, %v4850, 0
        %4945 = vmatprep.subr.bf16.mxu0 0
        %4946 = vmatpush1.bf16.msra.mxu0 %v4370
        %4947 = vmatprep.subr.bf16.mxu0 0
        %4948 = vmatpush1.bf16.msra.mxu0 0
        %4949 = vmatprep.subr.bf16.mxu0 0
        %4950 = vmatpush1.bf16.msra.mxu0 0
        %4951 = vmatprep.subr.bf16.mxu0 0
        %4952 = vmatpush1.bf16.msra.mxu0 0
        %4953 = vmatprep.subr.bf16.mxu0 0
        %4954 = vmatpush1.bf16.msra.mxu0 0
        %4955 = vmatprep.subr.bf16.mxu0 0
        %4956 = vmatpush1.bf16.msra.mxu0 0
        %4957 = vmatprep.subr.bf16.mxu0 0
        %4958 = vmatpush1.bf16.msra.mxu0 0
        %4959 = vmatprep.subr.bf16.mxu0 0
        %4960 = vmatpush1.bf16.msra.mxu0 0
        %4961 = vmatprep.subr.bf16.mxu0 0
        %4962 = vmatpush1.bf16.msra.mxu0 0
        %4963 = vmatprep.subr.bf16.mxu0 0
        %4964 = vmatpush1.bf16.msra.mxu0 0
        %4965 = vmatprep.subr.bf16.mxu0 0
        %4966 = vmatpush1.bf16.msra.mxu0 0
        %4967 = vmatprep.subr.bf16.mxu0 0
        %4968 = vmatpush1.bf16.msra.mxu0 0
        %4969 = vmatprep.subr.bf16.mxu0 0
        %4970 = vmatpush1.bf16.msra.mxu0 0
        %4971 = vmatprep.subr.bf16.mxu0 0
        %4972 = vmatpush1.bf16.msra.mxu0 0
        %4973 = vmatprep.subr.bf16.mxu0 0
        %4974 = vmatpush1.bf16.msra.mxu0 0
        %4975 = vmatprep.subr.bf16.mxu0 0
        %4976 = vmatpush1.bf16.msra.mxu0 0
        %4977 = vmatprep.mubr.bf16.mxu0 0
        %4978 = vmatmul.mubr.bf16.gmra.mrb[0].mxu0 %v4943
        %v4979 = vpop.f32.mrb[0].mxu0
        %v4980 = vadd.f32 0.0, %v4979
        %v4981 = vpop.f32.mrb[0].mxu0
        %v4982 = vpop.f32.mrb[0].mxu0
        %v4983 = vpop.f32.mrb[0].mxu0
        %4984 = vdwg.mxu0
        %v4986 = vsel %vm1929, %v4851, 0
        %4988 = vmatprep.subr.bf16.mxu0 0
        %4989 = vmatpush1.bf16.msra.mxu0 %v4374
        %4990 = vmatprep.subr.bf16.mxu0 0
        %4991 = vmatpush1.bf16.msra.mxu0 0
        %4992 = vmatprep.subr.bf16.mxu0 0
        %4993 = vmatpush1.bf16.msra.mxu0 0
        %4994 = vmatprep.subr.bf16.mxu0 0
        %4995 = vmatpush1.bf16.msra.mxu0 0
        %4996 = vmatprep.subr.bf16.mxu0 0
        %4997 = vmatpush1.bf16.msra.mxu0 0
        %4998 = vmatprep.subr.bf16.mxu0 0
        %4999 = vmatpush1.bf16.msra.mxu0 0
        %5000 = vmatprep.subr.bf16.mxu0 0
        %5001 = vmatpush1.bf16.msra.mxu0 0
        %5002 = vmatprep.subr.bf16.mxu0 0
        %5003 = vmatpush1.bf16.msra.mxu0 0
        %5004 = vmatprep.subr.bf16.mxu0 0
        %5005 = vmatpush1.bf16.msra.mxu0 0
        %5006 = vmatprep.subr.bf16.mxu0 0
        %5007 = vmatpush1.bf16.msra.mxu0 0
        %5008 = vmatprep.subr.bf16.mxu0 0
        %5009 = vmatpush1.bf16.msra.mxu0 0
        %5010 = vmatprep.subr.bf16.mxu0 0
        %5011 = vmatpush1.bf16.msra.mxu0 0
        %5012 = vmatprep.subr.bf16.mxu0 0
        %5013 = vmatpush1.bf16.msra.mxu0 0
        %5014 = vmatprep.subr.bf16.mxu0 0
        %5015 = vmatpush1.bf16.msra.mxu0 0
        %5016 = vmatprep.subr.bf16.mxu0 0
        %5017 = vmatpush1.bf16.msra.mxu0 0
        %5018 = vmatprep.subr.bf16.mxu0 0
        %5019 = vmatpush1.bf16.msra.mxu0 0
        %5020 = vmatprep.mubr.bf16.mxu0 0
        %5021 = vmatmul.mubr.bf16.gmra.mrb[0].mxu0 %v4986
        %v5022 = vpop.f32.mrb[0].mxu0
        %v5023 = vadd.f32 0.0, %v5022
        %v5024 = vpop.f32.mrb[0].mxu0
        %v5025 = vpop.f32.mrb[0].mxu0
        %v5026 = vpop.f32.mrb[0].mxu0
        %5027 = vdwg.mxu0
        %v5029 = vsel %vm1929, %v4852, 0
        %5031 = vmatprep.subr.bf16.mxu0 0
        %5032 = vmatpush1.bf16.msra.mxu0 %v4378
        %5033 = vmatprep.subr.bf16.mxu0 0
        %5034 = vmatpush1.bf16.msra.mxu0 0
        %5035 = vmatprep.subr.bf16.mxu0 0
        %5036 = vmatpush1.bf16.msra.mxu0 0
        %5037 = vmatprep.subr.bf16.mxu0 0
        %5038 = vmatpush1.bf16.msra.mxu0 0
        %5039 = vmatprep.subr.bf16.mxu0 0
        %5040 = vmatpush1.bf16.msra.mxu0 0
        %5041 = vmatprep.subr.bf16.mxu0 0
        %5042 = vmatpush1.bf16.msra.mxu0 0
        %5043 = vmatprep.subr.bf16.mxu0 0
        %5044 = vmatpush1.bf16.msra.mxu0 0
        %5045 = vmatprep.subr.bf16.mxu0 0
        %5046 = vmatpush1.bf16.msra.mxu0 0
        %5047 = vmatprep.subr.bf16.mxu0 0
        %5048 = vmatpush1.bf16.msra.mxu0 0
        %5049 = vmatprep.subr.bf16.mxu0 0
        %5050 = vmatpush1.bf16.msra.mxu0 0
        %5051 = vmatprep.subr.bf16.mxu0 0
        %5052 = vmatpush1.bf16.msra.mxu0 0
        %5053 = vmatprep.subr.bf16.mxu0 0
        %5054 = vmatpush1.bf16.msra.mxu0 0
        %5055 = vmatprep.subr.bf16.mxu0 0
        %5056 = vmatpush1.bf16.msra.mxu0 0
        %5057 = vmatprep.subr.bf16.mxu0 0
        %5058 = vmatpush1.bf16.msra.mxu0 0
        %5059 = vmatprep.subr.bf16.mxu0 0
        %5060 = vmatpush1.bf16.msra.mxu0 0
        %5061 = vmatprep.subr.bf16.mxu0 0
        %5062 = vmatpush1.bf16.msra.mxu0 0
        %5063 = vmatprep.mubr.bf16.mxu0 0
        %5064 = vmatmul.mubr.bf16.gmra.mrb[0].mxu0 %v5029
        %v5065 = vpop.f32.mrb[0].mxu0
        %v5066 = vadd.f32 0.0, %v5065
        %v5067 = vpop.f32.mrb[0].mxu0
        %v5068 = vpop.f32.mrb[0].mxu0
        %v5069 = vpop.f32.mrb[0].mxu0
        %5070 = vdwg.mxu0
        %v5072 = vsel %vm1929, %v4853, 0
        %5074 = vmatprep.subr.bf16.mxu0 0
        %5075 = vmatpush1.bf16.msra.mxu0 %v4382
        %5076 = vmatprep.subr.bf16.mxu0 0
        %5077 = vmatpush1.bf16.msra.mxu0 0
        %5078 = vmatprep.subr.bf16.mxu0 0
        %5079 = vmatpush1.bf16.msra.mxu0 0
        %5080 = vmatprep.subr.bf16.mxu0 0
        %5081 = vmatpush1.bf16.msra.mxu0 0
        %5082 = vmatprep.subr.bf16.mxu0 0
        %5083 = vmatpush1.bf16.msra.mxu0 0
        %5084 = vmatprep.subr.bf16.mxu0 0
        %5085 = vmatpush1.bf16.msra.mxu0 0
        %5086 = vmatprep.subr.bf16.mxu0 0
        %5087 = vmatpush1.bf16.msra.mxu0 0
        %5088 = vmatprep.subr.bf16.mxu0 0
        %5089 = vmatpush1.bf16.msra.mxu0 0
        %5090 = vmatprep.subr.bf16.mxu0 0
        %5091 = vmatpush1.bf16.msra.mxu0 0
        %5092 = vmatprep.subr.bf16.mxu0 0
        %5093 = vmatpush1.bf16.msra.mxu0 0
        %5094 = vmatprep.subr.bf16.mxu0 0
        %5095 = vmatpush1.bf16.msra.mxu0 0
        %5096 = vmatprep.subr.bf16.mxu0 0
        %5097 = vmatpush1.bf16.msra.mxu0 0
        %5098 = vmatprep.subr.bf16.mxu0 0
        %5099 = vmatpush1.bf16.msra.mxu0 0
        %5100 = vmatprep.subr.bf16.mxu0 0
        %5101 = vmatpush1.bf16.msra.mxu0 0
        %5102 = vmatprep.subr.bf16.mxu0 0
        %5103 = vmatpush1.bf16.msra.mxu0 0
        %5104 = vmatprep.subr.bf16.mxu0 0
        %5105 = vmatpush1.bf16.msra.mxu0 0
        %5106 = vmatprep.mubr.bf16.mxu0 0
        %5107 = vmatmul.mubr.bf16.gmra.mrb[0].mxu0 %v5072
        %v5108 = vpop.f32.mrb[0].mxu0
        %v5109 = vadd.f32 0.0, %v5108
        %v5110 = vpop.f32.mrb[0].mxu0
        %v5111 = vpop.f32.mrb[0].mxu0
        %v5112 = vpop.f32.mrb[0].mxu0
        %5113 = vdwg.mxu0
        %v5115 = vsel %vm1929, %v4854, 0
        %5117 = vmatprep.subr.bf16.mxu0 0
        %5118 = vmatpush1.bf16.msra.mxu0 %v4386
        %5119 = vmatprep.subr.bf16.mxu0 0
        %5120 = vmatpush1.bf16.msra.mxu0 0
        %5121 = vmatprep.subr.bf16.mxu0 0
        %5122 = vmatpush1.bf16.msra.mxu0 0
        %5123 = vmatprep.subr.bf16.mxu0 0
        %5124 = vmatpush1.bf16.msra.mxu0 0
        %5125 = vmatprep.subr.bf16.mxu0 0
        %5126 = vmatpush1.bf16.msra.mxu0 0
        %5127 = vmatprep.subr.bf16.mxu0 0
        %5128 = vmatpush1.bf16.msra.mxu0 0
        %5129 = vmatprep.subr.bf16.mxu0 0
        %5130 = vmatpush1.bf16.msra.mxu0 0
        %5131 = vmatprep.subr.bf16.mxu0 0
        %5132 = vmatpush1.bf16.msra.mxu0 0
        %5133 = vmatprep.subr.bf16.mxu0 0
        %5134 = vmatpush1.bf16.msra.mxu0 0
        %5135 = vmatprep.subr.bf16.mxu0 0
        %5136 = vmatpush1.bf16.msra.mxu0 0
        %5137 = vmatprep.subr.bf16.mxu0 0
        %5138 = vmatpush1.bf16.msra.mxu0 0
        %5139 = vmatprep.subr.bf16.mxu0 0
        %5140 = vmatpush1.bf16.msra.mxu0 0
        %5141 = vmatprep.subr.bf16.mxu0 0
        %5142 = vmatpush1.bf16.msra.mxu0 0
        %5143 = vmatprep.subr.bf16.mxu0 0
        %5144 = vmatpush1.bf16.msra.mxu0 0
        %5145 = vmatprep.subr.bf16.mxu0 0
        %5146 = vmatpush1.bf16.msra.mxu0 0
        %5147 = vmatprep.subr.bf16.mxu0 0
        %5148 = vmatpush1.bf16.msra.mxu0 0
        %5149 = vmatprep.mubr.bf16.mxu0 0
        %5150 = vmatmul.mubr.bf16.gmra.mrb[0].mxu0 %v5115
        %v5151 = vpop.f32.mrb[0].mxu0
        %v5152 = vadd.f32 0.0, %v5151
        %v5153 = vpop.f32.mrb[0].mxu0
        %v5154 = vpop.f32.mrb[0].mxu0
        %v5155 = vpop.f32.mrb[0].mxu0
        %5156 = vdwg.mxu0
        %v5158 = vsel %vm1929, %v4855, 0
        %5160 = vmatprep.subr.bf16.mxu0 0
        %5161 = vmatpush1.bf16.msra.mxu0 %v4390
        %5162 = vmatprep.subr.bf16.mxu0 0
        %5163 = vmatpush1.bf16.msra.mxu0 0
        %5164 = vmatprep.subr.bf16.mxu0 0
        %5165 = vmatpush1.bf16.msra.mxu0 0
        %5166 = vmatprep.subr.bf16.mxu0 0
        %5167 = vmatpush1.bf16.msra.mxu0 0
        %5168 = vmatprep.subr.bf16.mxu0 0
        %5169 = vmatpush1.bf16.msra.mxu0 0
        %5170 = vmatprep.subr.bf16.mxu0 0
        %5171 = vmatpush1.bf16.msra.mxu0 0
        %5172 = vmatprep.subr.bf16.mxu0 0
        %5173 = vmatpush1.bf16.msra.mxu0 0
        %5174 = vmatprep.subr.bf16.mxu0 0
        %5175 = vmatpush1.bf16.msra.mxu0 0
        %5176 = vmatprep.subr.bf16.mxu0 0
        %5177 = vmatpush1.bf16.msra.mxu0 0
        %5178 = vmatprep.subr.bf16.mxu0 0
        %5179 = vmatpush1.bf16.msra.mxu0 0
        %5180 = vmatprep.subr.bf16.mxu0 0
        %5181 = vmatpush1.bf16.msra.mxu0 0
        %5182 = vmatprep.subr.bf16.mxu0 0
        %5183 = vmatpush1.bf16.msra.mxu0 0
        %5184 = vmatprep.subr.bf16.mxu0 0
        %5185 = vmatpush1.bf16.msra.mxu0 0
        %5186 = vmatprep.subr.bf16.mxu0 0
        %5187 = vmatpush1.bf16.msra.mxu0 0
        %5188 = vmatprep.subr.bf16.mxu0 0
        %5189 = vmatpush1.bf16.msra.mxu0 0
        %5190 = vmatprep.subr.bf16.mxu0 0
        %5191 = vmatpush1.bf16.msra.mxu0 0
        %5192 = vmatprep.mubr.bf16.mxu0 0
        %5193 = vmatmul.mubr.bf16.gmra.mrb[0].mxu0 %v5158
        %v5194 = vpop.f32.mrb[0].mxu0
        %v5195 = vadd.f32 0.0, %v5194
        %v5196 = vpop.f32.mrb[0].mxu0
        %v5197 = vpop.f32.mrb[0].mxu0
        %v5198 = vpop.f32.mrb[0].mxu0
        %5199 = vdwg.mxu0
        %v5200 = vcombine.low %v4894, %v4980
        %v5201 = vcombine.high %v4894, %v4980
        %v5203 = vunpack.c.l.s4 1983009808
        %v5204 = vunpack.c.0.s8 %v5203
        %v5205 = vlaneseq
        %v5206 = vshrl.u32 %v5205, 7
        %v5207 = vsub.s32 %v5204, %v5206
        %v5208 = vrot.slane %v5200, %v5207
        %v5210 = vunpack.c.l.s4 1983009808
        %v5211 = vunpack.c.0.s8 %v5210
        %v5212 = vlaneseq
        %v5213 = vshrl.u32 %v5212, 7
        %v5214 = vsub.s32 %v5211, %v5213
        %v5215 = vrot.slane %v5201, %v5214
        %v5216 = vcombine.low %v4937, %v5023
        %v5217 = vcombine.high %v4937, %v5023
        %v5219 = vunpack.c.l.s4 1983009808
        %v5220 = vunpack.c.0.s8 %v5219
        %v5221 = vlaneseq
        %v5222 = vshrl.u32 %v5221, 7
        %v5223 = vsub.s32 %v5220, %v5222
        %v5224 = vrot.slane %v5216, %v5223
        %v5226 = vunpack.c.l.s4 1983009808
        %v5227 = vunpack.c.0.s8 %v5226
        %v5228 = vlaneseq
        %v5229 = vshrl.u32 %v5228, 7
        %v5230 = vsub.s32 %v5227, %v5229
        %v5231 = vrot.slane %v5217, %v5230
        %v5232 = vcombine.low %v5066, %v5152
        %v5233 = vcombine.high %v5066, %v5152
        %v5235 = vunpack.c.l.s4 1983009808
        %v5236 = vunpack.c.0.s8 %v5235
        %v5237 = vlaneseq
        %v5238 = vshrl.u32 %v5237, 7
        %v5239 = vsub.s32 %v5236, %v5238
        %v5240 = vrot.slane %v5232, %v5239
        %v5242 = vunpack.c.l.s4 1983009808
        %v5243 = vunpack.c.0.s8 %v5242
        %v5244 = vlaneseq
        %v5245 = vshrl.u32 %v5244, 7
        %v5246 = vsub.s32 %v5243, %v5245
        %v5247 = vrot.slane %v5233, %v5246
        %v5248 = vcombine.low %v5109, %v5195
        %v5249 = vcombine.high %v5109, %v5195
        %v5251 = vunpack.c.l.s4 1983009808
        %v5252 = vunpack.c.0.s8 %v5251
        %v5253 = vlaneseq
        %v5254 = vshrl.u32 %v5253, 7
        %v5255 = vsub.s32 %v5252, %v5254
        %v5256 = vrot.slane %v5248, %v5255
        %v5258 = vunpack.c.l.s4 1983009808
        %v5259 = vunpack.c.0.s8 %v5258
        %v5260 = vlaneseq
        %v5261 = vshrl.u32 %v5260, 7
        %v5262 = vsub.s32 %v5259, %v5261
        %v5263 = vrot.slane %v5249, %v5262
        %v5264 = vcombine.low %v5208, %v5224
        %v5265 = vcombine.high %v5208, %v5224
        %v5267 = vunpack.c.l.s4 1934713408
        %v5268 = vunpack.c.0.s8 %v5267
        %v5269 = vlaneseq
        %v5270 = vshrl.u32 %v5269, 7
        %v5271 = vsub.s32 %v5268, %v5270
        %v5272 = vrot.slane %v5264, %v5271
        %v5274 = vunpack.c.l.s4 1934713408
        %v5275 = vunpack.c.0.s8 %v5274
        %v5276 = vlaneseq
        %v5277 = vshrl.u32 %v5276, 7
        %v5278 = vsub.s32 %v5275, %v5277
        %v5279 = vrot.slane %v5265, %v5278
        %v5280 = vcombine.low %v5215, %v5231
        %v5281 = vcombine.high %v5215, %v5231
        %v5283 = vunpack.c.l.s4 1934713408
        %v5284 = vunpack.c.0.s8 %v5283
        %v5285 = vlaneseq
        %v5286 = vshrl.u32 %v5285, 7
        %v5287 = vsub.s32 %v5284, %v5286
        %v5288 = vrot.slane %v5280, %v5287
        %v5290 = vunpack.c.l.s4 1934713408
        %v5291 = vunpack.c.0.s8 %v5290
        %v5292 = vlaneseq
        %v5293 = vshrl.u32 %v5292, 7
        %v5294 = vsub.s32 %v5291, %v5293
        %v5295 = vrot.slane %v5281, %v5294
        %v5296 = vcombine.low %v5240, %v5256
        %v5297 = vcombine.high %v5240, %v5256
        %v5299 = vunpack.c.l.s4 1934713408
        %v5300 = vunpack.c.0.s8 %v5299
        %v5301 = vlaneseq
        %v5302 = vshrl.u32 %v5301, 7
        %v5303 = vsub.s32 %v5300, %v5302
        %v5304 = vrot.slane %v5296, %v5303
        %v5306 = vunpack.c.l.s4 1934713408
        %v5307 = vunpack.c.0.s8 %v5306
        %v5308 = vlaneseq
        %v5309 = vshrl.u32 %v5308, 7
        %v5310 = vsub.s32 %v5307, %v5309
        %v5311 = vrot.slane %v5297, %v5310
        %v5312 = vcombine.low %v5247, %v5263
        %v5313 = vcombine.high %v5247, %v5263
        %v5315 = vunpack.c.l.s4 1934713408
        %v5316 = vunpack.c.0.s8 %v5315
        %v5317 = vlaneseq
        %v5318 = vshrl.u32 %v5317, 7
        %v5319 = vsub.s32 %v5316, %v5318
        %v5320 = vrot.slane %v5312, %v5319
        %v5322 = vunpack.c.l.s4 1934713408
        %v5323 = vunpack.c.0.s8 %v5322
        %v5324 = vlaneseq
        %v5325 = vshrl.u32 %v5324, 7
        %v5326 = vsub.s32 %v5323, %v5325
        %v5327 = vrot.slane %v5313, %v5326
        %v5328 = vcombine.low %v5272, %v5304
        %v5329 = vcombine.high %v5272, %v5304
        %v5330 = vcombine.low %v5279, %v5311
        %v5331 = vcombine.high %v5279, %v5311
        %v5332 = vcombine.low %v5288, %v5320
        %v5333 = vcombine.high %v5288, %v5320
        %v5334 = vcombine.low %v5295, %v5327
        %v5335 = vcombine.high %v5295, %v5327
        %v5336 = vcombine.low %v5328, %v5330
        %v5337 = vcombine.high %v5328, %v5330
        %v5339 = vunpack.c.l.s4 1983009808
        %v5340 = vunpack.c.0.s8 %v5339
        %v5341 = vlaneseq
        %v5342 = vshrl.u32 %v5341, 7
        %v5343 = vsub.s32 %v5340, %v5342
        %v5344 = vrot.slane %v5336, %v5343
        %v5346 = vunpack.c.l.s4 1983009808
        %v5347 = vunpack.c.0.s8 %v5346
        %v5348 = vlaneseq
        %v5349 = vshrl.u32 %v5348, 7
        %v5350 = vsub.s32 %v5347, %v5349
        %v5351 = vrot.slane %v5337, %v5350
        %v5352 = vcombine.low %v5329, %v5331
        %v5353 = vcombine.high %v5329, %v5331
        %v5355 = vunpack.c.l.s4 1983009808
        %v5356 = vunpack.c.0.s8 %v5355
        %v5357 = vlaneseq
        %v5358 = vshrl.u32 %v5357, 7
        %v5359 = vsub.s32 %v5356, %v5358
        %v5360 = vrot.slane %v5352, %v5359
        %v5362 = vunpack.c.l.s4 1983009808
        %v5363 = vunpack.c.0.s8 %v5362
        %v5364 = vlaneseq
        %v5365 = vshrl.u32 %v5364, 7
        %v5366 = vsub.s32 %v5363, %v5365
        %v5367 = vrot.slane %v5353, %v5366
        %v5368 = vcombine.low %v5332, %v5334
        %v5369 = vcombine.high %v5332, %v5334
        %v5371 = vunpack.c.l.s4 1983009808
        %v5372 = vunpack.c.0.s8 %v5371
        %v5373 = vlaneseq
        %v5374 = vshrl.u32 %v5373, 7
        %v5375 = vsub.s32 %v5372, %v5374
        %v5376 = vrot.slane %v5368, %v5375
        %v5378 = vunpack.c.l.s4 1983009808
        %v5379 = vunpack.c.0.s8 %v5378
        %v5380 = vlaneseq
        %v5381 = vshrl.u32 %v5380, 7
        %v5382 = vsub.s32 %v5379, %v5381
        %v5383 = vrot.slane %v5369, %v5382
        %v5384 = vcombine.low %v5333, %v5335
        %v5385 = vcombine.high %v5333, %v5335
        %v5387 = vunpack.c.l.s4 1983009808
        %v5388 = vunpack.c.0.s8 %v5387
        %v5389 = vlaneseq
        %v5390 = vshrl.u32 %v5389, 7
        %v5391 = vsub.s32 %v5388, %v5390
        %v5392 = vrot.slane %v5384, %v5391
        %v5394 = vunpack.c.l.s4 1983009808
        %v5395 = vunpack.c.0.s8 %v5394
        %v5396 = vlaneseq
        %v5397 = vshrl.u32 %v5396, 7
        %v5398 = vsub.s32 %v5395, %v5397
        %v5399 = vrot.slane %v5385, %v5398
        %v5400 = vcombine.low %v5344, %v5360
        %v5401 = vcombine.high %v5344, %v5360
        %v5403 = vunpack.c.l.s4 1934713408
        %v5404 = vunpack.c.0.s8 %v5403
        %v5405 = vlaneseq
        %v5406 = vshrl.u32 %v5405, 7
        %v5407 = vsub.s32 %v5404, %v5406
        %v5408 = vrot.slane %v5400, %v5407
        %v5410 = vunpack.c.l.s4 1934713408
        %v5411 = vunpack.c.0.s8 %v5410
        %v5412 = vlaneseq
        %v5413 = vshrl.u32 %v5412, 7
        %v5414 = vsub.s32 %v5411, %v5413
        %v5415 = vrot.slane %v5401, %v5414
        %v5416 = vcombine.low %v5351, %v5367
        %v5417 = vcombine.high %v5351, %v5367
        %v5419 = vunpack.c.l.s4 1934713408
        %v5420 = vunpack.c.0.s8 %v5419
        %v5421 = vlaneseq
        %v5422 = vshrl.u32 %v5421, 7
        %v5423 = vsub.s32 %v5420, %v5422
        %v5424 = vrot.slane %v5416, %v5423
        %v5426 = vunpack.c.l.s4 1934713408
        %v5427 = vunpack.c.0.s8 %v5426
        %v5428 = vlaneseq
        %v5429 = vshrl.u32 %v5428, 7
        %v5430 = vsub.s32 %v5427, %v5429
        %v5431 = vrot.slane %v5417, %v5430
        %v5432 = vcombine.low %v5376, %v5392
        %v5433 = vcombine.high %v5376, %v5392
        %v5435 = vunpack.c.l.s4 1934713408
        %v5436 = vunpack.c.0.s8 %v5435
        %v5437 = vlaneseq
        %v5438 = vshrl.u32 %v5437, 7
        %v5439 = vsub.s32 %v5436, %v5438
        %v5440 = vrot.slane %v5432, %v5439
        %v5442 = vunpack.c.l.s4 1934713408
        %v5443 = vunpack.c.0.s8 %v5442
        %v5444 = vlaneseq
        %v5445 = vshrl.u32 %v5444, 7
        %v5446 = vsub.s32 %v5443, %v5445
        %v5447 = vrot.slane %v5433, %v5446
        %v5448 = vcombine.low %v5383, %v5399
        %v5449 = vcombine.high %v5383, %v5399
        %v5451 = vunpack.c.l.s4 1934713408
        %v5452 = vunpack.c.0.s8 %v5451
        %v5453 = vlaneseq
        %v5454 = vshrl.u32 %v5453, 7
        %v5455 = vsub.s32 %v5452, %v5454
        %v5456 = vrot.slane %v5448, %v5455
        %v5458 = vunpack.c.l.s4 1934713408
        %v5459 = vunpack.c.0.s8 %v5458
        %v5460 = vlaneseq
        %v5461 = vshrl.u32 %v5460, 7
        %v5462 = vsub.s32 %v5459, %v5461
        %v5463 = vrot.slane %v5449, %v5462
        %v5464 = vcombine.low %v5408, %v5440
        %v5465 = vcombine.high %v5408, %v5440
        %v5466 = vcombine.low %v5415, %v5447
        %v5467 = vcombine.high %v5415, %v5447
        %v5468 = vcombine.low %v5424, %v5456
        %v5469 = vcombine.high %v5424, %v5456
        %v5470 = vcombine.low %v5431, %v5463
        %v5471 = vcombine.high %v5431, %v5463
        %5473 = vrot.lane.b32.xlu0 %v5465, 16
        %v5474 = vpop.permute.xlu0 %5473
        %5477 = vrot.lane.b32.xlu0 %v5466, 32
        %v5478 = vpop.permute.xlu0 %5477
        %5481 = vrot.lane.b32.xlu0 %v5467, 48
        %v5482 = vpop.permute.xlu0 %5481
        %5485 = vrot.lane.b32.xlu0 %v5468, 64
        %v5486 = vpop.permute.xlu0 %5485
        %5489 = vrot.lane.b32.xlu0 %v5469, 80
        %v5490 = vpop.permute.xlu0 %5489
        %5493 = vrot.lane.b32.xlu0 %v5470, 96
        %v5494 = vpop.permute.xlu0 %5493
        %5497 = vrot.lane.b32.xlu0 %v5471, 112
        %v5498 = vpop.permute.xlu0 %5497
        %v5500 = vsel %vm1929, %v5464, %v5474
        %v5501 = vsel %vm3065, %v5500, %v5478
        %v5502 = vsel %vm3067, %v5501, %v5482
        %v5503 = vsel %vm3069, %v5502, %v5486
        %v5504 = vsel %vm3071, %v5503, %v5490
        %v5505 = vsel %vm3073, %v5504, %v5494
        %v5506 = vsel %vm3075, %v5505, %v5498
        %v5507 = vpack.c.bf16 %v5506, %v5506
        %v5509 = vlaneseq
        %v5510 = vshrl.u32 %v5509, 7
        %v5511 = vsub.s32 0, %v5510
        %v5512 = vrot.slane %v3483, %v5511
        %v5530 = vunpack.c.l.b16 %v3467
        %v5531 = vunpack.c.l.b16 %v3468
        %v5532 = vunpack.c.l.b16 %v3469
        %v5533 = vunpack.c.l.b16 %v3470
        %v5534 = vunpack.c.l.b16 %v3471
        %v5535 = vunpack.c.l.b16 %v3472
        %v5536 = vunpack.c.l.b16 %v3473
        %v5537 = vunpack.c.l.b16 %v3474
        %v5538 = vunpack.c.l.b16 %v3475
        %v5539 = vunpack.c.l.b16 %v3476
        %v5540 = vunpack.c.l.b16 %v3477
        %v5541 = vunpack.c.l.b16 %v3478
        %v5542 = vunpack.c.l.b16 %v3479
        %v5543 = vunpack.c.l.b16 %v3480
        %v5544 = vunpack.c.l.b16 %v3481
        %v5545 = vunpack.c.l.b16 %v3482
        %v5546 = vpack.c.b16 %v5531, %v5530
        %v5547 = vpack.c.b16 %v5533, %v5532
        %v5548 = vpack.c.b16 %v5535, %v5534
        %v5549 = vpack.c.b16 %v5537, %v5536
        %v5550 = vpack.c.b16 %v5539, %v5538
        %v5551 = vpack.c.b16 %v5541, %v5540
        %v5552 = vpack.c.b16 %v5543, %v5542
        %v5553 = vpack.c.b16 %v5545, %v5544
        %5562 = vmatprep.subr.bf16.mxu0 0
        %5563 = vmatpush1.bf16.msra.mxu0 %v5546
        %5564 = vmatprep.subr.bf16.mxu0 0
        %5565 = vmatpush1.bf16.msra.mxu0 %v5547
        %5566 = vmatprep.subr.bf16.mxu0 0
        %5567 = vmatpush1.bf16.msra.mxu0 %v5548
        %5568 = vmatprep.subr.bf16.mxu0 0
        %5569 = vmatpush1.bf16.msra.mxu0 %v5549
        %5570 = vmatprep.subr.bf16.mxu0 0
        %5571 = vmatpush1.bf16.msra.mxu0 %v5550
        %5572 = vmatprep.subr.bf16.mxu0 0
        %5573 = vmatpush1.bf16.msra.mxu0 %v5551
        %5574 = vmatprep.subr.bf16.mxu0 0
        %5575 = vmatpush1.bf16.msra.mxu0 %v5552
        %5576 = vmatprep.subr.bf16.mxu0 0
        %5577 = vmatpush1.bf16.msra.mxu0 %v5553
        %5578 = vmatprep.subr.bf16.mxu0 0
        %5579 = vmatpush1.bf16.msra.mxu0 0
        %5580 = vmatprep.subr.bf16.mxu0 0
        %5581 = vmatpush1.bf16.msra.mxu0 0
        %5582 = vmatprep.subr.bf16.mxu0 0
        %5583 = vmatpush1.bf16.msra.mxu0 0
        %5584 = vmatprep.subr.bf16.mxu0 0
        %5585 = vmatpush1.bf16.msra.mxu0 0
        %5586 = vmatprep.subr.bf16.mxu0 0
        %5587 = vmatpush1.bf16.msra.mxu0 0
        %5588 = vmatprep.subr.bf16.mxu0 0
        %5589 = vmatpush1.bf16.msra.mxu0 0
        %5590 = vmatprep.subr.bf16.mxu0 0
        %5591 = vmatpush1.bf16.msra.mxu0 0
        %5592 = vmatprep.subr.bf16.mxu0 0
        %5593 = vmatpush1.bf16.msra.mxu0 0
        %5594 = vmatprep.mubr.bf16.mxu0 0
        %5595 = vmatmul.mubr.bf16.gmra.mrb[0].mxu0 %v5507
        %v5596 = vpop.f32.mrb[0].mxu0
        %v5597 = vadd.f32 %v5512, %v5596
        %v5598 = vpop.f32.mrb[0].mxu0
        %v5599 = vpop.f32.mrb[0].mxu0
        %v5600 = vpop.f32.mrb[0].mxu0
        %5601 = vdwg.mxu0
        %v5602 = vadd.f32 %v3200, %v5597
        %v5603 = vld [vmem:[#allocation25] sm:$0x1]
        %v5604 = vld [vmem:[#allocation26] sm:$0x1]
        %5605 = vadd.xlane.f32.xlu0 %v5602
        %v5606 = vpop.xlane.xlu0 %5605
        %v5607 = vmul.f32 %v5606, %v3177
        %v5608 = vsub.f32 %v5602, %v5607
        %v5609 = vmul.f32 %v5608, %v5608
        %5610 = vadd.xlane.f32.xlu0 %v5609
        %v5611 = vpop.xlane.xlu0 %5610
        %v5612 = vmul.f32 %v5611, %v3177
        %v5613 = vadd.f32 %v5612, 1e-05
        %v5614 = vrsqrt.pop %v5613
        %v5615 = vmul.f32 %v5608, %v5614
        %v5617 = vlaneseq
        %v5618 = vshrl.u32 %v5617, 7
        %v5619 = vsub.s32 0, %v5618
        %v5620 = vrot.slane %v5603, %v5619
        %v5622 = vmul.f32 %v5615, %v5620
        %v5624 = vlaneseq
        %v5625 = vshrl.u32 %v5624, 7
        %v5626 = vsub.s32 0, %v5625
        %v5627 = vrot.slane %v5604, %v5626
        %v5629 = vadd.f32 %v5622, %v5627
        %v5630 = vpack.c.bf16 %v5629, %v5629
        %v5631 = vld [vmem:[#allocation28] sm:$0xff]
        %v5632 = vld [vmem:[#allocation28 + $0x8] sm:$0xff]
        %v5633 = vld [vmem:[#allocation28 + $0x10] sm:$0xff]
        %v5634 = vld [vmem:[#allocation28 + $0x18] sm:$0xff]
        %v5635 = vld [vmem:[#allocation28 + $0x20] sm:$0xff]
        %v5636 = vld [vmem:[#allocation28 + $0x28] sm:$0xff]
        %v5637 = vld [vmem:[#allocation28 + $0x30] sm:$0xff]
        %v5638 = vld [vmem:[#allocation28 + $0x38] sm:$0xff]
        %v5639 = vld [vmem:[#allocation28 + $0x40] sm:$0xff]
        %v5640 = vld [vmem:[#allocation28 + $0x48] sm:$0xff]
        %v5641 = vld [vmem:[#allocation28 + $0x50] sm:$0xff]
        %v5642 = vld [vmem:[#allocation28 + $0x58] sm:$0xff]
        %v5643 = vld [vmem:[#allocation28 + $0x60] sm:$0xff]
        %v5644 = vld [vmem:[#allocation28 + $0x68] sm:$0xff]
        %v5645 = vld [vmem:[#allocation28 + $0x70] sm:$0xff]
        %v5646 = vld [vmem:[#allocation28 + $0x78] sm:$0xff]
        %v5647 = vld [vmem:[#allocation29] sm:$0x3]
        %v5649 = vlaneseq
        %v5650 = vshrl.u32 %v5649, 7
        %v5651 = vsub.s32 0, %v5650
        %v5652 = vrot.slane %v5647, %v5651
        %v5653 = vlaneseq
        %v5654 = vshrl.u32 %v5653, 7
        %v5655 = vsub.s32 1, %v5654
        %v5656 = vrot.slane %v5647, %v5655
        %v5675 = vunpack.c.l.b16 %v5631
        %v5676 = vunpack.c.h.b16 %v5631
        %v5677 = vunpack.c.l.b16 %v5632
        %v5678 = vunpack.c.h.b16 %v5632
        %v5679 = vunpack.c.l.b16 %v5633
        %v5680 = vunpack.c.h.b16 %v5633
        %v5681 = vunpack.c.l.b16 %v5634
        %v5682 = vunpack.c.h.b16 %v5634
        %v5683 = vunpack.c.l.b16 %v5635
        %v5684 = vunpack.c.h.b16 %v5635
        %v5685 = vunpack.c.l.b16 %v5636
        %v5686 = vunpack.c.h.b16 %v5636
        %v5687 = vunpack.c.l.b16 %v5637
        %v5688 = vunpack.c.h.b16 %v5637
        %v5689 = vunpack.c.l.b16 %v5638
        %v5690 = vunpack.c.h.b16 %v5638
        %v5691 = vunpack.c.l.b16 %v5639
        %v5692 = vunpack.c.h.b16 %v5639
        %v5693 = vunpack.c.l.b16 %v5640
        %v5694 = vunpack.c.h.b16 %v5640
        %v5695 = vunpack.c.l.b16 %v5641
        %v5696 = vunpack.c.h.b16 %v5641
        %v5697 = vunpack.c.l.b16 %v5642
        %v5698 = vunpack.c.h.b16 %v5642
        %v5699 = vunpack.c.l.b16 %v5643
        %v5700 = vunpack.c.h.b16 %v5643
        %v5701 = vunpack.c.l.b16 %v5644
        %v5702 = vunpack.c.h.b16 %v5644
        %v5703 = vunpack.c.l.b16 %v5645
        %v5704 = vunpack.c.h.b16 %v5645
        %v5705 = vunpack.c.l.b16 %v5646
        %v5706 = vunpack.c.h.b16 %v5646
        %v5707 = vpack.c.b16 %v5677, %v5675
        %v5708 = vpack.c.b16 %v5678, %v5676
        %v5709 = vpack.c.b16 %v5681, %v5679
        %v5710 = vpack.c.b16 %v5682, %v5680
        %v5711 = vpack.c.b16 %v5685, %v5683
        %v5712 = vpack.c.b16 %v5686, %v5684
        %v5713 = vpack.c.b16 %v5689, %v5687
        %v5714 = vpack.c.b16 %v5690, %v5688
        %v5715 = vpack.c.b16 %v5693, %v5691
        %v5716 = vpack.c.b16 %v5694, %v5692
        %v5717 = vpack.c.b16 %v5697, %v5695
        %v5718 = vpack.c.b16 %v5698, %v5696
        %v5719 = vpack.c.b16 %v5701, %v5699
        %v5720 = vpack.c.b16 %v5702, %v5700
        %v5721 = vpack.c.b16 %v5705, %v5703
        %v5722 = vpack.c.b16 %v5706, %v5704
        %5739 = vmatprep.subr.bf16.mxu0 %v5708
        %5740 = vmatpush1.bf16.msra.mxu0 %v5707
        %5741 = vmatprep.subr.bf16.mxu0 %v5710
        %5742 = vmatpush1.bf16.msra.mxu0 %v5709
        %5743 = vmatprep.subr.bf16.mxu0 %v5712
        %5744 = vmatpush1.bf16.msra.mxu0 %v5711
        %5745 = vmatprep.subr.bf16.mxu0 %v5714
        %5746 = vmatpush1.bf16.msra.mxu0 %v5713
        %5747 = vmatprep.subr.bf16.mxu0 %v5716
        %5748 = vmatpush1.bf16.msra.mxu0 %v5715
        %5749 = vmatprep.subr.bf16.mxu0 %v5718
        %5750 = vmatpush1.bf16.msra.mxu0 %v5717
        %5751 = vmatprep.subr.bf16.mxu0 %v5720
        %5752 = vmatpush1.bf16.msra.mxu0 %v5719
        %5753 = vmatprep.subr.bf16.mxu0 %v5722
        %5754 = vmatpush1.bf16.msra.mxu0 %v5721
        %5755 = vmatprep.subr.bf16.mxu0 0
        %5756 = vmatpush1.bf16.msra.mxu0 0
        %5757 = vmatprep.subr.bf16.mxu0 0
        %5758 = vmatpush1.bf16.msra.mxu0 0
        %5759 = vmatprep.subr.bf16.mxu0 0
        %5760 = vmatpush1.bf16.msra.mxu0 0
        %5761 = vmatprep.subr.bf16.mxu0 0
        %5762 = vmatpush1.bf16.msra.mxu0 0
        %5763 = vmatprep.subr.bf16.mxu0 0
        %5764 = vmatpush1.bf16.msra.mxu0 0
        %5765 = vmatprep.subr.bf16.mxu0 0
        %5766 = vmatpush1.bf16.msra.mxu0 0
        %5767 = vmatprep.subr.bf16.mxu0 0
        %5768 = vmatpush1.bf16.msra.mxu0 0
        %5769 = vmatprep.subr.bf16.mxu0 0
        %5770 = vmatpush1.bf16.msra.mxu0 0
        %5771 = vmatprep.mubr.bf16.mxu0 0
        %5772 = vmatmul.mubr.bf16.gmra.mrb[0].mxu0 %v5630
        %v5773 = vpop.f32.mrb[0].mxu0
        %v5774 = vadd.f32 %v5652, %v5773
        %v5775 = vpop.f32.mrb[0].mxu0
        %v5776 = vadd.f32 %v5656, %v5775
        %v5777 = vpop.f32.mrb[0].mxu0
        %v5778 = vpop.f32.mrb[0].mxu0
        %5779 = vdwg.mxu0
        %v5780 = vmul.f32 %v5774, 0.5
        %v5781 = vmul.f32 %v5776, 0.5
        %v5782 = vmul.f32 %v5774, 0.044715
        %v5783 = vmul.f32 %v5776, 0.044715
        %v5784 = vmul.f32 %v5782, %v5774
        %v5785 = vmul.f32 %v5783, %v5776
        %v5786 = vmul.f32 %v5784, %v5774
        %v5787 = vmul.f32 %v5785, %v5776
        %v5788 = vadd.f32 %v5774, %v5786
        %v5789 = vadd.f32 %v5776, %v5787
        %v5790 = vmul.f32 %v5788, 0.7978846
        %v5791 = vmul.f32 %v5789, 0.7978846
        %v5792 = vtanh.pop %v5790
        %v5793 = vtanh.pop %v5791
        %v5794 = vadd.f32 %v5792, 1.0
        %v5795 = vadd.f32 %v5793, 1.0
        %v5796 = vmul.f32 %v5780, %v5794
        %v5797 = vmul.f32 %v5781, %v5795
        %v5798 = vpack.c.bf16 %v5796, %v5796
        %v5799 = vpack.c.bf16 %v5797, %v5797
        %v5800 = vld [vmem:[#allocation31] sm:$0xf]
        %v5801 = vld [vmem:[#allocation31 + $0x4] sm:$0xf]
        %v5802 = vld [vmem:[#allocation31 + $0x8] sm:$0xf]
        %v5803 = vld [vmem:[#allocation31 + $0xc] sm:$0xf]
        %v5804 = vld [vmem:[#allocation31 + $0x10] sm:$0xf]
        %v5805 = vld [vmem:[#allocation31 + $0x14] sm:$0xf]
        %v5806 = vld [vmem:[#allocation31 + $0x18] sm:$0xf]
        %v5807 = vld [vmem:[#allocation31 + $0x1c] sm:$0xf]
        %v5808 = vld [vmem:[#allocation31 + $0x20] sm:$0xf]
        %v5809 = vld [vmem:[#allocation31 + $0x24] sm:$0xf]
        %v5810 = vld [vmem:[#allocation31 + $0x28] sm:$0xf]
        %v5811 = vld [vmem:[#allocation31 + $0x2c] sm:$0xf]
        %v5812 = vld [vmem:[#allocation31 + $0x30] sm:$0xf]
        %v5813 = vld [vmem:[#allocation31 + $0x34] sm:$0xf]
        %v5814 = vld [vmem:[#allocation31 + $0x38] sm:$0xf]
        %v5815 = vld [vmem:[#allocation31 + $0x3c] sm:$0xf]
        %v5816 = vld [vmem:[#allocation31 + $0x40] sm:$0xf]
        %v5817 = vld [vmem:[#allocation31 + $0x44] sm:$0xf]
        %v5818 = vld [vmem:[#allocation31 + $0x48] sm:$0xf]
        %v5819 = vld [vmem:[#allocation31 + $0x4c] sm:$0xf]
        %v5820 = vld [vmem:[#allocation31 + $0x50] sm:$0xf]
        %v5821 = vld [vmem:[#allocation31 + $0x54] sm:$0xf]
        %v5822 = vld [vmem:[#allocation31 + $0x58] sm:$0xf]
        %v5823 = vld [vmem:[#allocation31 + $0x5c] sm:$0xf]
        %v5824 = vld [vmem:[#allocation31 + $0x60] sm:$0xf]
        %v5825 = vld [vmem:[#allocation31 + $0x64] sm:$0xf]
        %v5826 = vld [vmem:[#allocation31 + $0x68] sm:$0xf]
        %v5827 = vld [vmem:[#allocation31 + $0x6c] sm:$0xf]
        %v5828 = vld [vmem:[#allocation31 + $0x70] sm:$0xf]
        %v5829 = vld [vmem:[#allocation31 + $0x74] sm:$0xf]
        %v5830 = vld [vmem:[#allocation31 + $0x78] sm:$0xf]
        %v5831 = vld [vmem:[#allocation31 + $0x7c] sm:$0xf]
        %v5832 = vld [vmem:[#allocation32] sm:$0x1]
        %v5834 = vlaneseq
        %v5835 = vshrl.u32 %v5834, 7
        %v5836 = vsub.s32 0, %v5835
        %v5837 = vrot.slane %v5832, %v5836
        %v5871 = vunpack.c.l.b16 %v5800
        %v5872 = vunpack.c.l.b16 %v5801
        %v5873 = vunpack.c.l.b16 %v5802
        %v5874 = vunpack.c.l.b16 %v5803
        %v5875 = vunpack.c.l.b16 %v5804
        %v5876 = vunpack.c.l.b16 %v5805
        %v5877 = vunpack.c.l.b16 %v5806
        %v5878 = vunpack.c.l.b16 %v5807
        %v5879 = vunpack.c.l.b16 %v5808
        %v5880 = vunpack.c.l.b16 %v5809
        %v5881 = vunpack.c.l.b16 %v5810
        %v5882 = vunpack.c.l.b16 %v5811
        %v5883 = vunpack.c.l.b16 %v5812
        %v5884 = vunpack.c.l.b16 %v5813
        %v5885 = vunpack.c.l.b16 %v5814
        %v5886 = vunpack.c.l.b16 %v5815
        %v5887 = vunpack.c.l.b16 %v5816
        %v5888 = vunpack.c.l.b16 %v5817
        %v5889 = vunpack.c.l.b16 %v5818
        %v5890 = vunpack.c.l.b16 %v5819
        %v5891 = vunpack.c.l.b16 %v5820
        %v5892 = vunpack.c.l.b16 %v5821
        %v5893 = vunpack.c.l.b16 %v5822
        %v5894 = vunpack.c.l.b16 %v5823
        %v5895 = vunpack.c.l.b16 %v5824
        %v5896 = vunpack.c.l.b16 %v5825
        %v5897 = vunpack.c.l.b16 %v5826
        %v5898 = vunpack.c.l.b16 %v5827
        %v5899 = vunpack.c.l.b16 %v5828
        %v5900 = vunpack.c.l.b16 %v5829
        %v5901 = vunpack.c.l.b16 %v5830
        %v5902 = vunpack.c.l.b16 %v5831
        %v5903 = vpack.c.b16 %v5872, %v5871
        %v5904 = vpack.c.b16 %v5874, %v5873
        %v5905 = vpack.c.b16 %v5876, %v5875
        %v5906 = vpack.c.b16 %v5878, %v5877
        %v5907 = vpack.c.b16 %v5880, %v5879
        %v5908 = vpack.c.b16 %v5882, %v5881
        %v5909 = vpack.c.b16 %v5884, %v5883
        %v5910 = vpack.c.b16 %v5886, %v5885
        %v5911 = vpack.c.b16 %v5888, %v5887
        %v5912 = vpack.c.b16 %v5890, %v5889
        %v5913 = vpack.c.b16 %v5892, %v5891
        %v5914 = vpack.c.b16 %v5894, %v5893
        %v5915 = vpack.c.b16 %v5896, %v5895
        %v5916 = vpack.c.b16 %v5898, %v5897
        %v5917 = vpack.c.b16 %v5900, %v5899
        %v5918 = vpack.c.b16 %v5902, %v5901
        %5935 = vmatprep.subr.bf16.mxu0 0
        %5936 = vmatpush1.bf16.msra.mxu0 %v5903
        %5937 = vmatprep.subr.bf16.mxu0 0
        %5938 = vmatpush1.bf16.msra.mxu0 %v5904
        %5939 = vmatprep.subr.bf16.mxu0 0
        %5940 = vmatpush1.bf16.msra.mxu0 %v5905
        %5941 = vmatprep.subr.bf16.mxu0 0
        %5942 = vmatpush1.bf16.msra.mxu0 %v5906
        %5943 = vmatprep.subr.bf16.mxu0 0
        %5944 = vmatpush1.bf16.msra.mxu0 %v5907
        %5945 = vmatprep.subr.bf16.mxu0 0
        %5946 = vmatpush1.bf16.msra.mxu0 %v5908
        %5947 = vmatprep.subr.bf16.mxu0 0
        %5948 = vmatpush1.bf16.msra.mxu0 %v5909
        %5949 = vmatprep.subr.bf16.mxu0 0
        %5950 = vmatpush1.bf16.msra.mxu0 %v5910
        %5951 = vmatprep.subr.bf16.mxu0 0
        %5952 = vmatpush1.bf16.msra.mxu0 %v5911
        %5953 = vmatprep.subr.bf16.mxu0 0
        %5954 = vmatpush1.bf16.msra.mxu0 %v5912
        %5955 = vmatprep.subr.bf16.mxu0 0
        %5956 = vmatpush1.bf16.msra.mxu0 %v5913
        %5957 = vmatprep.subr.bf16.mxu0 0
        %5958 = vmatpush1.bf16.msra.mxu0 %v5914
        %5959 = vmatprep.subr.bf16.mxu0 0
        %5960 = vmatpush1.bf16.msra.mxu0 %v5915
        %5961 = vmatprep.subr.bf16.mxu0 0
        %5962 = vmatpush1.bf16.msra.mxu0 %v5916
        %5963 = vmatprep.subr.bf16.mxu0 0
        %5964 = vmatpush1.bf16.msra.mxu0 %v5917
        %5965 = vmatprep.subr.bf16.mxu0 0
        %5966 = vmatpush1.bf16.msra.mxu0 %v5918
        %5967 = vmatprep.mubr.bf16.mxu0 %v5799
        %5968 = vmatmul.mubr.bf16.gmra.mrb[0].mxu0 %v5798
        %v5969 = vpop.f32.mrb[0].mxu0
        %v5970 = vadd.f32 %v5837, %v5969
        %v5971 = vpop.f32.mrb[0].mxu0
        %v5972 = vpop.f32.mrb[0].mxu0
        %v5973 = vpop.f32.mrb[0].mxu0
        %5974 = vdwg.mxu0
        %v5975 = vadd.f32 %v5629, %v5970
        %v5976 = vld [vmem:[#allocation34] sm:$0x1]
        %v5977 = vld [vmem:[#allocation35] sm:$0x1]
        %5978 = vadd.xlane.f32.xlu0 %v5975
        %v5979 = vpop.xlane.xlu0 %5978
        %v5980 = vmul.f32 %v5979, %v3177
        %v5981 = vsub.f32 %v5975, %v5980
        %v5982 = vmul.f32 %v5981, %v5981
        %5983 = vadd.xlane.f32.xlu0 %v5982
        %v5984 = vpop.xlane.xlu0 %5983
        %v5985 = vmul.f32 %v5984, %v3177
        %v5986 = vadd.f32 %v5985, 1e-05
        %v5987 = vrsqrt.pop %v5986
        %v5988 = vmul.f32 %v5981, %v5987
        %v5990 = vlaneseq
        %v5991 = vshrl.u32 %v5990, 7
        %v5992 = vsub.s32 0, %v5991
        %v5993 = vrot.slane %v5976, %v5992
        %v5995 = vmul.f32 %v5988, %v5993
        %v5997 = vlaneseq
        %v5998 = vshrl.u32 %v5997, 7
        %v5999 = vsub.s32 0, %v5998
        %v6000 = vrot.slane %v5977, %v5999
        %v6002 = vadd.f32 %v5995, %v6000
        %6003 = vst [vmem:[%s1002] sm:$0xff] %v6002
        %s6004 = sand.u32 %s532, 1
        %s6005 = scalar_lea.sflag [#allocation4], %s6004
        %s6006 = sand.u32 %s532, 1
        %s6007 = smul.addr %s6006, 8
        %s6008 = scalar_lea.vmem [#allocation37], %s6007
        // Predicated region
        $region197: #{tpu_custom_call.1} parent=107 // pred_check
          %p6009 = pneg %p542
        $region198: #{tpu_custom_call.1} parent=107 // pred_check_branch
          %6011 = sbr.rel (%p6009) target = $region200
        $region199: #{tpu_custom_call.1} parent=107 // pred_region
          %s6013 = ssub.s32 128, 128
          %6014 = vsyncadd %s6005, %s6013
          %s6015 = smul.addr %s52, 128
          %s6016 = scalar_lea.hbm %s22, %s6015
          %s6018 = sshll.u32 %s6008, 4
          %s6019 = int_to_ptr.vmem [resolvable:$true] %s6018
          %6021 = dma.vmem_to_hbm [thread:$0]  %s6019, 128, %s6016, %s6005
        $region200: #{tpu_custom_call.1} parent=107 // pred_fallthru
          _
      $region108: #{tpu_custom_call.1} parent=5 // pred_fallthru
        _
      %p6022 = scmp.le.s32.totalorder 2, %s47
      // Predicated region
      $region201: #{tpu_custom_call.1} parent=5 // pred_check
        %p6023 = pneg %p6022
      $region202: #{tpu_custom_call.1} parent=5 // pred_check_branch
        %6025 = sbr.rel (%p6023) target = $region204
      $region203: #{tpu_custom_call.1} parent=5 // pred_region
        %s6026 = ssub.s32 %s47, 2
        // Predicated region
        $region205: #{tpu_custom_call.1} parent=203 // pred_check
          %p6027 = pneg %p548
        $region206: #{tpu_custom_call.1} parent=203 // pred_check_branch
          %6029 = sbr.rel (%p6027) target = $region208
        $region207: #{tpu_custom_call.1} parent=203 // pred_region
          %s6030 = sand.u32 %s533, 1
          %s6031 = scalar_lea.sflag [#allocation4], %s6030
          %s6032 = sand.u32 %s533, 1
          %s6033 = smul.addr %s6032, 8
          %s6034 = scalar_lea.vmem [#allocation37], %s6033
          %6035 = dma.done %s6031, 128
        $region208: #{tpu_custom_call.1} parent=203 // pred_fallthru
          _
      $region204: #{tpu_custom_call.1} parent=5 // pred_fallthru
        _
    $region6: #{tpu_custom_call.1} parent=1 // loop_footer
      %s51 = sadd.s32 1, %s47
    $region7: #{tpu_custom_call.1} parent=1 // loop_footer_branch
      %46 = sbr.rel target = $region3
    $region8: #{tpu_custom_call.1} parent=1 // loop_exit
      _
    %6036 = vsyncpa [#allocation3], 1
    %s6037 = scalar_lea.sflag [#allocation3], 1
    %6038 = vsyncpa %s6037, 1
    %6039 = vsyncpa [#allocation6], 1
    %s6040 = scalar_lea.sflag [#allocation6], 1
    %6041 = vsyncpa %s6040, 1
    %6042 = vsyncpa [#allocation9], 1
    %6043 = vsyncpa [#allocation12], 1
    %6044 = vsyncpa [#allocation15], 1
    %6045 = vsyncpa [#allocation18], 1
    %6046 = vsyncpa [#allocation21], 1
    %6047 = vsyncpa [#allocation24], 1
    %6048 = vsyncpa [#allocation27], 1
    %6049 = vsyncpa [#allocation30], 1
    %6050 = vsyncpa [#allocation33], 1
    %6051 = vsyncpa [#allocation36], 1
    %6052 = vsyncpa [#allocation4], 1
    %s6053 = scalar_lea.sflag [#allocation4], 1
    %6054 = vsyncpa %s6053, 1

</llo_original>
